<compile_context>
chip_gen: v7x
topology: tpu7x:2x2x1
jax: 0.10.0
libtpu: 0.0.40
codegen_flags: <defaults>
</compile_context>

<pallas_src>
import functools

import jax
import jax.numpy as jnp
from jax import lax
from jax.experimental import pallas as pl
from jax.experimental.pallas import tpu as pltpu

B = 2
DIM = 16
NUM_HEADS = 2
HEAD_DIM = DIM // NUM_HEADS
H = W = 16
EPS_BN = 1e-5


# ----------------------------------------------------------------------------
# Fused RecAttn2d kernel: one invocation handles the whole (fused) batch.
# Layout: rows = batch*channels (sublanes), lanes = flattened spatial.
# ----------------------------------------------------------------------------
def recattn_kernel(x_ref, dcat_ref, wm_ref, up_ref, wqk_ref, blk_ref, bias_ref,
                   o_ref, *, n, n2, w, w2, bc, wm5_off, wm3_off, wm3_stride):
    nph = 4 * n2
    x = x_ref[...]                                               # (bc, n)

    # ---- down[0]: depthwise 5x5 stride-2 conv + BN (polyphase, no full-res
    #      work): one 0/1 MXU matmul splits x into its 4 stride-2 phases, the
    #      25 taps collapse onto 9 coarse offsets handled by packed rolls. ----
    xph = jnp.dot(x, dcat_ref[...], preferred_element_type=jnp.float32)  # (bc, 4*n2)
    acc = jnp.zeros_like(xph)
    j9 = 0
    for ci in (-1, 0, 1):
        for cj in (-1, 0, 1):
            s = ci * w2 + cj
            shifted = xph if s == 0 else pltpu.roll(xph, shift=(-s) % nph, axis=1)
            acc = acc + shifted * wm_ref[:, j9 * nph:(j9 + 1) * nph]
            j9 += 1
    xd = (acc[:, 0:n2] + acc[:, n2:2 * n2] + acc[:, 2 * n2:3 * n2]
          + acc[:, 3 * n2:4 * n2] + bias_ref[:bc, 0:1])          # (bc, n2)

    # ---- down[1]: LinearAttention1 ------------------------------------------
    # grouped 1x1 qk conv + BN as ONE block-diagonal matmul, then elu()+1.
    qk = (jnp.dot(wqk_ref[...], xd, preferred_element_type=jnp.float32)
          + bias_ref[:, 1:2])                                    # (2*bc, n2)
    qk = jnp.where(qk > 0, qk + 1.0, jnp.exp(qk))                # elu(x) + 1
    q, k = qk[:bc, :], qk[bc:, :]                                # (bc, n2) each

    # all (batch, head) pairs batched into single dots via a block mask.
    blk = blk_ref[...]                                           # (bc, bc) 0/1
    kvT = (lax.dot_general(xd, k, (((1,), (1,)), ((), ())),
                           preferred_element_type=jnp.float32)
           * blk * (1.0 / n2))                                   # (bc, bc), s^2 folded
    num = jnp.dot(kvT, q, preferred_element_type=jnp.float32)    # (bc, n2)
    kmean = jnp.mean(k, axis=1, keepdims=True)                   # (bc, 1)
    den = jnp.dot(blk, q * kmean, preferred_element_type=jnp.float32)
    attn = num * pl.reciprocal(den + 1e-6, approx=True)          # EUP reciprocal

    # pe: depthwise 3x3 conv + BN on v (= xd), pre-folded weight*mask taps.
    pe = jnp.zeros_like(xd)
    t = 0
    for di in (-1, 0, 1):
        for dj in (-1, 0, 1):
            s = di * w2 + dj
            shifted = xd if s == 0 else pltpu.roll(xd, shift=(-s) % n2, axis=1)
            off = wm3_off + t * wm3_stride
            pe = pe + shifted * wm_ref[:, off:off + n2]
            t += 1
    la = attn + pe + bias_ref[:bc, 2:3]                          # (bc, n2)

    # ---- nearest 2x upsample (0/1 matmul) + residual add of x ----------------
    y = x + jnp.dot(la, up_ref[...], preferred_element_type=jnp.float32)  # (bc, n)

    # ---- final depthwise 5x5 conv + BN (pre-folded weight*mask taps) ---------
    out = jnp.zeros_like(y)
    t = 0
    for di in range(-2, 3):
        for dj in range(-2, 3):
            s = di * w + dj
            shifted = y if s == 0 else pltpu.roll(y, shift=(-s) % n, axis=1)
            out = out + shifted * wm_ref[:, wm5_off + t * n:wm5_off + (t + 1) * n]
            t += 1
    o_ref[...] = (out + bias_ref[:bc, 3:4]).astype(o_ref.dtype)  # lane-dense store


# ----------------------------------------------------------------------------
# Wrapper: builds the folded/packed parameter slabs and calls the kernel once.
# ----------------------------------------------------------------------------
@jax.jit
def recattn2d_forward(x, down_w4, down_b, qk_w, qk_b, pe_w4, pe_b, conv_w4,
                      conv_b):
    b, c, h, w = x.shape
    assert h % 2 == 0 and w % 2 == 0
    h2, w2 = h // 2, w // 2
    n, n2 = h * w, h2 * w2
    bc = b * c
    nph = 4 * n2
    hd = c // NUM_HEADS

    # depthwise weights, tiled over batch (rows = b*c).
    down_w = jnp.tile(down_w4.reshape(c, 25), (b, 1))            # (bc, 25)
    conv_w = jnp.tile(conv_w4.reshape(c, 25), (b, 1))            # (bc, 25)
    pe_w = jnp.tile(pe_w4.reshape(c, 9), (b, 1))                 # (bc, 9)

    fi = jnp.arange(n) // w
    fj = jnp.arange(n) % w
    ai = jnp.arange(n2) // w2
    aj = jnp.arange(n2) % w2

    # phase-decimation matrix: dcat[p, ph*n2+q] = [p == (2*i_q+pi)*w + (2*j_q+pj)]
    dcols = []
    for pi in range(2):
        for pj in range(2):
            src = (2 * ai + pi) * w + (2 * aj + pj)
            dcols.append((jnp.arange(n)[:, None] == src[None, :]).astype(jnp.float32))
    dcat = jnp.concatenate(dcols, axis=1)                        # (n, 4*n2)

    # wm9: per coarse-offset, phase-packed weight*boundary-mask (stride-2 5x5).
    wm9_parts = []
    for ci in (-1, 0, 1):
        for cj in (-1, 0, 1):
            valid = ((ai + ci >= 0) & (ai + ci < h2) &
                     (aj + cj >= 0) & (aj + cj < w2)).astype(jnp.float32)
            blocks = []
            for pi in range(2):
                for pj in range(2):
                    di, dj = 2 * ci + pi, 2 * cj + pj
                    if -2 <= di <= 2 and -2 <= dj <= 2:
                        wcol = down_w[:, (di + 2) * 5 + (dj + 2)][:, None]
                    else:
                        wcol = jnp.zeros((bc, 1), jnp.float32)
                    blocks.append(wcol * valid[None, :])
            wm9_parts.append(jnp.concatenate(blocks, axis=1))    # (bc, 4*n2)
    wm9 = jnp.concatenate(wm9_parts, axis=1)                     # (bc, 9*4*n2)

    # wm5: final 5x5 conv weight*mask per tap (full resolution).
    wm5_parts = []
    t = 0
    for di in range(-2, 3):
        for dj in range(-2, 3):
            m = ((fi + di >= 0) & (fi + di < h) &
                 (fj + dj >= 0) & (fj + dj < w)).astype(jnp.float32)
            wm5_parts.append(conv_w[:, t][:, None] * m[None, :])
            t += 1
    wm5 = jnp.concatenate(wm5_parts, axis=1)                     # (bc, 25*n)

    # wm3: pe 3x3 conv weight*mask per tap (each tap padded to a 128-lane slot
    # so every in-kernel slice starts lane-aligned).
    wm3_stride = ((n2 + 127) // 128) * 128
    pad = wm3_stride - n2
    wm3_parts = []
    t = 0
    for di in (-1, 0, 1):
        for dj in (-1, 0, 1):
            m = ((ai + di >= 0) & (ai + di < h2) &
                 (aj + dj >= 0) & (aj + dj < w2)).astype(jnp.float32)
            blockm = pe_w[:, t][:, None] * m[None, :]
            if pad:
                blockm = jnp.concatenate(
                    [blockm, jnp.zeros((bc, pad), jnp.float32)], axis=1)
            wm3_parts.append(blockm)
            t += 1
    wm3 = jnp.concatenate(wm3_parts, axis=1)                     # (bc, 9*stride)

    wm = jnp.concatenate([wm9, wm5, wm3], axis=1)                # one packed slab
    wm5_off = 9 * nph
    wm3_off = wm5_off + 25 * n

    # nearest-neighbour 2x upsample map.
    src_up = (fi * h2 // h) * w2 + (fj * w2 // w)
    up = (jnp.arange(n2)[:, None] == src_up[None, :]).astype(jnp.float32)  # (n2, n)

    # grouped 1x1 qk conv as one block-diagonal matmul (q rows then k rows).
    wq, wk = qk_w[:c], qk_w[c:]                                  # (c, c//2) each
    z = jnp.zeros((c, c // 2), jnp.float32)
    wq16 = jnp.concatenate([wq, z], axis=1)                      # reads channels [0, c/2)
    wk16 = jnp.concatenate([z, wk], axis=1)                      # reads channels [c/2, c)
    eye_b = jnp.eye(b, dtype=jnp.float32)
    wqk = jnp.concatenate(
        [jnp.kron(eye_b, wq16), jnp.kron(eye_b, wk16)], axis=0)  # (2*bc, bc)

    # (batch, head) block mask for batched linear attention.
    g = jnp.arange(bc) // hd
    blk = (g[:, None] == g[None, :]).astype(jnp.float32)         # (bc, bc)

    # bias slab: col0 down, col1 qk (2*bc rows), col2 pe, col3 final conv.
    bias = jnp.zeros((2 * bc, 8), jnp.float32)
    bias = bias.at[:bc, 0].set(jnp.tile(down_b, b))
    bias = bias.at[:, 1].set(jnp.concatenate(
        [jnp.tile(qk_b[:c], b), jnp.tile(qk_b[c:], b)]))
    bias = bias.at[:bc, 2].set(jnp.tile(pe_b, b))
    bias = bias.at[:bc, 3].set(jnp.tile(conv_b, b))

    kernel = functools.partial(
        recattn_kernel, n=n, n2=n2, w=w, w2=w2, bc=bc,
        wm5_off=wm5_off, wm3_off=wm3_off, wm3_stride=wm3_stride)

    out_flat = pl.pallas_call(
        kernel,
        out_shape=jax.ShapeDtypeStruct((bc, n), jnp.float32),
        grid=(1,),
        in_specs=[
            pl.BlockSpec((bc, n), lambda i: (0, 0)),             # x (flattened, batch fused)
            pl.BlockSpec((n, nph), lambda i: (0, 0)),            # phase-decimation 0/1 matrix
            pl.BlockSpec((bc, wm.shape[1]), lambda i: (0, 0)),   # packed weight*mask tables
            pl.BlockSpec((n2, n), lambda i: (0, 0)),             # nearest-upsample 0/1 matrix
            pl.BlockSpec((2 * bc, bc), lambda i: (0, 0)),        # block-diag qk weights
            pl.BlockSpec((bc, bc), lambda i: (0, 0)),            # (batch, head) block mask
            pl.BlockSpec((2 * bc, 8), lambda i: (0, 0)),         # bias slab
        ],
        out_specs=pl.BlockSpec((bc, n), lambda i: (0, 0)),
        compiler_params=pltpu.CompilerParams(
            dimension_semantics=("arbitrary",)),
    )(x.reshape(bc, n), dcat, wm, up, wqk, blk, bias)
    return out_flat.reshape(b, c, h, w)


# ----------------------------------------------------------------------------
# Pure-JAX reference (mirrors the PyTorch math, NCHW, BN folded / eval mode)
# ----------------------------------------------------------------------------
def ref_forward(x, down_w4, down_b, qk_w, qk_b, pe_w4, pe_b, conv_w4, conv_b):
    b, c, h, w = x.shape
    dn = ('NCHW', 'OIHW', 'NCHW')

    def dw_conv(z, w4, bias, stride, pad):
        o = lax.conv_general_dilated(z, w4, (stride, stride),
                                     ((pad, pad), (pad, pad)),
                                     feature_group_count=c,
                                     dimension_numbers=dn)
        return o + bias.reshape(1, c, 1, 1)

    xd = dw_conv(x, down_w4, down_b, 2, 2)                       # (b, c, h2, w2)

    # LinearAttention1 on xd
    _, _, h2, w2 = xd.shape
    n2 = h2 * w2
    s = n2 ** (-0.5)
    qk = lax.conv_general_dilated(xd, qk_w.reshape(2 * c, c // 2, 1, 1),
                                  (1, 1), ((0, 0), (0, 0)),
                                  feature_group_count=2, dimension_numbers=dn)
    qk = qk + qk_b.reshape(1, 2 * c, 1, 1)
    qk = jax.nn.elu(qk) + 1.0
    qk = qk.reshape(b, 2, NUM_HEADS, HEAD_DIM, n2)
    q, k = qk[:, 0], qk[:, 1]
    v = xd.reshape(b, NUM_HEADS, HEAD_DIM, n2)
    q_t = jnp.swapaxes(q, -1, -2)
    kv = jnp.einsum('bhdn,bhne->bhde', k * s, jnp.swapaxes(v, -1, -2) * s)
    num = jnp.einsum('bhnd,bhde->bhne', q_t, kv)
    den = jnp.einsum('bhnd,bhde->bhne', q_t, k.mean(axis=-1, keepdims=True))
    att = num / (den + 1e-6)
    att = jnp.swapaxes(att, -1, -2).reshape(b, c, h2, w2)
    la = att + dw_conv(xd, pe_w4, pe_b, 1, 1)

    up = jnp.repeat(jnp.repeat(la, 2, axis=2), 2, axis=3)        # nearest, exact 2x
    return dw_conv(x + up, conv_w4, conv_b, 1, 2)


if __name__ == "__main__":
    key = jax.random.PRNGKey(0)
    kx, kd, kqk, kpe, kc = jax.random.split(key, 5)

    x = jax.random.normal(kx, (B, DIM, H, W), jnp.float32)

    # Deterministic-init BatchNorm (eval mode) folded into each conv.
    def fold_bn(conv_w, out_ch):
        gamma = jnp.ones(out_ch, jnp.float32)
        beta = jnp.zeros(out_ch, jnp.float32)
        mean = jnp.zeros(out_ch, jnp.float32)
        var = jnp.ones(out_ch, jnp.float32)
        scale = gamma / jnp.sqrt(var + EPS_BN)
        wf = conv_w * scale.reshape((-1,) + (1,) * (conv_w.ndim - 1))
        bf = beta - scale * mean
        return wf, bf

    down_w_raw = 0.2 * jax.random.normal(kd, (DIM, 1, 5, 5), jnp.float32)
    down_w4, down_b = fold_bn(down_w_raw, DIM)
    qk_w_raw = 0.2 * jax.random.normal(kqk, (2 * DIM, DIM // 2), jnp.float32)
    qk_w, qk_b = fold_bn(qk_w_raw, 2 * DIM)
    pe_w_raw = 0.2 * jax.random.normal(kpe, (DIM, 1, 3, 3), jnp.float32)
    pe_w4, pe_b = fold_bn(pe_w_raw, DIM)
    conv_w_raw = 0.2 * jax.random.normal(kc, (DIM, 1, 5, 5), jnp.float32)
    conv_w4, conv_b = fold_bn(conv_w_raw, DIM)

    out = recattn2d_forward(x, down_w4, down_b, qk_w, qk_b,
                            pe_w4, pe_b, conv_w4, conv_b)
    out = jax.block_until_ready(out)

    ref = ref_forward(x, down_w4, down_b, qk_w, qk_b,
                      pe_w4, pe_b, conv_w4, conv_b)
    assert out.shape == (B, DIM, H, W)
    max_err = float(jnp.max(jnp.abs(out - ref)))
    assert jnp.allclose(out, ref, atol=2e-3, rtol=2e-3), max_err

    print("KERNEL_OK")
</pallas_src>

<mosaic_0001>
module attributes {stable_mosaic.version = 11 : i64} {
  func.func @recattn_kernel(%arg0: i32, %arg1: memref<32x256xf32, #tpu.memory_space<vmem>>, %arg2: memref<256x256xf32, #tpu.memory_space<vmem>>, %arg3: memref<32x9856xf32, #tpu.memory_space<vmem>>, %arg4: memref<64x256xf32, #tpu.memory_space<vmem>>, %arg5: memref<64x32xf32, #tpu.memory_space<vmem>>, %arg6: memref<32x32xf32, #tpu.memory_space<vmem>>, %arg7: memref<64x8xf32, #tpu.memory_space<vmem>>, %arg8: memref<32x256xf32, #tpu.memory_space<vmem>>) attributes {dimension_semantics = [#tpu.dimension_semantics<arbitrary>], iteration_bounds = array<i64: 1>, scalar_prefetch = 0 : i64, scratch_operands = 0 : i64, tpu.core_type = #tpu.core_type<tc>, window_params = [{pipeline_mode = #tpu.pipeline_mode<synchronous>, transform_indices = @transform_0, window_bounds = array<i64: 32, 256>}, {pipeline_mode = #tpu.pipeline_mode<synchronous>, transform_indices = @transform_1, window_bounds = array<i64: 256, 256>}, {pipeline_mode = #tpu.pipeline_mode<synchronous>, transform_indices = @transform_2, window_bounds = array<i64: 32, 9856>}, {pipeline_mode = #tpu.pipeline_mode<synchronous>, transform_indices = @transform_3, window_bounds = array<i64: 64, 256>}, {pipeline_mode = #tpu.pipeline_mode<synchronous>, transform_indices = @transform_4, window_bounds = array<i64: 64, 32>}, {pipeline_mode = #tpu.pipeline_mode<synchronous>, transform_indices = @transform_5, window_bounds = array<i64: 32, 32>}, {pipeline_mode = #tpu.pipeline_mode<synchronous>, transform_indices = @transform_6, window_bounds = array<i64: 64, 8>}, {pipeline_mode = #tpu.pipeline_mode<synchronous>, transform_indices = @transform_7, window_bounds = array<i64: 32, 256>}]} {
    %c0 = arith.constant 0 : index
    %c0_0 = arith.constant 0 : index
    %0 = vector.load %arg1[%c0, %c0_0] : memref<32x256xf32, #tpu.memory_space<vmem>>, vector<32x256xf32>
    %c0_1 = arith.constant 0 : index
    %c0_2 = arith.constant 0 : index
    %1 = vector.load %arg2[%c0_1, %c0_2] : memref<256x256xf32, #tpu.memory_space<vmem>>, vector<256x256xf32>
    %cst = arith.constant dense<0.000000e+00> : vector<32x256xf32>
    %2 = tpu.matmul %0, %1, %cst {dimension_numbers = #tpu.dot_dimension_numbers<[1], [0], [0], [1], [0, 0, 1, 1], [], []>} : vector<32x256xf32>, vector<256x256xf32>, vector<32x256xf32> -> vector<32x256xf32>
    %cst_3 = arith.constant 0.000000e+00 : f32
    %3 = vector.broadcast %cst_3 : f32 to vector<32x256xf32>
    %c9_i32 = arith.constant 9 : i32
    %4 = tpu.dynamic_rotate %2 by %c9_i32 dim 1 : vector<32x256xf32>, i32 -> vector<32x256xf32>
    %c0_4 = arith.constant 0 : index
    %c0_5 = arith.constant 0 : index
    %5 = vector.load %arg3[%c0_4, %c0_5] : memref<32x9856xf32, #tpu.memory_space<vmem>>, vector<32x256xf32>
    %6 = arith.mulf %4, %5 : vector<32x256xf32>
    %7 = arith.addf %3, %6 : vector<32x256xf32>
    %c8_i32 = arith.constant 8 : i32
    %8 = tpu.dynamic_rotate %2 by %c8_i32 dim 1 : vector<32x256xf32>, i32 -> vector<32x256xf32>
    %c0_6 = arith.constant 0 : index
    %c256 = arith.constant 256 : index
    %9 = vector.load %arg3[%c0_6, %c256] : memref<32x9856xf32, #tpu.memory_space<vmem>>, vector<32x256xf32>
    %10 = arith.mulf %8, %9 : vector<32x256xf32>
    %11 = arith.addf %7, %10 : vector<32x256xf32>
    %c7_i32 = arith.constant 7 : i32
    %12 = tpu.dynamic_rotate %2 by %c7_i32 dim 1 : vector<32x256xf32>, i32 -> vector<32x256xf32>
    %c0_7 = arith.constant 0 : index
    %c512 = arith.constant 512 : index
    %13 = vector.load %arg3[%c0_7, %c512] : memref<32x9856xf32, #tpu.memory_space<vmem>>, vector<32x256xf32>
    %14 = arith.mulf %12, %13 : vector<32x256xf32>
    %15 = arith.addf %11, %14 : vector<32x256xf32>
    %c1_i32 = arith.constant 1 : i32
    %16 = tpu.dynamic_rotate %2 by %c1_i32 dim 1 : vector<32x256xf32>, i32 -> vector<32x256xf32>
    %c0_8 = arith.constant 0 : index
    %c768 = arith.constant 768 : index
    %17 = vector.load %arg3[%c0_8, %c768] : memref<32x9856xf32, #tpu.memory_space<vmem>>, vector<32x256xf32>
    %18 = arith.mulf %16, %17 : vector<32x256xf32>
    %19 = arith.addf %15, %18 : vector<32x256xf32>
    %c0_9 = arith.constant 0 : index
    %c1024 = arith.constant 1024 : index
    %20 = vector.load %arg3[%c0_9, %c1024] : memref<32x9856xf32, #tpu.memory_space<vmem>>, vector<32x256xf32>
    %21 = arith.mulf %2, %20 : vector<32x256xf32>
    %22 = arith.addf %19, %21 : vector<32x256xf32>
    %c255_i32 = arith.constant 255 : i32
    %23 = tpu.dynamic_rotate %2 by %c255_i32 dim 1 : vector<32x256xf32>, i32 -> vector<32x256xf32>
    %c0_10 = arith.constant 0 : index
    %c1280 = arith.constant 1280 : index
    %24 = vector.load %arg3[%c0_10, %c1280] : memref<32x9856xf32, #tpu.memory_space<vmem>>, vector<32x256xf32>
    %25 = arith.mulf %23, %24 : vector<32x256xf32>
    %26 = arith.addf %22, %25 : vector<32x256xf32>
    %c249_i32 = arith.constant 249 : i32
    %27 = tpu.dynamic_rotate %2 by %c249_i32 dim 1 : vector<32x256xf32>, i32 -> vector<32x256xf32>
    %c0_11 = arith.constant 0 : index
    %c1536 = arith.constant 1536 : index
    %28 = vector.load %arg3[%c0_11, %c1536] : memref<32x9856xf32, #tpu.memory_space<vmem>>, vector<32x256xf32>
    %29 = arith.mulf %27, %28 : vector<32x256xf32>
    %30 = arith.addf %26, %29 : vector<32x256xf32>
    %c248_i32 = arith.constant 248 : i32
    %31 = tpu.dynamic_rotate %2 by %c248_i32 dim 1 : vector<32x256xf32>, i32 -> vector<32x256xf32>
    %c0_12 = arith.constant 0 : index
    %c1792 = arith.constant 1792 : index
    %32 = vector.load %arg3[%c0_12, %c1792] : memref<32x9856xf32, #tpu.memory_space<vmem>>, vector<32x256xf32>
    %33 = arith.mulf %31, %32 : vector<32x256xf32>
    %34 = arith.addf %30, %33 : vector<32x256xf32>
    %c247_i32 = arith.constant 247 : i32
    %35 = tpu.dynamic_rotate %2 by %c247_i32 dim 1 : vector<32x256xf32>, i32 -> vector<32x256xf32>
    %c0_13 = arith.constant 0 : index
    %c2048 = arith.constant 2048 : index
    %36 = vector.load %arg3[%c0_13, %c2048] : memref<32x9856xf32, #tpu.memory_space<vmem>>, vector<32x256xf32>
    %37 = arith.mulf %35, %36 : vector<32x256xf32>
    %38 = arith.addf %34, %37 : vector<32x256xf32>
    %39 = vector.extract_strided_slice %38 {offsets = [0, 0], sizes = [32, 64], strides = [1, 1]} : vector<32x256xf32> to vector<32x64xf32>
    %40 = vector.extract_strided_slice %38 {offsets = [0, 64], sizes = [32, 64], strides = [1, 1]} : vector<32x256xf32> to vector<32x64xf32>
    %41 = arith.addf %39, %40 : vector<32x64xf32>
    %42 = vector.extract_strided_slice %38 {offsets = [0, 128], sizes = [32, 64], strides = [1, 1]} : vector<32x256xf32> to vector<32x64xf32>
    %43 = arith.addf %41, %42 : vector<32x64xf32>
    %44 = vector.extract_strided_slice %38 {offsets = [0, 192], sizes = [32, 64], strides = [1, 1]} : vector<32x256xf32> to vector<32x64xf32>
    %45 = arith.addf %43, %44 : vector<32x64xf32>
    %c0_14 = arith.constant 0 : index
    %c0_15 = arith.constant 0 : index
    %46 = vector.load %arg7[%c0_14, %c0_15] : memref<64x8xf32, #tpu.memory_space<vmem>>, vector<32x1xf32>
    %47 = vector.broadcast %46 : vector<32x1xf32> to vector<32x64xf32>
    %48 = arith.addf %45, %47 : vector<32x64xf32>
    %c0_16 = arith.constant 0 : index
    %c0_17 = arith.constant 0 : index
    %49 = vector.load %arg5[%c0_16, %c0_17] : memref<64x32xf32, #tpu.memory_space<vmem>>, vector<64x32xf32>
    %cst_18 = arith.constant dense<0.000000e+00> : vector<64x64xf32>
    %50 = tpu.matmul %49, %48, %cst_18 {dimension_numbers = #tpu.dot_dimension_numbers<[1], [0], [0], [1], [0, 0, 1, 1], [], []>} : vector<64x32xf32>, vector<32x64xf32>, vector<64x64xf32> -> vector<64x64xf32>
    %c0_19 = arith.constant 0 : index
    %c1 = arith.constant 1 : index
    %51 = vector.load %arg7[%c0_19, %c1] : memref<64x8xf32, #tpu.memory_space<vmem>>, vector<64x1xf32>
    %52 = vector.broadcast %51 : vector<64x1xf32> to vector<64x64xf32>
    %53 = arith.addf %50, %52 : vector<64x64xf32>
    %cst_20 = arith.constant 0.000000e+00 : f32
    %54 = vector.broadcast %cst_20 : f32 to vector<64x64xf32>
    %55 = arith.cmpf ogt, %53, %54 : vector<64x64xf32>
    %cst_21 = arith.constant 1.000000e+00 : f32
    %56 = vector.broadcast %cst_21 : f32 to vector<64x64xf32>
    %57 = arith.addf %53, %56 : vector<64x64xf32>
    %58 = math.exp %53 : vector<64x64xf32>
    %59 = arith.select %55, %57, %58 : vector<64x64xi1>, vector<64x64xf32>
    %60 = vector.extract_strided_slice %59 {offsets = [0, 0], sizes = [32, 64], strides = [1, 1]} : vector<64x64xf32> to vector<32x64xf32>
    %61 = vector.extract_strided_slice %59 {offsets = [32, 0], sizes = [32, 64], strides = [1, 1]} : vector<64x64xf32> to vector<32x64xf32>
    %c0_22 = arith.constant 0 : index
    %c0_23 = arith.constant 0 : index
    %62 = vector.load %arg6[%c0_22, %c0_23] : memref<32x32xf32, #tpu.memory_space<vmem>>, vector<32x32xf32>
    %cst_24 = arith.constant dense<0.000000e+00> : vector<32x32xf32>
    %63 = tpu.matmul %48, %61, %cst_24 {dimension_numbers = #tpu.dot_dimension_numbers<[1], [1], [0], [0], [0, 0, 1, 0], [], []>} : vector<32x64xf32>, vector<32x64xf32>, vector<32x32xf32> -> vector<32x32xf32>
    %64 = arith.mulf %63, %62 : vector<32x32xf32>
    %cst_25 = arith.constant 1.562500e-02 : f32
    %65 = vector.broadcast %cst_25 : f32 to vector<32x32xf32>
    %66 = arith.mulf %64, %65 : vector<32x32xf32>
    %cst_26 = arith.constant dense<0.000000e+00> : vector<32x64xf32>
    %67 = tpu.matmul %66, %60, %cst_26 {dimension_numbers = #tpu.dot_dimension_numbers<[1], [0], [0], [1], [0, 0, 1, 1], [], []>} : vector<32x32xf32>, vector<32x64xf32>, vector<32x64xf32> -> vector<32x64xf32>
    %cst_27 = arith.constant dense<0.000000e+00> : vector<32xf32>
    %68 = vector.multi_reduction <add>, %61, %cst_27 [1] : vector<32x64xf32> to vector<32xf32>
    %69 = vector.shape_cast %68 : vector<32xf32> to vector<32x1xf32>
    %cst_28 = arith.constant 6.400000e+01 : f32
    %70 = vector.broadcast %cst_28 : f32 to vector<32x1xf32>
    %71 = arith.divf %69, %70 : vector<32x1xf32>
    %72 = vector.broadcast %71 : vector<32x1xf32> to vector<32x64xf32>
    %73 = arith.mulf %60, %72 : vector<32x64xf32>
    %cst_29 = arith.constant dense<0.000000e+00> : vector<32x64xf32>
    %74 = tpu.matmul %62, %73, %cst_29 {dimension_numbers = #tpu.dot_dimension_numbers<[1], [0], [0], [1], [0, 0, 1, 1], [], []>} : vector<32x32xf32>, vector<32x64xf32>, vector<32x64xf32> -> vector<32x64xf32>
    %cst_30 = arith.constant 9.99999997E-7 : f32
    %75 = vector.broadcast %cst_30 : f32 to vector<32x64xf32>
    %76 = arith.addf %74, %75 : vector<32x64xf32>
    %77 = tpu.reciprocal %76 {approx = true} : vector<32x64xf32> -> vector<32x64xf32>
    %78 = arith.mulf %67, %77 : vector<32x64xf32>
    %cst_31 = arith.constant 0.000000e+00 : f32
    %79 = vector.broadcast %cst_31 : f32 to vector<32x64xf32>
    %c9_i32_32 = arith.constant 9 : i32
    %80 = tpu.dynamic_rotate %48 by %c9_i32_32 dim 1 : vector<32x64xf32>, i32 -> vector<32x64xf32>
    %c0_33 = arith.constant 0 : index
    %c8704 = arith.constant 8704 : index
    %81 = vector.load %arg3[%c0_33, %c8704] : memref<32x9856xf32, #tpu.memory_space<vmem>>, vector<32x64xf32>
    %82 = arith.mulf %80, %81 : vector<32x64xf32>
    %83 = arith.addf %79, %82 : vector<32x64xf32>
    %c8_i32_34 = arith.constant 8 : i32
    %84 = tpu.dynamic_rotate %48 by %c8_i32_34 dim 1 : vector<32x64xf32>, i32 -> vector<32x64xf32>
    %c0_35 = arith.constant 0 : index
    %c8832 = arith.constant 8832 : index
    %85 = vector.load %arg3[%c0_35, %c8832] : memref<32x9856xf32, #tpu.memory_space<vmem>>, vector<32x64xf32>
    %86 = arith.mulf %84, %85 : vector<32x64xf32>
    %87 = arith.addf %83, %86 : vector<32x64xf32>
    %c7_i32_36 = arith.constant 7 : i32
    %88 = tpu.dynamic_rotate %48 by %c7_i32_36 dim 1 : vector<32x64xf32>, i32 -> vector<32x64xf32>
    %c0_37 = arith.constant 0 : index
    %c8960 = arith.constant 8960 : index
    %89 = vector.load %arg3[%c0_37, %c8960] : memref<32x9856xf32, #tpu.memory_space<vmem>>, vector<32x64xf32>
    %90 = arith.mulf %88, %89 : vector<32x64xf32>
    %91 = arith.addf %87, %90 : vector<32x64xf32>
    %c1_i32_38 = arith.constant 1 : i32
    %92 = tpu.dynamic_rotate %48 by %c1_i32_38 dim 1 : vector<32x64xf32>, i32 -> vector<32x64xf32>
    %c0_39 = arith.constant 0 : index
    %c9088 = arith.constant 9088 : index
    %93 = vector.load %arg3[%c0_39, %c9088] : memref<32x9856xf32, #tpu.memory_space<vmem>>, vector<32x64xf32>
    %94 = arith.mulf %92, %93 : vector<32x64xf32>
    %95 = arith.addf %91, %94 : vector<32x64xf32>
    %c0_40 = arith.constant 0 : index
    %c9216 = arith.constant 9216 : index
    %96 = vector.load %arg3[%c0_40, %c9216] : memref<32x9856xf32, #tpu.memory_space<vmem>>, vector<32x64xf32>
    %97 = arith.mulf %48, %96 : vector<32x64xf32>
    %98 = arith.addf %95, %97 : vector<32x64xf32>
    %c63_i32 = arith.constant 63 : i32
    %99 = tpu.dynamic_rotate %48 by %c63_i32 dim 1 : vector<32x64xf32>, i32 -> vector<32x64xf32>
    %c0_41 = arith.constant 0 : index
    %c9344 = arith.constant 9344 : index
    %100 = vector.load %arg3[%c0_41, %c9344] : memref<32x9856xf32, #tpu.memory_space<vmem>>, vector<32x64xf32>
    %101 = arith.mulf %99, %100 : vector<32x64xf32>
    %102 = arith.addf %98, %101 : vector<32x64xf32>
    %c57_i32 = arith.constant 57 : i32
    %103 = tpu.dynamic_rotate %48 by %c57_i32 dim 1 : vector<32x64xf32>, i32 -> vector<32x64xf32>
    %c0_42 = arith.constant 0 : index
    %c9472 = arith.constant 9472 : index
    %104 = vector.load %arg3[%c0_42, %c9472] : memref<32x9856xf32, #tpu.memory_space<vmem>>, vector<32x64xf32>
    %105 = arith.mulf %103, %104 : vector<32x64xf32>
    %106 = arith.addf %102, %105 : vector<32x64xf32>
    %c56_i32 = arith.constant 56 : i32
    %107 = tpu.dynamic_rotate %48 by %c56_i32 dim 1 : vector<32x64xf32>, i32 -> vector<32x64xf32>
    %c0_43 = arith.constant 0 : index
    %c9600 = arith.constant 9600 : index
    %108 = vector.load %arg3[%c0_43, %c9600] : memref<32x9856xf32, #tpu.memory_space<vmem>>, vector<32x64xf32>
    %109 = arith.mulf %107, %108 : vector<32x64xf32>
    %110 = arith.addf %106, %109 : vector<32x64xf32>
    %c55_i32 = arith.constant 55 : i32
    %111 = tpu.dynamic_rotate %48 by %c55_i32 dim 1 : vector<32x64xf32>, i32 -> vector<32x64xf32>
    %c0_44 = arith.constant 0 : index
    %c9728 = arith.constant 9728 : index
    %112 = vector.load %arg3[%c0_44, %c9728] : memref<32x9856xf32, #tpu.memory_space<vmem>>, vector<32x64xf32>
    %113 = arith.mulf %111, %112 : vector<32x64xf32>
    %114 = arith.addf %110, %113 : vector<32x64xf32>
    %115 = arith.addf %78, %114 : vector<32x64xf32>
    %c0_45 = arith.constant 0 : index
    %c2 = arith.constant 2 : index
    %116 = vector.load %arg7[%c0_45, %c2] : memref<64x8xf32, #tpu.memory_space<vmem>>, vector<32x1xf32>
    %117 = vector.broadcast %116 : vector<32x1xf32> to vector<32x64xf32>
    %118 = arith.addf %115, %117 : vector<32x64xf32>
    %c0_46 = arith.constant 0 : index
    %c0_47 = arith.constant 0 : index
    %119 = vector.load %arg4[%c0_46, %c0_47] : memref<64x256xf32, #tpu.memory_space<vmem>>, vector<64x256xf32>
    %cst_48 = arith.constant dense<0.000000e+00> : vector<32x256xf32>
    %120 = tpu.matmul %118, %119, %cst_48 {dimension_numbers = #tpu.dot_dimension_numbers<[1], [0], [0], [1], [0, 0, 1, 1], [], []>} : vector<32x64xf32>, vector<64x256xf32>, vector<32x256xf32> -> vector<32x256xf32>
    %121 = arith.addf %0, %120 : vector<32x256xf32>
    %cst_49 = arith.constant 0.000000e+00 : f32
    %122 = vector.broadcast %cst_49 : f32 to vector<32x256xf32>
    %c34_i32 = arith.constant 34 : i32
    %123 = tpu.dynamic_rotate %121 by %c34_i32 dim 1 : vector<32x256xf32>, i32 -> vector<32x256xf32>
    %c0_50 = arith.constant 0 : index
    %c2304 = arith.constant 2304 : index
    %124 = vector.load %arg3[%c0_50, %c2304] : memref<32x9856xf32, #tpu.memory_space<vmem>>, vector<32x256xf32>
    %125 = arith.mulf %123, %124 : vector<32x256xf32>
    %126 = arith.addf %122, %125 : vector<32x256xf32>
    %c33_i32 = arith.constant 33 : i32
    %127 = tpu.dynamic_rotate %121 by %c33_i32 dim 1 : vector<32x256xf32>, i32 -> vector<32x256xf32>
    %c0_51 = arith.constant 0 : index
    %c2560 = arith.constant 2560 : index
    %128 = vector.load %arg3[%c0_51, %c2560] : memref<32x9856xf32, #tpu.memory_space<vmem>>, vector<32x256xf32>
    %129 = arith.mulf %127, %128 : vector<32x256xf32>
    %130 = arith.addf %126, %129 : vector<32x256xf32>
    %c32_i32 = arith.constant 32 : i32
    %131 = tpu.dynamic_rotate %121 by %c32_i32 dim 1 : vector<32x256xf32>, i32 -> vector<32x256xf32>
    %c0_52 = arith.constant 0 : index
    %c2816 = arith.constant 2816 : index
    %132 = vector.load %arg3[%c0_52, %c2816] : memref<32x9856xf32, #tpu.memory_space<vmem>>, vector<32x256xf32>
    %133 = arith.mulf %131, %132 : vector<32x256xf32>
    %134 = arith.addf %130, %133 : vector<32x256xf32>
    %c31_i32 = arith.constant 31 : i32
    %135 = tpu.dynamic_rotate %121 by %c31_i32 dim 1 : vector<32x256xf32>, i32 -> vector<32x256xf32>
    %c0_53 = arith.constant 0 : index
    %c3072 = arith.constant 3072 : index
    %136 = vector.load %arg3[%c0_53, %c3072] : memref<32x9856xf32, #tpu.memory_space<vmem>>, vector<32x256xf32>
    %137 = arith.mulf %135, %136 : vector<32x256xf32>
    %138 = arith.addf %134, %137 : vector<32x256xf32>
    %c30_i32 = arith.constant 30 : i32
    %139 = tpu.dynamic_rotate %121 by %c30_i32 dim 1 : vector<32x256xf32>, i32 -> vector<32x256xf32>
    %c0_54 = arith.constant 0 : index
    %c3328 = arith.constant 3328 : index
    %140 = vector.load %arg3[%c0_54, %c3328] : memref<32x9856xf32, #tpu.memory_space<vmem>>, vector<32x256xf32>
    %141 = arith.mulf %139, %140 : vector<32x256xf32>
    %142 = arith.addf %138, %141 : vector<32x256xf32>
    %c18_i32 = arith.constant 18 : i32
    %143 = tpu.dynamic_rotate %121 by %c18_i32 dim 1 : vector<32x256xf32>, i32 -> vector<32x256xf32>
    %c0_55 = arith.constant 0 : index
    %c3584 = arith.constant 3584 : index
    %144 = vector.load %arg3[%c0_55, %c3584] : memref<32x9856xf32, #tpu.memory_space<vmem>>, vector<32x256xf32>
    %145 = arith.mulf %143, %144 : vector<32x256xf32>
    %146 = arith.addf %142, %145 : vector<32x256xf32>
    %c17_i32 = arith.constant 17 : i32
    %147 = tpu.dynamic_rotate %121 by %c17_i32 dim 1 : vector<32x256xf32>, i32 -> vector<32x256xf32>
    %c0_56 = arith.constant 0 : index
    %c3840 = arith.constant 3840 : index
    %148 = vector.load %arg3[%c0_56, %c3840] : memref<32x9856xf32, #tpu.memory_space<vmem>>, vector<32x256xf32>
    %149 = arith.mulf %147, %148 : vector<32x256xf32>
    %150 = arith.addf %146, %149 : vector<32x256xf32>
    %c16_i32 = arith.constant 16 : i32
    %151 = tpu.dynamic_rotate %121 by %c16_i32 dim 1 : vector<32x256xf32>, i32 -> vector<32x256xf32>
    %c0_57 = arith.constant 0 : index
    %c4096 = arith.constant 4096 : index
    %152 = vector.load %arg3[%c0_57, %c4096] : memref<32x9856xf32, #tpu.memory_space<vmem>>, vector<32x256xf32>
    %153 = arith.mulf %151, %152 : vector<32x256xf32>
    %154 = arith.addf %150, %153 : vector<32x256xf32>
    %c15_i32 = arith.constant 15 : i32
    %155 = tpu.dynamic_rotate %121 by %c15_i32 dim 1 : vector<32x256xf32>, i32 -> vector<32x256xf32>
    %c0_58 = arith.constant 0 : index
    %c4352 = arith.constant 4352 : index
    %156 = vector.load %arg3[%c0_58, %c4352] : memref<32x9856xf32, #tpu.memory_space<vmem>>, vector<32x256xf32>
    %157 = arith.mulf %155, %156 : vector<32x256xf32>
    %158 = arith.addf %154, %157 : vector<32x256xf32>
    %c14_i32 = arith.constant 14 : i32
    %159 = tpu.dynamic_rotate %121 by %c14_i32 dim 1 : vector<32x256xf32>, i32 -> vector<32x256xf32>
    %c0_59 = arith.constant 0 : index
    %c4608 = arith.constant 4608 : index
    %160 = vector.load %arg3[%c0_59, %c4608] : memref<32x9856xf32, #tpu.memory_space<vmem>>, vector<32x256xf32>
    %161 = arith.mulf %159, %160 : vector<32x256xf32>
    %162 = arith.addf %158, %161 : vector<32x256xf32>
    %c2_i32 = arith.constant 2 : i32
    %163 = tpu.dynamic_rotate %121 by %c2_i32 dim 1 : vector<32x256xf32>, i32 -> vector<32x256xf32>
    %c0_60 = arith.constant 0 : index
    %c4864 = arith.constant 4864 : index
    %164 = vector.load %arg3[%c0_60, %c4864] : memref<32x9856xf32, #tpu.memory_space<vmem>>, vector<32x256xf32>
    %165 = arith.mulf %163, %164 : vector<32x256xf32>
    %166 = arith.addf %162, %165 : vector<32x256xf32>
    %c1_i32_61 = arith.constant 1 : i32
    %167 = tpu.dynamic_rotate %121 by %c1_i32_61 dim 1 : vector<32x256xf32>, i32 -> vector<32x256xf32>
    %c0_62 = arith.constant 0 : index
    %c5120 = arith.constant 5120 : index
    %168 = vector.load %arg3[%c0_62, %c5120] : memref<32x9856xf32, #tpu.memory_space<vmem>>, vector<32x256xf32>
    %169 = arith.mulf %167, %168 : vector<32x256xf32>
    %170 = arith.addf %166, %169 : vector<32x256xf32>
    %c0_63 = arith.constant 0 : index
    %c5376 = arith.constant 5376 : index
    %171 = vector.load %arg3[%c0_63, %c5376] : memref<32x9856xf32, #tpu.memory_space<vmem>>, vector<32x256xf32>
    %172 = arith.mulf %121, %171 : vector<32x256xf32>
    %173 = arith.addf %170, %172 : vector<32x256xf32>
    %c255_i32_64 = arith.constant 255 : i32
    %174 = tpu.dynamic_rotate %121 by %c255_i32_64 dim 1 : vector<32x256xf32>, i32 -> vector<32x256xf32>
    %c0_65 = arith.constant 0 : index
    %c5632 = arith.constant 5632 : index
    %175 = vector.load %arg3[%c0_65, %c5632] : memref<32x9856xf32, #tpu.memory_space<vmem>>, vector<32x256xf32>
    %176 = arith.mulf %174, %175 : vector<32x256xf32>
    %177 = arith.addf %173, %176 : vector<32x256xf32>
    %c254_i32 = arith.constant 254 : i32
    %178 = tpu.dynamic_rotate %121 by %c254_i32 dim 1 : vector<32x256xf32>, i32 -> vector<32x256xf32>
    %c0_66 = arith.constant 0 : index
    %c5888 = arith.constant 5888 : index
    %179 = vector.load %arg3[%c0_66, %c5888] : memref<32x9856xf32, #tpu.memory_space<vmem>>, vector<32x256xf32>
    %180 = arith.mulf %178, %179 : vector<32x256xf32>
    %181 = arith.addf %177, %180 : vector<32x256xf32>
    %c242_i32 = arith.constant 242 : i32
    %182 = tpu.dynamic_rotate %121 by %c242_i32 dim 1 : vector<32x256xf32>, i32 -> vector<32x256xf32>
    %c0_67 = arith.constant 0 : index
    %c6144 = arith.constant 6144 : index
    %183 = vector.load %arg3[%c0_67, %c6144] : memref<32x9856xf32, #tpu.memory_space<vmem>>, vector<32x256xf32>
    %184 = arith.mulf %182, %183 : vector<32x256xf32>
    %185 = arith.addf %181, %184 : vector<32x256xf32>
    %c241_i32 = arith.constant 241 : i32
    %186 = tpu.dynamic_rotate %121 by %c241_i32 dim 1 : vector<32x256xf32>, i32 -> vector<32x256xf32>
    %c0_68 = arith.constant 0 : index
    %c6400 = arith.constant 6400 : index
    %187 = vector.load %arg3[%c0_68, %c6400] : memref<32x9856xf32, #tpu.memory_space<vmem>>, vector<32x256xf32>
    %188 = arith.mulf %186, %187 : vector<32x256xf32>
    %189 = arith.addf %185, %188 : vector<32x256xf32>
    %c240_i32 = arith.constant 240 : i32
    %190 = tpu.dynamic_rotate %121 by %c240_i32 dim 1 : vector<32x256xf32>, i32 -> vector<32x256xf32>
    %c0_69 = arith.constant 0 : index
    %c6656 = arith.constant 6656 : index
    %191 = vector.load %arg3[%c0_69, %c6656] : memref<32x9856xf32, #tpu.memory_space<vmem>>, vector<32x256xf32>
    %192 = arith.mulf %190, %191 : vector<32x256xf32>
    %193 = arith.addf %189, %192 : vector<32x256xf32>
    %c239_i32 = arith.constant 239 : i32
    %194 = tpu.dynamic_rotate %121 by %c239_i32 dim 1 : vector<32x256xf32>, i32 -> vector<32x256xf32>
    %c0_70 = arith.constant 0 : index
    %c6912 = arith.constant 6912 : index
    %195 = vector.load %arg3[%c0_70, %c6912] : memref<32x9856xf32, #tpu.memory_space<vmem>>, vector<32x256xf32>
    %196 = arith.mulf %194, %195 : vector<32x256xf32>
    %197 = arith.addf %193, %196 : vector<32x256xf32>
    %c238_i32 = arith.constant 238 : i32
    %198 = tpu.dynamic_rotate %121 by %c238_i32 dim 1 : vector<32x256xf32>, i32 -> vector<32x256xf32>
    %c0_71 = arith.constant 0 : index
    %c7168 = arith.constant 7168 : index
    %199 = vector.load %arg3[%c0_71, %c7168] : memref<32x9856xf32, #tpu.memory_space<vmem>>, vector<32x256xf32>
    %200 = arith.mulf %198, %199 : vector<32x256xf32>
    %201 = arith.addf %197, %200 : vector<32x256xf32>
    %c226_i32 = arith.constant 226 : i32
    %202 = tpu.dynamic_rotate %121 by %c226_i32 dim 1 : vector<32x256xf32>, i32 -> vector<32x256xf32>
    %c0_72 = arith.constant 0 : index
    %c7424 = arith.constant 7424 : index
    %203 = vector.load %arg3[%c0_72, %c7424] : memref<32x9856xf32, #tpu.memory_space<vmem>>, vector<32x256xf32>
    %204 = arith.mulf %202, %203 : vector<32x256xf32>
    %205 = arith.addf %201, %204 : vector<32x256xf32>
    %c225_i32 = arith.constant 225 : i32
    %206 = tpu.dynamic_rotate %121 by %c225_i32 dim 1 : vector<32x256xf32>, i32 -> vector<32x256xf32>
    %c0_73 = arith.constant 0 : index
    %c7680 = arith.constant 7680 : index
    %207 = vector.load %arg3[%c0_73, %c7680] : memref<32x9856xf32, #tpu.memory_space<vmem>>, vector<32x256xf32>
    %208 = arith.mulf %206, %207 : vector<32x256xf32>
    %209 = arith.addf %205, %208 : vector<32x256xf32>
    %c224_i32 = arith.constant 224 : i32
    %210 = tpu.dynamic_rotate %121 by %c224_i32 dim 1 : vector<32x256xf32>, i32 -> vector<32x256xf32>
    %c0_74 = arith.constant 0 : index
    %c7936 = arith.constant 7936 : index
    %211 = vector.load %arg3[%c0_74, %c7936] : memref<32x9856xf32, #tpu.memory_space<vmem>>, vector<32x256xf32>
    %212 = arith.mulf %210, %211 : vector<32x256xf32>
    %213 = arith.addf %209, %212 : vector<32x256xf32>
    %c223_i32 = arith.constant 223 : i32
    %214 = tpu.dynamic_rotate %121 by %c223_i32 dim 1 : vector<32x256xf32>, i32 -> vector<32x256xf32>
    %c0_75 = arith.constant 0 : index
    %c8192 = arith.constant 8192 : index
    %215 = vector.load %arg3[%c0_75, %c8192] : memref<32x9856xf32, #tpu.memory_space<vmem>>, vector<32x256xf32>
    %216 = arith.mulf %214, %215 : vector<32x256xf32>
    %217 = arith.addf %213, %216 : vector<32x256xf32>
    %c222_i32 = arith.constant 222 : i32
    %218 = tpu.dynamic_rotate %121 by %c222_i32 dim 1 : vector<32x256xf32>, i32 -> vector<32x256xf32>
    %c0_76 = arith.constant 0 : index
    %c8448 = arith.constant 8448 : index
    %219 = vector.load %arg3[%c0_76, %c8448] : memref<32x9856xf32, #tpu.memory_space<vmem>>, vector<32x256xf32>
    %220 = arith.mulf %218, %219 : vector<32x256xf32>
    %221 = arith.addf %217, %220 : vector<32x256xf32>
    %c0_77 = arith.constant 0 : index
    %c3 = arith.constant 3 : index
    %222 = vector.load %arg7[%c0_77, %c3] : memref<64x8xf32, #tpu.memory_space<vmem>>, vector<32x1xf32>
    %223 = vector.broadcast %222 : vector<32x1xf32> to vector<32x256xf32>
    %224 = arith.addf %221, %223 : vector<32x256xf32>
    %c0_78 = arith.constant 0 : index
    %c0_79 = arith.constant 0 : index
    %225 = vector.load %arg8[%c0_78, %c0_79] : memref<32x256xf32, #tpu.memory_space<vmem>>, vector<32x256xf32>
    tpu.vector_store %arg8[%c0_78, %c0_79], %224 {strides = array<i32>} : memref<32x256xf32, #tpu.memory_space<vmem>>, vector<32x256xf32>,
    return
  }
  func.func @transform_0(%arg0: i32) -> (i32, i32) {
    %c0_i32 = arith.constant 0 : i32
    %c0_i32_0 = arith.constant 0 : i32
    %c0_i32_1 = arith.constant 0 : i32
    return %c0_i32, %c0_i32_0 : i32, i32
  }
  func.func @transform_1(%arg0: i32) -> (i32, i32) {
    %c0_i32 = arith.constant 0 : i32
    %c0_i32_0 = arith.constant 0 : i32
    %c0_i32_1 = arith.constant 0 : i32
    return %c0_i32, %c0_i32_0 : i32, i32
  }
  func.func @transform_2(%arg0: i32) -> (i32, i32) {
    %c0_i32 = arith.constant 0 : i32
    %c0_i32_0 = arith.constant 0 : i32
    %c0_i32_1 = arith.constant 0 : i32
    return %c0_i32, %c0_i32_0 : i32, i32
  }
  func.func @transform_3(%arg0: i32) -> (i32, i32) {
    %c0_i32 = arith.constant 0 : i32
    %c0_i32_0 = arith.constant 0 : i32
    %c0_i32_1 = arith.constant 0 : i32
    return %c0_i32, %c0_i32_0 : i32, i32
  }
  func.func @transform_4(%arg0: i32) -> (i32, i32) {
    %c0_i32 = arith.constant 0 : i32
    %c0_i32_0 = arith.constant 0 : i32
    %c0_i32_1 = arith.constant 0 : i32
    return %c0_i32, %c0_i32_0 : i32, i32
  }
  func.func @transform_5(%arg0: i32) -> (i32, i32) {
    %c0_i32 = arith.constant 0 : i32
    %c0_i32_0 = arith.constant 0 : i32
    %c0_i32_1 = arith.constant 0 : i32
    return %c0_i32, %c0_i32_0 : i32, i32
  }
  func.func @transform_6(%arg0: i32) -> (i32, i32) {
    %c0_i32 = arith.constant 0 : i32
    %c0_i32_0 = arith.constant 0 : i32
    %c0_i32_1 = arith.constant 0 : i32
    return %c0_i32, %c0_i32_0 : i32, i32
  }
  func.func @transform_7(%arg0: i32) -> (i32, i32) {
    %c0_i32 = arith.constant 0 : i32
    %c0_i32_0 = arith.constant 0 : i32
    %c0_i32_1 = arith.constant 0 : i32
    return %c0_i32, %c0_i32_0 : i32, i32
  }
}

</mosaic_0001>

<llo_original>
// kernel: tile.48
$region0: #{tile.48}
  %s0 = inlined_call_operand.vmem [shape: f32[2,16,9], index: 0, kind: input, shape index: {}]
  %s1 = inlined_call_operand.vmem [shape: f32[32,9], index: 1, kind: output, shape index: {}]
  $region1: #{tile.48} parent=0
    #allocation0 [shape = 'u8[36864]{0}', space=vmem, size = 0x9000, scoped, tag = 'scoped mem for input reshape']
    %s3 = sshllo.u32 0, 2
    %s4 = smul.addr 2, 8
    %s5 = scalar_lea.vmem %s0, %s4
    %v6 = vld [vmem:[%s5] sm:%s3]
    %s7 = scalar_lea.vmem [#allocation0], 64
    %8 = vst [vmem:[%s7] sm:%s3] %v6
    %s9 = smul.addr 2, 7
    %s10 = scalar_lea.vmem %s0, %s9
    %v11 = vld [vmem:[%s10] sm:%s3]
    %s12 = scalar_lea.vmem [#allocation0], 56
    %13 = vst [vmem:[%s12] sm:%s3] %v11
    %s14 = smul.addr 2, 6
    %s15 = scalar_lea.vmem %s0, %s14
    %v16 = vld [vmem:[%s15] sm:%s3]
    %s17 = scalar_lea.vmem [#allocation0], 48
    %18 = vst [vmem:[%s17] sm:%s3] %v16
    %s19 = smul.addr 2, 5
    %s20 = scalar_lea.vmem %s0, %s19
    %v21 = vld [vmem:[%s20] sm:%s3]
    %s22 = scalar_lea.vmem [#allocation0], 40
    %23 = vst [vmem:[%s22] sm:%s3] %v21
    %s24 = smul.addr 2, 4
    %s25 = scalar_lea.vmem %s0, %s24
    %v26 = vld [vmem:[%s25] sm:%s3]
    %s27 = scalar_lea.vmem [#allocation0], 32
    %28 = vst [vmem:[%s27] sm:%s3] %v26
    %s29 = smul.addr 2, 3
    %s30 = scalar_lea.vmem %s0, %s29
    %v31 = vld [vmem:[%s30] sm:%s3]
    %s32 = scalar_lea.vmem [#allocation0], 24
    %33 = vst [vmem:[%s32] sm:%s3] %v31
    %s34 = smul.addr 2, 2
    %s35 = scalar_lea.vmem %s0, %s34
    %v36 = vld [vmem:[%s35] sm:%s3]
    %s37 = scalar_lea.vmem [#allocation0], 16
    %38 = vst [vmem:[%s37] sm:%s3] %v36
    %s39 = scalar_lea.vmem %s0, 2
    %v40 = vld [vmem:[%s39] sm:%s3]
    %s41 = scalar_lea.vmem [#allocation0], 8
    %42 = vst [vmem:[%s41] sm:%s3] %v40
    %v43 = vld [vmem:[%s0] sm:%s3]
    %44 = vst [vmem:[#allocation0] sm:%s3] %v43
    %v45 = vld [vmem:[#allocation0] ss:$8 sm:$0xf]
    %v46 = vld [vmem:[#allocation0] ss:$8 sm:$0xf0]
    %vm47 = vcmask 1047556
    %v48 = vsel %vm47, %v46, %v45
    %vm49 = vcmask 130048
    %50 = vst.msk [vmem:[%s1] sm:$0xff] %vm49, %v48
    %s51 = scalar_lea.vmem [#allocation0], 64
    %v52 = vld [vmem:[%s51] sm:$0x1]
    %vm53 = vcmask 130048
    %s54 = scalar_lea.vmem %s1, 8
    %55 = vst.msk [vmem:[%s54] sm:$0x1] %vm53, %v52
    %s56 = scalar_lea.vmem [#allocation0], 1
    %v57 = vld [vmem:[%s56] ss:$8 sm:$0xf]
    %s58 = scalar_lea.vmem [#allocation0], 1
    %v59 = vld [vmem:[%s58] ss:$8 sm:$0xf0]
    %vm60 = vcmask 1047556
    %v61 = vsel %vm60, %v59, %v57
    %62 = vrot.lane.b32.xlu0 %v61, 16
    %v63 = vpop.permute.xlu0 %62
    %vm64 = vcmask 261248
    %65 = vst.msk [vmem:[%s1] sm:$0xff] %vm64, %v63
    %s66 = scalar_lea.vmem [#allocation0], 65
    %v67 = vld [vmem:[%s66] sm:$0x1]
    %68 = vrot.lane.b32.xlu0 %v67, 16
    %v69 = vpop.permute.xlu0 %68
    %vm70 = vcmask 261248
    %s71 = scalar_lea.vmem %s1, 8
    %72 = vst.msk [vmem:[%s71] sm:$0x1] %vm70, %v69

// kernel: tile.57
$region0: #{tile.57}
  #allocation0 [shape = 's32[1]{0}', space=sflag, size = 0x4, scoped, tag = 'scoped memory for tile.57']
  %s0 = inlined_call_operand.vmem [shape: f32[16], index: 0, kind: input, shape index: {}]
  %s1 = inlined_call_operand.vmem [shape: f32[2,16], index: 1, kind: output, shape index: {}]
  // Predicated region
  $region2: #{tile.57} parent=0 // pred_check
    _
  $region3: #{tile.57} parent=0 // pred_check_branch
    %3 = sbr.rel (0) target = $region5
  $region4: #{tile.57} parent=0 // pred_region
    _
  $region5: #{tile.57} parent=0 // pred_fallthru
    _
  %v4 = vld [vmem:[%s0] ss:$0 sm:$0xff]
  %5 = vst [vmem:[%s1] sm:$0x3] %v4

// kernel: recattn2d_forward.1
$region0: #{recattn2d_forward.1}
  #allocation0 [shape = 'u32[]', space=smem, size = 0x4, offset = 0x4, fixed_abs, tag = 'smem constant byte address 0x4 - core index']
  #allocation1 [shape = 'u32[144,128]{1,0:T(1,128)}', space=vmem, size = 0x12000, scoped, tag = 'internal scratch']
  %s0 = inlined_call_operand.vmem [shape: f32[32,256], index: 0, kind: input, shape index: {}]
  %s1 = inlined_call_operand.vmem [shape: f32[256,256], index: 1, kind: input, shape index: {}]
  %s2 = inlined_call_operand.vmem [shape: f32[32,9856], index: 2, kind: input, shape index: {}]
  %s3 = inlined_call_operand.vmem [shape: f32[64,256], index: 3, kind: input, shape index: {}]
  %s4 = inlined_call_operand.vmem [shape: f32[64,32], index: 4, kind: input, shape index: {}]
  %s5 = inlined_call_operand.vmem [shape: f32[32,32], index: 5, kind: input, shape index: {}]
  %s6 = inlined_call_operand.vmem [shape: f32[64,8], index: 6, kind: input, shape index: {}]
  %s7 = inlined_call_operand.vmem [shape: f32[32,256], index: 7, kind: output, shape index: {}]
  %s8 = sld [smem:[#allocation0]]
  $region38: #{recattn2d_forward.1} parent=0
    _
  %s10 = ssub.s32 1, %s8
  %s11 = scalar_select 0, %s10, %s8
  // Predicated region
  $region2: #{recattn2d_forward.1} parent=0 // pred_check
    _
  $region3: #{recattn2d_forward.1} parent=0 // pred_check_branch
    %13 = sbr.rel (0) target = $region5
  $region4: #{recattn2d_forward.1} parent=0 // pred_region
    _
  $region5: #{recattn2d_forward.1} parent=0 // pred_fallthru
    _
  // Predicated region
  $region6: #{recattn2d_forward.1} parent=0 // pred_check
    _
  $region7: #{recattn2d_forward.1} parent=0 // pred_check_branch
    %15 = sbr.rel (0) target = $region9
  $region8: #{recattn2d_forward.1} parent=0 // pred_region
    _
  $region9: #{recattn2d_forward.1} parent=0 // pred_fallthru
    _
  // Predicated region
  $region10: #{recattn2d_forward.1} parent=0 // pred_check
    _
  $region11: #{recattn2d_forward.1} parent=0 // pred_check_branch
    %17 = sbr.rel (0) target = $region13
  $region12: #{recattn2d_forward.1} parent=0 // pred_region
    _
  $region13: #{recattn2d_forward.1} parent=0 // pred_fallthru
    _
  // Predicated region
  $region14: #{recattn2d_forward.1} parent=0 // pred_check
    _
  $region15: #{recattn2d_forward.1} parent=0 // pred_check_branch
    %19 = sbr.rel (0) target = $region17
  $region16: #{recattn2d_forward.1} parent=0 // pred_region
    _
  $region17: #{recattn2d_forward.1} parent=0 // pred_fallthru
    _
  // Predicated region
  $region18: #{recattn2d_forward.1} parent=0 // pred_check
    _
  $region19: #{recattn2d_forward.1} parent=0 // pred_check_branch
    %21 = sbr.rel (0) target = $region21
  $region20: #{recattn2d_forward.1} parent=0 // pred_region
    _
  $region21: #{recattn2d_forward.1} parent=0 // pred_fallthru
    _
  // Predicated region
  $region22: #{recattn2d_forward.1} parent=0 // pred_check
    _
  $region23: #{recattn2d_forward.1} parent=0 // pred_check_branch
    %23 = sbr.rel (0) target = $region25
  $region24: #{recattn2d_forward.1} parent=0 // pred_region
    _
  $region25: #{recattn2d_forward.1} parent=0 // pred_fallthru
    _
  // Predicated region
  $region26: #{recattn2d_forward.1} parent=0 // pred_check
    _
  $region27: #{recattn2d_forward.1} parent=0 // pred_check_branch
    %25 = sbr.rel (0) target = $region29
  $region28: #{recattn2d_forward.1} parent=0 // pred_region
    _
  $region29: #{recattn2d_forward.1} parent=0 // pred_fallthru
    _
  %v26 = vld [vmem:[%s0] sm:$0xff]
  %v27 = vld [vmem:[%s0 + $0x8] sm:$0xff]
  %v28 = vld [vmem:[%s0 + $0x10] sm:$0xff]
  %v29 = vld [vmem:[%s0 + $0x18] sm:$0xff]
  %v30 = vld [vmem:[%s0 + $0x20] sm:$0xff]
  %v31 = vld [vmem:[%s0 + $0x28] sm:$0xff]
  %v32 = vld [vmem:[%s0 + $0x30] sm:$0xff]
  %v33 = vld [vmem:[%s0 + $0x38] sm:$0xff]
  %v34 = vld [vmem:[%s1] sm:$0xff]
  %v35 = vld [vmem:[%s1 + $0x8] sm:$0xff]
  %v36 = vld [vmem:[%s1 + $0x10] sm:$0xff]
  %v37 = vld [vmem:[%s1 + $0x18] sm:$0xff]
  %v38 = vld [vmem:[%s1 + $0x20] sm:$0xff]
  %v39 = vld [vmem:[%s1 + $0x28] sm:$0xff]
  %v40 = vld [vmem:[%s1 + $0x30] sm:$0xff]
  %v41 = vld [vmem:[%s1 + $0x38] sm:$0xff]
  %v42 = vld [vmem:[%s1 + $0x40] sm:$0xff]
  %v43 = vld [vmem:[%s1 + $0x48] sm:$0xff]
  %v44 = vld [vmem:[%s1 + $0x50] sm:$0xff]
  %v45 = vld [vmem:[%s1 + $0x58] sm:$0xff]
  %v46 = vld [vmem:[%s1 + $0x60] sm:$0xff]
  %v47 = vld [vmem:[%s1 + $0x68] sm:$0xff]
  %v48 = vld [vmem:[%s1 + $0x70] sm:$0xff]
  %v49 = vld [vmem:[%s1 + $0x78] sm:$0xff]
  %v50 = vld [vmem:[%s1 + $0x80] sm:$0xff]
  %v51 = vld [vmem:[%s1 + $0x88] sm:$0xff]
  %v52 = vld [vmem:[%s1 + $0x90] sm:$0xff]
  %v53 = vld [vmem:[%s1 + $0x98] sm:$0xff]
  %v54 = vld [vmem:[%s1 + $0xa0] sm:$0xff]
  %v55 = vld [vmem:[%s1 + $0xa8] sm:$0xff]
  %v56 = vld [vmem:[%s1 + $0xb0] sm:$0xff]
  %v57 = vld [vmem:[%s1 + $0xb8] sm:$0xff]
  %v58 = vld [vmem:[%s1 + $0xc0] sm:$0xff]
  %v59 = vld [vmem:[%s1 + $0xc8] sm:$0xff]
  %v60 = vld [vmem:[%s1 + $0xd0] sm:$0xff]
  %v61 = vld [vmem:[%s1 + $0xd8] sm:$0xff]
  %v62 = vld [vmem:[%s1 + $0xe0] sm:$0xff]
  %v63 = vld [vmem:[%s1 + $0xe8] sm:$0xff]
  %v64 = vld [vmem:[%s1 + $0xf0] sm:$0xff]
  %v65 = vld [vmem:[%s1 + $0xf8] sm:$0xff]
  %v66 = vld [vmem:[%s1 + $0x100] sm:$0xff]
  %v67 = vld [vmem:[%s1 + $0x108] sm:$0xff]
  %v68 = vld [vmem:[%s1 + $0x110] sm:$0xff]
  %v69 = vld [vmem:[%s1 + $0x118] sm:$0xff]
  %v70 = vld [vmem:[%s1 + $0x120] sm:$0xff]
  %v71 = vld [vmem:[%s1 + $0x128] sm:$0xff]
  %v72 = vld [vmem:[%s1 + $0x130] sm:$0xff]
  %v73 = vld [vmem:[%s1 + $0x138] sm:$0xff]
  %v74 = vld [vmem:[%s1 + $0x140] sm:$0xff]
  %v75 = vld [vmem:[%s1 + $0x148] sm:$0xff]
  %v76 = vld [vmem:[%s1 + $0x150] sm:$0xff]
  %v77 = vld [vmem:[%s1 + $0x158] sm:$0xff]
  %v78 = vld [vmem:[%s1 + $0x160] sm:$0xff]
  %v79 = vld [vmem:[%s1 + $0x168] sm:$0xff]
  %v80 = vld [vmem:[%s1 + $0x170] sm:$0xff]
  %v81 = vld [vmem:[%s1 + $0x178] sm:$0xff]
  %v82 = vld [vmem:[%s1 + $0x180] sm:$0xff]
  %v83 = vld [vmem:[%s1 + $0x188] sm:$0xff]
  %v84 = vld [vmem:[%s1 + $0x190] sm:$0xff]
  %v85 = vld [vmem:[%s1 + $0x198] sm:$0xff]
  %v86 = vld [vmem:[%s1 + $0x1a0] sm:$0xff]
  %v87 = vld [vmem:[%s1 + $0x1a8] sm:$0xff]
  %v88 = vld [vmem:[%s1 + $0x1b0] sm:$0xff]
  %v89 = vld [vmem:[%s1 + $0x1b8] sm:$0xff]
  %v90 = vld [vmem:[%s1 + $0x1c0] sm:$0xff]
  %v91 = vld [vmem:[%s1 + $0x1c8] sm:$0xff]
  %v92 = vld [vmem:[%s1 + $0x1d0] sm:$0xff]
  %v93 = vld [vmem:[%s1 + $0x1d8] sm:$0xff]
  %v94 = vld [vmem:[%s1 + $0x1e0] sm:$0xff]
  %v95 = vld [vmem:[%s1 + $0x1e8] sm:$0xff]
  %v96 = vld [vmem:[%s1 + $0x1f0] sm:$0xff]
  %v97 = vld [vmem:[%s1 + $0x1f8] sm:$0xff]
  %98 = vmatprep.subr.mxu0 %v35
  %99 = vmatpush1.msra.mxu0 %v34
  %100 = vmatprep.subr.mxu0 %v37
  %101 = vmatpush1.msra.mxu0 %v36
  %102 = vmatprep.subr.mxu0 %v39
  %103 = vmatpush1.msra.mxu0 %v38
  %104 = vmatprep.subr.mxu0 %v41
  %105 = vmatpush1.msra.mxu0 %v40
  %106 = vmatprep.subr.mxu0 %v43
  %107 = vmatpush1.msra.mxu0 %v42
  %108 = vmatprep.subr.mxu0 %v45
  %109 = vmatpush1.msra.mxu0 %v44
  %110 = vmatprep.subr.mxu0 %v47
  %111 = vmatpush1.msra.mxu0 %v46
  %112 = vmatprep.subr.mxu0 %v49
  %113 = vmatpush1.msra.mxu0 %v48
  %114 = vmatprep.subr.mxu0 %v51
  %115 = vmatpush1.msra.mxu0 %v50
  %116 = vmatprep.subr.mxu0 %v53
  %117 = vmatpush1.msra.mxu0 %v52
  %118 = vmatprep.subr.mxu0 %v55
  %119 = vmatpush1.msra.mxu0 %v54
  %120 = vmatprep.subr.mxu0 %v57
  %121 = vmatpush1.msra.mxu0 %v56
  %122 = vmatprep.subr.mxu0 %v59
  %123 = vmatpush1.msra.mxu0 %v58
  %124 = vmatprep.subr.mxu0 %v61
  %125 = vmatpush1.msra.mxu0 %v60
  %126 = vmatprep.subr.mxu0 %v63
  %127 = vmatpush1.msra.mxu0 %v62
  %128 = vmatprep.subr.mxu0 %v65
  %129 = vmatpush1.msra.mxu0 %v64
  %130 = vmatprep.subr.mxu0 %v67
  %131 = vmatpush1.msra.mxu0 %v66
  %132 = vmatprep.subr.mxu0 %v69
  %133 = vmatpush1.msra.mxu0 %v68
  %134 = vmatprep.subr.mxu0 %v71
  %135 = vmatpush1.msra.mxu0 %v70
  %136 = vmatprep.subr.mxu0 %v73
  %137 = vmatpush1.msra.mxu0 %v72
  %138 = vmatprep.subr.mxu0 %v75
  %139 = vmatpush1.msra.mxu0 %v74
  %140 = vmatprep.subr.mxu0 %v77
  %141 = vmatpush1.msra.mxu0 %v76
  %142 = vmatprep.subr.mxu0 %v79
  %143 = vmatpush1.msra.mxu0 %v78
  %144 = vmatprep.subr.mxu0 %v81
  %145 = vmatpush1.msra.mxu0 %v80
  %146 = vmatprep.subr.mxu0 %v83
  %147 = vmatpush1.msra.mxu0 %v82
  %148 = vmatprep.subr.mxu0 %v85
  %149 = vmatpush1.msra.mxu0 %v84
  %150 = vmatprep.subr.mxu0 %v87
  %151 = vmatpush1.msra.mxu0 %v86
  %152 = vmatprep.subr.mxu0 %v89
  %153 = vmatpush1.msra.mxu0 %v88
  %154 = vmatprep.subr.mxu0 %v91
  %155 = vmatpush1.msra.mxu0 %v90
  %156 = vmatprep.subr.mxu0 %v93
  %157 = vmatpush1.msra.mxu0 %v92
  %158 = vmatprep.subr.mxu0 %v95
  %159 = vmatpush1.msra.mxu0 %v94
  %160 = vmatprep.subr.mxu0 %v97
  %161 = vmatpush1.msra.mxu0 %v96
  %162 = vmatprep.mubr.f32.mxu0 %v27
  %163 = vmatmul.mubr.f32.gmra.mrb[0].mxu0 %v26
  %v164 = vpop.f32.mrb[0].mxu0
  %v165 = vadd.f32 0.0, %v164
  %v166 = vpop.f32.mrb[0].mxu0
  %v167 = vadd.f32 0.0, %v166
  %168 = vmatprep.mubr.f32.mxu0 %v29
  %169 = vmatmul.mubr.f32.gmra.mrb[0].mxu0 %v28
  %v170 = vpop.f32.mrb[0].mxu0
  %v171 = vadd.f32 0.0, %v170
  %v172 = vpop.f32.mrb[0].mxu0
  %v173 = vadd.f32 0.0, %v172
  %174 = vmatprep.mubr.f32.mxu0 %v31
  %175 = vmatmul.mubr.f32.gmra.mrb[0].mxu0 %v30
  %v176 = vpop.f32.mrb[0].mxu0
  %v177 = vadd.f32 0.0, %v176
  %v178 = vpop.f32.mrb[0].mxu0
  %v179 = vadd.f32 0.0, %v178
  %180 = vmatprep.mubr.f32.mxu0 %v33
  %181 = vmatmul.mubr.f32.gmra.mrb[0].mxu0 %v32
  %v182 = vpop.f32.mrb[0].mxu0
  %v183 = vadd.f32 0.0, %v182
  %v184 = vpop.f32.mrb[0].mxu0
  %v185 = vadd.f32 0.0, %v184
  %186 = vdwg.mxu0
  %187 = vrot.lane.b32.xlu0 %v165, 9
  %v188 = vpop.permute.xlu0 %187
  %189 = vrot.lane.b32.xlu0 %v171, 9
  %v190 = vpop.permute.xlu0 %189
  %191 = vrot.lane.b32.xlu0 %v177, 9
  %v192 = vpop.permute.xlu0 %191
  %193 = vrot.lane.b32.xlu0 %v183, 9
  %v194 = vpop.permute.xlu0 %193
  %195 = vrot.lane.b32.xlu0 %v167, 9
  %v196 = vpop.permute.xlu0 %195
  %197 = vrot.lane.b32.xlu0 %v173, 9
  %v198 = vpop.permute.xlu0 %197
  %199 = vrot.lane.b32.xlu0 %v179, 9
  %v200 = vpop.permute.xlu0 %199
  %201 = vrot.lane.b32.xlu0 %v185, 9
  %v202 = vpop.permute.xlu0 %201
  %v203 = vlaneseq
  %v204 = vand.u32 %v203, 127
  %vm205 = vcmp.lt.s32.totalorder %v204, 9
  %v206 = vsel %vm205, %v188, %v196
  %v207 = vsel %vm205, %v190, %v198
  %v208 = vsel %vm205, %v192, %v200
  %v209 = vsel %vm205, %v194, %v202
  %v210 = vsel %vm205, %v196, %v188
  %v211 = vsel %vm205, %v198, %v190
  %v212 = vsel %vm205, %v200, %v192
  %v213 = vsel %vm205, %v202, %v194
  %v214 = vld [vmem:[%s2] sm:$0xff]
  %v215 = vld [vmem:[%s2 + $0x8] sm:$0xff]
  %v216 = vld [vmem:[%s2 + $0x268] sm:$0xff]
  %v217 = vld [vmem:[%s2 + $0x270] sm:$0xff]
  %v218 = vld [vmem:[%s2 + $0x4d0] sm:$0xff]
  %v219 = vld [vmem:[%s2 + $0x4d8] sm:$0xff]
  %v220 = vld [vmem:[%s2 + $0x738] sm:$0xff]
  %v221 = vld [vmem:[%s2 + $0x740] sm:$0xff]
  %v222 = vmul.f32 %v210, %v214
  %v223 = vmul.f32 %v206, %v215
  %v224 = vmul.f32 %v211, %v216
  %v225 = vmul.f32 %v207, %v217
  %v226 = vmul.f32 %v212, %v218
  %v227 = vmul.f32 %v208, %v219
  %v228 = vmul.f32 %v213, %v220
  %v229 = vmul.f32 %v209, %v221
  %v230 = vadd.f32 %v222, 0.0
  %v231 = vadd.f32 %v223, 0.0
  %v232 = vadd.f32 %v224, 0.0
  %v233 = vadd.f32 %v225, 0.0
  %v234 = vadd.f32 %v226, 0.0
  %v235 = vadd.f32 %v227, 0.0
  %v236 = vadd.f32 %v228, 0.0
  %v237 = vadd.f32 %v229, 0.0
  %238 = vrot.lane.b32.xlu0 %v165, 8
  %v239 = vpop.permute.xlu0 %238
  %240 = vrot.lane.b32.xlu0 %v171, 8
  %v241 = vpop.permute.xlu0 %240
  %242 = vrot.lane.b32.xlu0 %v177, 8
  %v243 = vpop.permute.xlu0 %242
  %244 = vrot.lane.b32.xlu0 %v183, 8
  %v245 = vpop.permute.xlu0 %244
  %246 = vrot.lane.b32.xlu0 %v167, 8
  %v247 = vpop.permute.xlu0 %246
  %248 = vrot.lane.b32.xlu0 %v173, 8
  %v249 = vpop.permute.xlu0 %248
  %250 = vrot.lane.b32.xlu0 %v179, 8
  %v251 = vpop.permute.xlu0 %250
  %252 = vrot.lane.b32.xlu0 %v185, 8
  %v253 = vpop.permute.xlu0 %252
  %vm254 = vcmp.lt.s32.totalorder %v204, 8
  %v255 = vsel %vm254, %v239, %v247
  %v256 = vsel %vm254, %v241, %v249
  %v257 = vsel %vm254, %v243, %v251
  %v258 = vsel %vm254, %v245, %v253
  %v259 = vsel %vm254, %v247, %v239
  %v260 = vsel %vm254, %v249, %v241
  %v261 = vsel %vm254, %v251, %v243
  %v262 = vsel %vm254, %v253, %v245
  %v263 = vld [vmem:[%s2 + $0x10] sm:$0xff]
  %v264 = vld [vmem:[%s2 + $0x18] sm:$0xff]
  %v265 = vld [vmem:[%s2 + $0x278] sm:$0xff]
  %v266 = vld [vmem:[%s2 + $0x280] sm:$0xff]
  %v267 = vld [vmem:[%s2 + $0x4e0] sm:$0xff]
  %v268 = vld [vmem:[%s2 + $0x4e8] sm:$0xff]
  %v269 = vld [vmem:[%s2 + $0x748] sm:$0xff]
  %v270 = vld [vmem:[%s2 + $0x750] sm:$0xff]
  %v271 = vmul.f32 %v259, %v263
  %v272 = vmul.f32 %v255, %v264
  %v273 = vmul.f32 %v260, %v265
  %v274 = vmul.f32 %v256, %v266
  %v275 = vmul.f32 %v261, %v267
  %v276 = vmul.f32 %v257, %v268
  %v277 = vmul.f32 %v262, %v269
  %v278 = vmul.f32 %v258, %v270
  %v279 = vadd.f32 %v230, %v271
  %v280 = vadd.f32 %v231, %v272
  %v281 = vadd.f32 %v232, %v273
  %v282 = vadd.f32 %v233, %v274
  %v283 = vadd.f32 %v234, %v275
  %v284 = vadd.f32 %v235, %v276
  %v285 = vadd.f32 %v236, %v277
  %v286 = vadd.f32 %v237, %v278
  %287 = vrot.lane.b32.xlu0 %v165, 7
  %v288 = vpop.permute.xlu0 %287
  %289 = vrot.lane.b32.xlu0 %v171, 7
  %v290 = vpop.permute.xlu0 %289
  %291 = vrot.lane.b32.xlu0 %v177, 7
  %v292 = vpop.permute.xlu0 %291
  %293 = vrot.lane.b32.xlu0 %v183, 7
  %v294 = vpop.permute.xlu0 %293
  %295 = vrot.lane.b32.xlu0 %v167, 7
  %v296 = vpop.permute.xlu0 %295
  %297 = vrot.lane.b32.xlu0 %v173, 7
  %v298 = vpop.permute.xlu0 %297
  %299 = vrot.lane.b32.xlu0 %v179, 7
  %v300 = vpop.permute.xlu0 %299
  %301 = vrot.lane.b32.xlu0 %v185, 7
  %v302 = vpop.permute.xlu0 %301
  %vm303 = vcmp.lt.s32.totalorder %v204, 7
  %v304 = vsel %vm303, %v288, %v296
  %v305 = vsel %vm303, %v290, %v298
  %v306 = vsel %vm303, %v292, %v300
  %v307 = vsel %vm303, %v294, %v302
  %v308 = vsel %vm303, %v296, %v288
  %v309 = vsel %vm303, %v298, %v290
  %v310 = vsel %vm303, %v300, %v292
  %v311 = vsel %vm303, %v302, %v294
  %v312 = vld [vmem:[%s2 + $0x20] sm:$0xff]
  %v313 = vld [vmem:[%s2 + $0x28] sm:$0xff]
  %v314 = vld [vmem:[%s2 + $0x288] sm:$0xff]
  %v315 = vld [vmem:[%s2 + $0x290] sm:$0xff]
  %v316 = vld [vmem:[%s2 + $0x4f0] sm:$0xff]
  %v317 = vld [vmem:[%s2 + $0x4f8] sm:$0xff]
  %v318 = vld [vmem:[%s2 + $0x758] sm:$0xff]
  %v319 = vld [vmem:[%s2 + $0x760] sm:$0xff]
  %v320 = vmul.f32 %v308, %v312
  %v321 = vmul.f32 %v304, %v313
  %v322 = vmul.f32 %v309, %v314
  %v323 = vmul.f32 %v305, %v315
  %v324 = vmul.f32 %v310, %v316
  %v325 = vmul.f32 %v306, %v317
  %v326 = vmul.f32 %v311, %v318
  %v327 = vmul.f32 %v307, %v319
  %v328 = vadd.f32 %v279, %v320
  %v329 = vadd.f32 %v280, %v321
  %v330 = vadd.f32 %v281, %v322
  %v331 = vadd.f32 %v282, %v323
  %v332 = vadd.f32 %v283, %v324
  %v333 = vadd.f32 %v284, %v325
  %v334 = vadd.f32 %v285, %v326
  %v335 = vadd.f32 %v286, %v327
  %336 = vrot.lane.b32.xlu0 %v165, 1
  %v337 = vpop.permute.xlu0 %336
  %338 = vrot.lane.b32.xlu0 %v171, 1
  %v339 = vpop.permute.xlu0 %338
  %340 = vrot.lane.b32.xlu0 %v177, 1
  %v341 = vpop.permute.xlu0 %340
  %342 = vrot.lane.b32.xlu0 %v183, 1
  %v343 = vpop.permute.xlu0 %342
  %344 = vrot.lane.b32.xlu0 %v167, 1
  %v345 = vpop.permute.xlu0 %344
  %346 = vrot.lane.b32.xlu0 %v173, 1
  %v347 = vpop.permute.xlu0 %346
  %348 = vrot.lane.b32.xlu0 %v179, 1
  %v349 = vpop.permute.xlu0 %348
  %350 = vrot.lane.b32.xlu0 %v185, 1
  %v351 = vpop.permute.xlu0 %350
  %vm352 = vcmp.lt.s32.totalorder %v204, 1
  %v353 = vsel %vm352, %v337, %v345
  %v354 = vsel %vm352, %v339, %v347
  %v355 = vsel %vm352, %v341, %v349
  %v356 = vsel %vm352, %v343, %v351
  %v357 = vsel %vm352, %v345, %v337
  %v358 = vsel %vm352, %v347, %v339
  %v359 = vsel %vm352, %v349, %v341
  %v360 = vsel %vm352, %v351, %v343
  %v361 = vld [vmem:[%s2 + $0x30] sm:$0xff]
  %v362 = vld [vmem:[%s2 + $0x38] sm:$0xff]
  %v363 = vld [vmem:[%s2 + $0x298] sm:$0xff]
  %v364 = vld [vmem:[%s2 + $0x2a0] sm:$0xff]
  %v365 = vld [vmem:[%s2 + $0x500] sm:$0xff]
  %v366 = vld [vmem:[%s2 + $0x508] sm:$0xff]
  %v367 = vld [vmem:[%s2 + $0x768] sm:$0xff]
  %v368 = vld [vmem:[%s2 + $0x770] sm:$0xff]
  %v369 = vmul.f32 %v357, %v361
  %v370 = vmul.f32 %v353, %v362
  %v371 = vmul.f32 %v358, %v363
  %v372 = vmul.f32 %v354, %v364
  %v373 = vmul.f32 %v359, %v365
  %v374 = vmul.f32 %v355, %v366
  %v375 = vmul.f32 %v360, %v367
  %v376 = vmul.f32 %v356, %v368
  %v377 = vadd.f32 %v328, %v369
  %v378 = vadd.f32 %v329, %v370
  %v379 = vadd.f32 %v330, %v371
  %v380 = vadd.f32 %v331, %v372
  %v381 = vadd.f32 %v332, %v373
  %v382 = vadd.f32 %v333, %v374
  %v383 = vadd.f32 %v334, %v375
  %v384 = vadd.f32 %v335, %v376
  %v385 = vld [vmem:[%s2 + $0x40] sm:$0xff]
  %v386 = vld [vmem:[%s2 + $0x48] sm:$0xff]
  %v387 = vld [vmem:[%s2 + $0x2a8] sm:$0xff]
  %v388 = vld [vmem:[%s2 + $0x2b0] sm:$0xff]
  %v389 = vld [vmem:[%s2 + $0x510] sm:$0xff]
  %v390 = vld [vmem:[%s2 + $0x518] sm:$0xff]
  %v391 = vld [vmem:[%s2 + $0x778] sm:$0xff]
  %v392 = vld [vmem:[%s2 + $0x780] sm:$0xff]
  %v393 = vmul.f32 %v165, %v385
  %v394 = vmul.f32 %v167, %v386
  %v395 = vmul.f32 %v171, %v387
  %v396 = vmul.f32 %v173, %v388
  %v397 = vmul.f32 %v177, %v389
  %v398 = vmul.f32 %v179, %v390
  %v399 = vmul.f32 %v183, %v391
  %v400 = vmul.f32 %v185, %v392
  %v401 = vadd.f32 %v377, %v393
  %v402 = vadd.f32 %v378, %v394
  %v403 = vadd.f32 %v379, %v395
  %v404 = vadd.f32 %v380, %v396
  %v405 = vadd.f32 %v381, %v397
  %v406 = vadd.f32 %v382, %v398
  %v407 = vadd.f32 %v383, %v399
  %v408 = vadd.f32 %v384, %v400
  %409 = vrot.lane.b32.xlu0 %v165, 127
  %v410 = vpop.permute.xlu0 %409
  %411 = vrot.lane.b32.xlu0 %v171, 127
  %v412 = vpop.permute.xlu0 %411
  %413 = vrot.lane.b32.xlu0 %v177, 127
  %v414 = vpop.permute.xlu0 %413
  %415 = vrot.lane.b32.xlu0 %v183, 127
  %v416 = vpop.permute.xlu0 %415
  %417 = vrot.lane.b32.xlu0 %v167, 127
  %v418 = vpop.permute.xlu0 %417
  %419 = vrot.lane.b32.xlu0 %v173, 127
  %v420 = vpop.permute.xlu0 %419
  %421 = vrot.lane.b32.xlu0 %v179, 127
  %v422 = vpop.permute.xlu0 %421
  %423 = vrot.lane.b32.xlu0 %v185, 127
  %v424 = vpop.permute.xlu0 %423
  %vm425 = vcmp.lt.s32.totalorder %v204, 127
  %v426 = vsel %vm425, %v410, %v418
  %v427 = vsel %vm425, %v412, %v420
  %v428 = vsel %vm425, %v414, %v422
  %v429 = vsel %vm425, %v416, %v424
  %v430 = vsel %vm425, %v418, %v410
  %v431 = vsel %vm425, %v420, %v412
  %v432 = vsel %vm425, %v422, %v414
  %v433 = vsel %vm425, %v424, %v416
  %v434 = vld [vmem:[%s2 + $0x50] sm:$0xff]
  %v435 = vld [vmem:[%s2 + $0x58] sm:$0xff]
  %v436 = vld [vmem:[%s2 + $0x2b8] sm:$0xff]
  %v437 = vld [vmem:[%s2 + $0x2c0] sm:$0xff]
  %v438 = vld [vmem:[%s2 + $0x520] sm:$0xff]
  %v439 = vld [vmem:[%s2 + $0x528] sm:$0xff]
  %v440 = vld [vmem:[%s2 + $0x788] sm:$0xff]
  %v441 = vld [vmem:[%s2 + $0x790] sm:$0xff]
  %v442 = vmul.f32 %v426, %v434
  %v443 = vmul.f32 %v430, %v435
  %v444 = vmul.f32 %v427, %v436
  %v445 = vmul.f32 %v431, %v437
  %v446 = vmul.f32 %v428, %v438
  %v447 = vmul.f32 %v432, %v439
  %v448 = vmul.f32 %v429, %v440
  %v449 = vmul.f32 %v433, %v441
  %v450 = vadd.f32 %v401, %v442
  %v451 = vadd.f32 %v402, %v443
  %v452 = vadd.f32 %v403, %v444
  %v453 = vadd.f32 %v404, %v445
  %v454 = vadd.f32 %v405, %v446
  %v455 = vadd.f32 %v406, %v447
  %v456 = vadd.f32 %v407, %v448
  %v457 = vadd.f32 %v408, %v449
  %458 = vrot.lane.b32.xlu0 %v165, 121
  %v459 = vpop.permute.xlu0 %458
  %460 = vrot.lane.b32.xlu0 %v171, 121
  %v461 = vpop.permute.xlu0 %460
  %462 = vrot.lane.b32.xlu0 %v177, 121
  %v463 = vpop.permute.xlu0 %462
  %464 = vrot.lane.b32.xlu0 %v183, 121
  %v465 = vpop.permute.xlu0 %464
  %466 = vrot.lane.b32.xlu0 %v167, 121
  %v467 = vpop.permute.xlu0 %466
  %468 = vrot.lane.b32.xlu0 %v173, 121
  %v469 = vpop.permute.xlu0 %468
  %470 = vrot.lane.b32.xlu0 %v179, 121
  %v471 = vpop.permute.xlu0 %470
  %472 = vrot.lane.b32.xlu0 %v185, 121
  %v473 = vpop.permute.xlu0 %472
  %vm474 = vcmp.lt.s32.totalorder %v204, 121
  %v475 = vsel %vm474, %v459, %v467
  %v476 = vsel %vm474, %v461, %v469
  %v477 = vsel %vm474, %v463, %v471
  %v478 = vsel %vm474, %v465, %v473
  %v479 = vsel %vm474, %v467, %v459
  %v480 = vsel %vm474, %v469, %v461
  %v481 = vsel %vm474, %v471, %v463
  %v482 = vsel %vm474, %v473, %v465
  %v483 = vld [vmem:[%s2 + $0x60] sm:$0xff]
  %v484 = vld [vmem:[%s2 + $0x68] sm:$0xff]
  %v485 = vld [vmem:[%s2 + $0x2c8] sm:$0xff]
  %v486 = vld [vmem:[%s2 + $0x2d0] sm:$0xff]
  %v487 = vld [vmem:[%s2 + $0x530] sm:$0xff]
  %v488 = vld [vmem:[%s2 + $0x538] sm:$0xff]
  %v489 = vld [vmem:[%s2 + $0x798] sm:$0xff]
  %v490 = vld [vmem:[%s2 + $0x7a0] sm:$0xff]
  %v491 = vmul.f32 %v475, %v483
  %v492 = vmul.f32 %v479, %v484
  %v493 = vmul.f32 %v476, %v485
  %v494 = vmul.f32 %v480, %v486
  %v495 = vmul.f32 %v477, %v487
  %v496 = vmul.f32 %v481, %v488
  %v497 = vmul.f32 %v478, %v489
  %v498 = vmul.f32 %v482, %v490
  %v499 = vadd.f32 %v450, %v491
  %v500 = vadd.f32 %v451, %v492
  %v501 = vadd.f32 %v452, %v493
  %v502 = vadd.f32 %v453, %v494
  %v503 = vadd.f32 %v454, %v495
  %v504 = vadd.f32 %v455, %v496
  %v505 = vadd.f32 %v456, %v497
  %v506 = vadd.f32 %v457, %v498
  %507 = vrot.lane.b32.xlu0 %v165, 120
  %v508 = vpop.permute.xlu0 %507
  %509 = vrot.lane.b32.xlu0 %v171, 120
  %v510 = vpop.permute.xlu0 %509
  %511 = vrot.lane.b32.xlu0 %v177, 120
  %v512 = vpop.permute.xlu0 %511
  %513 = vrot.lane.b32.xlu0 %v183, 120
  %v514 = vpop.permute.xlu0 %513
  %515 = vrot.lane.b32.xlu0 %v167, 120
  %v516 = vpop.permute.xlu0 %515
  %517 = vrot.lane.b32.xlu0 %v173, 120
  %v518 = vpop.permute.xlu0 %517
  %519 = vrot.lane.b32.xlu0 %v179, 120
  %v520 = vpop.permute.xlu0 %519
  %521 = vrot.lane.b32.xlu0 %v185, 120
  %v522 = vpop.permute.xlu0 %521
  %vm523 = vcmp.lt.s32.totalorder %v204, 120
  %v524 = vsel %vm523, %v508, %v516
  %v525 = vsel %vm523, %v510, %v518
  %v526 = vsel %vm523, %v512, %v520
  %v527 = vsel %vm523, %v514, %v522
  %v528 = vsel %vm523, %v516, %v508
  %v529 = vsel %vm523, %v518, %v510
  %v530 = vsel %vm523, %v520, %v512
  %v531 = vsel %vm523, %v522, %v514
  %v532 = vld [vmem:[%s2 + $0x70] sm:$0xff]
  %v533 = vld [vmem:[%s2 + $0x78] sm:$0xff]
  %v534 = vld [vmem:[%s2 + $0x2d8] sm:$0xff]
  %v535 = vld [vmem:[%s2 + $0x2e0] sm:$0xff]
  %v536 = vld [vmem:[%s2 + $0x540] sm:$0xff]
  %v537 = vld [vmem:[%s2 + $0x548] sm:$0xff]
  %v538 = vld [vmem:[%s2 + $0x7a8] sm:$0xff]
  %v539 = vld [vmem:[%s2 + $0x7b0] sm:$0xff]
  %v540 = vmul.f32 %v524, %v532
  %v541 = vmul.f32 %v528, %v533
  %v542 = vmul.f32 %v525, %v534
  %v543 = vmul.f32 %v529, %v535
  %v544 = vmul.f32 %v526, %v536
  %v545 = vmul.f32 %v530, %v537
  %v546 = vmul.f32 %v527, %v538
  %v547 = vmul.f32 %v531, %v539
  %v548 = vadd.f32 %v499, %v540
  %v549 = vadd.f32 %v500, %v541
  %v550 = vadd.f32 %v501, %v542
  %v551 = vadd.f32 %v502, %v543
  %v552 = vadd.f32 %v503, %v544
  %v553 = vadd.f32 %v504, %v545
  %v554 = vadd.f32 %v505, %v546
  %v555 = vadd.f32 %v506, %v547
  %556 = vrot.lane.b32.xlu0 %v165, 119
  %v557 = vpop.permute.xlu0 %556
  %558 = vrot.lane.b32.xlu0 %v171, 119
  %v559 = vpop.permute.xlu0 %558
  %560 = vrot.lane.b32.xlu0 %v177, 119
  %v561 = vpop.permute.xlu0 %560
  %562 = vrot.lane.b32.xlu0 %v183, 119
  %v563 = vpop.permute.xlu0 %562
  %564 = vrot.lane.b32.xlu0 %v167, 119
  %v565 = vpop.permute.xlu0 %564
  %566 = vrot.lane.b32.xlu0 %v173, 119
  %v567 = vpop.permute.xlu0 %566
  %568 = vrot.lane.b32.xlu0 %v179, 119
  %v569 = vpop.permute.xlu0 %568
  %570 = vrot.lane.b32.xlu0 %v185, 119
  %v571 = vpop.permute.xlu0 %570
  %vm572 = vcmp.lt.s32.totalorder %v204, 119
  %v573 = vsel %vm572, %v557, %v565
  %v574 = vsel %vm572, %v559, %v567
  %v575 = vsel %vm572, %v561, %v569
  %v576 = vsel %vm572, %v563, %v571
  %v577 = vsel %vm572, %v565, %v557
  %v578 = vsel %vm572, %v567, %v559
  %v579 = vsel %vm572, %v569, %v561
  %v580 = vsel %vm572, %v571, %v563
  %v581 = vld [vmem:[%s2 + $0x80] sm:$0xff]
  %v582 = vld [vmem:[%s2 + $0x88] sm:$0xff]
  %v583 = vld [vmem:[%s2 + $0x2e8] sm:$0xff]
  %v584 = vld [vmem:[%s2 + $0x2f0] sm:$0xff]
  %v585 = vld [vmem:[%s2 + $0x550] sm:$0xff]
  %v586 = vld [vmem:[%s2 + $0x558] sm:$0xff]
  %v587 = vld [vmem:[%s2 + $0x7b8] sm:$0xff]
  %v588 = vld [vmem:[%s2 + $0x7c0] sm:$0xff]
  %v589 = vmul.f32 %v573, %v581
  %v590 = vmul.f32 %v577, %v582
  %v591 = vmul.f32 %v574, %v583
  %v592 = vmul.f32 %v578, %v584
  %v593 = vmul.f32 %v575, %v585
  %v594 = vmul.f32 %v579, %v586
  %v595 = vmul.f32 %v576, %v587
  %v596 = vmul.f32 %v580, %v588
  %v597 = vadd.f32 %v548, %v589
  %v598 = vadd.f32 %v549, %v590
  %v599 = vadd.f32 %v550, %v591
  %v600 = vadd.f32 %v551, %v592
  %v601 = vadd.f32 %v552, %v593
  %v602 = vadd.f32 %v553, %v594
  %v603 = vadd.f32 %v554, %v595
  %v604 = vadd.f32 %v555, %v596
  %609 = vrot.lane.b32.xlu0 %v597, 64
  %v610 = vpop.permute.xlu0 %609
  %611 = vrot.lane.b32.xlu0 %v599, 64
  %v612 = vpop.permute.xlu0 %611
  %613 = vrot.lane.b32.xlu0 %v601, 64
  %v614 = vpop.permute.xlu0 %613
  %615 = vrot.lane.b32.xlu0 %v603, 64
  %v616 = vpop.permute.xlu0 %615
  %v621 = vadd.f32 %v597, %v610
  %v622 = vadd.f32 %v599, %v612
  %v623 = vadd.f32 %v601, %v614
  %v624 = vadd.f32 %v603, %v616
  %v625 = vadd.f32 %v621, %v598
  %v626 = vadd.f32 %v622, %v600
  %v627 = vadd.f32 %v623, %v602
  %v628 = vadd.f32 %v624, %v604
  %633 = vrot.lane.b32.xlu0 %v598, 64
  %v634 = vpop.permute.xlu0 %633
  %635 = vrot.lane.b32.xlu0 %v600, 64
  %v636 = vpop.permute.xlu0 %635
  %637 = vrot.lane.b32.xlu0 %v602, 64
  %v638 = vpop.permute.xlu0 %637
  %639 = vrot.lane.b32.xlu0 %v604, 64
  %v640 = vpop.permute.xlu0 %639
  %v645 = vadd.f32 %v625, %v634
  %v646 = vadd.f32 %v626, %v636
  %v647 = vadd.f32 %v627, %v638
  %v648 = vadd.f32 %v628, %v640
  %v649 = vld [vmem:[%s6] sm:$0xff]
  %v650 = vld [vmem:[%s6 + $0x8] sm:$0xff]
  %v651 = vld [vmem:[%s6 + $0x10] sm:$0xff]
  %v652 = vld [vmem:[%s6 + $0x18] sm:$0xff]
  %654 = vset.pattern.permute.xlu0 0
  %655 = vperm.xlu0 %654, %v649
  %v656 = vpop.permute.xlu0 %655
  %659 = vset.pattern.permute.xlu0 0
  %660 = vperm.xlu0 %659, %v650
  %v661 = vpop.permute.xlu0 %660
  %664 = vset.pattern.permute.xlu0 0
  %665 = vperm.xlu0 %664, %v651
  %v666 = vpop.permute.xlu0 %665
  %669 = vset.pattern.permute.xlu0 0
  %670 = vperm.xlu0 %669, %v652
  %v671 = vpop.permute.xlu0 %670
  %v673 = vadd.f32 %v645, %v656
  %v674 = vadd.f32 %v646, %v661
  %v675 = vadd.f32 %v647, %v666
  %v676 = vadd.f32 %v648, %v671
  %v677 = vld [vmem:[%s4] sm:$0xff]
  %v678 = vld [vmem:[%s4 + $0x8] sm:$0xff]
  %v679 = vld [vmem:[%s4 + $0x10] sm:$0xff]
  %v680 = vld [vmem:[%s4 + $0x18] sm:$0xff]
  %v681 = vld [vmem:[%s4 + $0x20] sm:$0xff]
  %v682 = vld [vmem:[%s4 + $0x28] sm:$0xff]
  %v683 = vld [vmem:[%s4 + $0x30] sm:$0xff]
  %v684 = vld [vmem:[%s4 + $0x38] sm:$0xff]
  %v685 = vld [vmem:[%s6] sm:$0xff]
  %v686 = vld [vmem:[%s6 + $0x8] sm:$0xff]
  %v687 = vld [vmem:[%s6 + $0x10] sm:$0xff]
  %v688 = vld [vmem:[%s6 + $0x18] sm:$0xff]
  %v689 = vld [vmem:[%s6 + $0x20] sm:$0xff]
  %v690 = vld [vmem:[%s6 + $0x28] sm:$0xff]
  %v691 = vld [vmem:[%s6 + $0x30] sm:$0xff]
  %v692 = vld [vmem:[%s6 + $0x38] sm:$0xff]
  %694 = vset.pattern.permute.xlu0 1
  %695 = vperm.xlu0 %694, %v685
  %v696 = vpop.permute.xlu0 %695
  %699 = vset.pattern.permute.xlu0 1
  %700 = vperm.xlu0 %699, %v686
  %v701 = vpop.permute.xlu0 %700
  %704 = vset.pattern.permute.xlu0 1
  %705 = vperm.xlu0 %704, %v687
  %v706 = vpop.permute.xlu0 %705
  %709 = vset.pattern.permute.xlu0 1
  %710 = vperm.xlu0 %709, %v688
  %v711 = vpop.permute.xlu0 %710
  %714 = vset.pattern.permute.xlu0 1
  %715 = vperm.xlu0 %714, %v689
  %v716 = vpop.permute.xlu0 %715
  %719 = vset.pattern.permute.xlu0 1
  %720 = vperm.xlu0 %719, %v690
  %v721 = vpop.permute.xlu0 %720
  %724 = vset.pattern.permute.xlu0 1
  %725 = vperm.xlu0 %724, %v691
  %v726 = vpop.permute.xlu0 %725
  %729 = vset.pattern.permute.xlu0 1
  %730 = vperm.xlu0 %729, %v692
  %v731 = vpop.permute.xlu0 %730
  %vm733 = vcmask 261120
  %v735 = vsel %vm733, %v677, 0
  %v738 = vsel %vm733, %v678, 0
  %v741 = vsel %vm733, %v679, 0
  %v744 = vsel %vm733, %v680, 0
  %v747 = vsel %vm733, %v681, 0
  %v750 = vsel %vm733, %v682, 0
  %v753 = vsel %vm733, %v683, 0
  %v756 = vsel %vm733, %v684, 0
  %758 = vmatprep.subr.mxu0 0.0
  %759 = vmatpush1.msra.mxu0 %v673
  %760 = vmatprep.subr.mxu0 0.0
  %761 = vmatpush1.msra.mxu0 %v674
  %762 = vmatprep.subr.mxu0 0.0
  %763 = vmatpush1.msra.mxu0 %v675
  %764 = vmatprep.subr.mxu0 0.0
  %765 = vmatpush1.msra.mxu0 %v676
  %766 = vmatprep.subr.mxu0 0.0
  %767 = vmatpush1.msra.mxu0 0.0
  %768 = vmatprep.subr.mxu0 0.0
  %769 = vmatpush1.msra.mxu0 0.0
  %770 = vmatprep.subr.mxu0 0.0
  %771 = vmatpush1.msra.mxu0 0.0
  %772 = vmatprep.subr.mxu0 0.0
  %773 = vmatpush1.msra.mxu0 0.0
  %774 = vmatprep.subr.mxu0 0.0
  %775 = vmatpush1.msra.mxu0 0.0
  %776 = vmatprep.subr.mxu0 0.0
  %777 = vmatpush1.msra.mxu0 0.0
  %778 = vmatprep.subr.mxu0 0.0
  %779 = vmatpush1.msra.mxu0 0.0
  %780 = vmatprep.subr.mxu0 0.0
  %781 = vmatpush1.msra.mxu0 0.0
  %782 = vmatprep.subr.mxu0 0.0
  %783 = vmatpush1.msra.mxu0 0.0
  %784 = vmatprep.subr.mxu0 0.0
  %785 = vmatpush1.msra.mxu0 0.0
  %786 = vmatprep.subr.mxu0 0.0
  %787 = vmatpush1.msra.mxu0 0.0
  %788 = vmatprep.subr.mxu0 0.0
  %789 = vmatpush1.msra.mxu0 0.0
  %790 = vmatprep.subr.mxu0 0.0
  %791 = vmatpush1.msra.mxu0 0.0
  %792 = vmatprep.subr.mxu0 0.0
  %793 = vmatpush1.msra.mxu0 0.0
  %794 = vmatprep.subr.mxu0 0.0
  %795 = vmatpush1.msra.mxu0 0.0
  %796 = vmatprep.subr.mxu0 0.0
  %797 = vmatpush1.msra.mxu0 0.0
  %798 = vmatprep.subr.mxu0 0.0
  %799 = vmatpush1.msra.mxu0 0.0
  %800 = vmatprep.subr.mxu0 0.0
  %801 = vmatpush1.msra.mxu0 0.0
  %802 = vmatprep.subr.mxu0 0.0
  %803 = vmatpush1.msra.mxu0 0.0
  %804 = vmatprep.subr.mxu0 0.0
  %805 = vmatpush1.msra.mxu0 0.0
  %806 = vmatprep.subr.mxu0 0.0
  %807 = vmatpush1.msra.mxu0 0.0
  %808 = vmatprep.subr.mxu0 0.0
  %809 = vmatpush1.msra.mxu0 0.0
  %810 = vmatprep.subr.mxu0 0.0
  %811 = vmatpush1.msra.mxu0 0.0
  %812 = vmatprep.subr.mxu0 0.0
  %813 = vmatpush1.msra.mxu0 0.0
  %814 = vmatprep.subr.mxu0 0.0
  %815 = vmatpush1.msra.mxu0 0.0
  %816 = vmatprep.subr.mxu0 0.0
  %817 = vmatpush1.msra.mxu0 0.0
  %818 = vmatprep.subr.mxu0 0.0
  %819 = vmatpush1.msra.mxu0 0.0
  %820 = vmatprep.subr.mxu0 0.0
  %821 = vmatpush1.msra.mxu0 0.0
  %822 = vmatprep.mubr.f32.mxu0 0.0
  %823 = vmatmul.mubr.f32.gmra.mrb[0].mxu0 %v735
  %v824 = vpop.f32.mrb[0].mxu0
  %v825 = vadd.f32 %v696, %v824
  %v826 = vpop.f32.mrb[0].mxu0
  %827 = vmatprep.mubr.f32.mxu0 0.0
  %828 = vmatmul.mubr.f32.gmra.mrb[0].mxu0 %v738
  %v829 = vpop.f32.mrb[0].mxu0
  %v830 = vadd.f32 %v701, %v829
  %v831 = vpop.f32.mrb[0].mxu0
  %832 = vmatprep.mubr.f32.mxu0 0.0
  %833 = vmatmul.mubr.f32.gmra.mrb[0].mxu0 %v741
  %v834 = vpop.f32.mrb[0].mxu0
  %v835 = vadd.f32 %v706, %v834
  %v836 = vpop.f32.mrb[0].mxu0
  %837 = vmatprep.mubr.f32.mxu0 0.0
  %838 = vmatmul.mubr.f32.gmra.mrb[0].mxu0 %v744
  %v839 = vpop.f32.mrb[0].mxu0
  %v840 = vadd.f32 %v711, %v839
  %v841 = vpop.f32.mrb[0].mxu0
  %842 = vmatprep.mubr.f32.mxu0 0.0
  %843 = vmatmul.mubr.f32.gmra.mrb[0].mxu0 %v747
  %v844 = vpop.f32.mrb[0].mxu0
  %v845 = vadd.f32 %v716, %v844
  %v846 = vpop.f32.mrb[0].mxu0
  %847 = vmatprep.mubr.f32.mxu0 0.0
  %848 = vmatmul.mubr.f32.gmra.mrb[0].mxu0 %v750
  %v849 = vpop.f32.mrb[0].mxu0
  %v850 = vadd.f32 %v721, %v849
  %v851 = vpop.f32.mrb[0].mxu0
  %852 = vmatprep.mubr.f32.mxu0 0.0
  %853 = vmatmul.mubr.f32.gmra.mrb[0].mxu0 %v753
  %v854 = vpop.f32.mrb[0].mxu0
  %v855 = vadd.f32 %v726, %v854
  %v856 = vpop.f32.mrb[0].mxu0
  %857 = vmatprep.mubr.f32.mxu0 0.0
  %858 = vmatmul.mubr.f32.gmra.mrb[0].mxu0 %v756
  %v859 = vpop.f32.mrb[0].mxu0
  %v860 = vadd.f32 %v731, %v859
  %v861 = vpop.f32.mrb[0].mxu0
  %862 = vdwg.mxu0
  %vm863 = vcmp.gt.f32.partialorder %v825, 0.0
  %vm864 = vcmp.gt.f32.partialorder %v830, 0.0
  %vm865 = vcmp.gt.f32.partialorder %v835, 0.0
  %vm866 = vcmp.gt.f32.partialorder %v840, 0.0
  %vm867 = vcmp.gt.f32.partialorder %v845, 0.0
  %vm868 = vcmp.gt.f32.partialorder %v850, 0.0
  %vm869 = vcmp.gt.f32.partialorder %v855, 0.0
  %vm870 = vcmp.gt.f32.partialorder %v860, 0.0
  %v871 = vadd.f32 %v825, 1.0
  %v872 = vadd.f32 %v830, 1.0
  %v873 = vadd.f32 %v835, 1.0
  %v874 = vadd.f32 %v840, 1.0
  %v875 = vadd.f32 %v845, 1.0
  %v876 = vadd.f32 %v850, 1.0
  %v877 = vadd.f32 %v855, 1.0
  %v878 = vadd.f32 %v860, 1.0
  %v879 = vmul.f32 %v825, 1.442695
  %v880 = vpow.pop %v879
  %v881 = vmul.f32 %v830, 1.442695
  %v882 = vpow.pop %v881
  %v883 = vmul.f32 %v835, 1.442695
  %v884 = vpow.pop %v883
  %v885 = vmul.f32 %v840, 1.442695
  %v886 = vpow.pop %v885
  %v887 = vmul.f32 %v845, 1.442695
  %v888 = vpow.pop %v887
  %v889 = vmul.f32 %v850, 1.442695
  %v890 = vpow.pop %v889
  %v891 = vmul.f32 %v855, 1.442695
  %v892 = vpow.pop %v891
  %v893 = vmul.f32 %v860, 1.442695
  %v894 = vpow.pop %v893
  %v895 = vsel %vm863, %v871, %v880
  %v896 = vsel %vm864, %v872, %v882
  %v897 = vsel %vm865, %v873, %v884
  %v898 = vsel %vm866, %v874, %v886
  %v899 = vsel %vm867, %v875, %v888
  %v900 = vsel %vm868, %v876, %v890
  %v901 = vsel %vm869, %v877, %v892
  %v902 = vsel %vm870, %v878, %v894
  %v903 = vld [vmem:[%s5] sm:$0xff]
  %v904 = vld [vmem:[%s5 + $0x8] sm:$0xff]
  %v905 = vld [vmem:[%s5 + $0x10] sm:$0xff]
  %v906 = vld [vmem:[%s5 + $0x18] sm:$0xff]
  %vm907 = vcmask 523264
  %v909 = vsel %vm907, %v673, 0
  %v912 = vsel %vm907, %v674, 0
  %v915 = vsel %vm907, %v675, 0
  %v918 = vsel %vm907, %v676, 0
  %v921 = vsel %vm907, %v899, 0
  %v924 = vsel %vm907, %v900, 0
  %v927 = vsel %vm907, %v901, 0
  %v930 = vsel %vm907, %v902, 0
  %932 = vmatprep.subr.mxu0 0.0
  %933 = vmatpush1.xpose.msra.mxu0 %v921
  %934 = vmatprep.subr.mxu0 0.0
  %935 = vmatpush1.xpose.msra.mxu0 %v924
  %936 = vmatprep.subr.mxu0 0.0
  %937 = vmatpush1.xpose.msra.mxu0 %v927
  %938 = vmatprep.subr.mxu0 0.0
  %939 = vmatpush1.xpose.msra.mxu0 %v930
  %940 = vmatprep.subr.mxu0 0.0
  %941 = vmatpush1.xpose.msra.mxu0 0.0
  %942 = vmatprep.subr.mxu0 0.0
  %943 = vmatpush1.xpose.msra.mxu0 0.0
  %944 = vmatprep.subr.mxu0 0.0
  %945 = vmatpush1.xpose.msra.mxu0 0.0
  %946 = vmatprep.subr.mxu0 0.0
  %947 = vmatpush1.xpose.msra.mxu0 0.0
  %948 = vmatprep.subr.mxu0 0.0
  %949 = vmatpush1.xpose.msra.mxu0 0.0
  %950 = vmatprep.subr.mxu0 0.0
  %951 = vmatpush1.xpose.msra.mxu0 0.0
  %952 = vmatprep.subr.mxu0 0.0
  %953 = vmatpush1.xpose.msra.mxu0 0.0
  %954 = vmatprep.subr.mxu0 0.0
  %955 = vmatpush1.xpose.msra.mxu0 0.0
  %956 = vmatprep.subr.mxu0 0.0
  %957 = vmatpush1.xpose.msra.mxu0 0.0
  %958 = vmatprep.subr.mxu0 0.0
  %959 = vmatpush1.xpose.msra.mxu0 0.0
  %960 = vmatprep.subr.mxu0 0.0
  %961 = vmatpush1.xpose.msra.mxu0 0.0
  %962 = vmatprep.subr.mxu0 0.0
  %963 = vmatpush1.xpose.msra.mxu0 0.0
  %964 = vmatprep.subr.mxu0 0.0
  %965 = vmatpush1.xpose.msra.mxu0 0.0
  %966 = vmatprep.subr.mxu0 0.0
  %967 = vmatpush1.xpose.msra.mxu0 0.0
  %968 = vmatprep.subr.mxu0 0.0
  %969 = vmatpush1.xpose.msra.mxu0 0.0
  %970 = vmatprep.subr.mxu0 0.0
  %971 = vmatpush1.xpose.msra.mxu0 0.0
  %972 = vmatprep.subr.mxu0 0.0
  %973 = vmatpush1.xpose.msra.mxu0 0.0
  %974 = vmatprep.subr.mxu0 0.0
  %975 = vmatpush1.xpose.msra.mxu0 0.0
  %976 = vmatprep.subr.mxu0 0.0
  %977 = vmatpush1.xpose.msra.mxu0 0.0
  %978 = vmatprep.subr.mxu0 0.0
  %979 = vmatpush1.xpose.msra.mxu0 0.0
  %980 = vmatprep.subr.mxu0 0.0
  %981 = vmatpush1.xpose.msra.mxu0 0.0
  %982 = vmatprep.subr.mxu0 0.0
  %983 = vmatpush1.xpose.msra.mxu0 0.0
  %984 = vmatprep.subr.mxu0 0.0
  %985 = vmatpush1.xpose.msra.mxu0 0.0
  %986 = vmatprep.subr.mxu0 0.0
  %987 = vmatpush1.xpose.msra.mxu0 0.0
  %988 = vmatprep.subr.mxu0 0.0
  %989 = vmatpush1.xpose.msra.mxu0 0.0
  %990 = vmatprep.subr.mxu0 0.0
  %991 = vmatpush1.xpose.msra.mxu0 0.0
  %992 = vmatprep.subr.mxu0 0.0
  %993 = vmatpush1.xpose.msra.mxu0 0.0
  %994 = vmatprep.subr.mxu0 0.0
  %995 = vmatpush1.xpose.msra.mxu0 0.0
  %996 = vmatprep.mubr.f32.mxu0 0.0
  %997 = vmatmul.mubr.f32.gmra.mrb[0].mxu0 %v909
  %v998 = vpop.f32.mrb[0].mxu0
  %v999 = vadd.f32 0.0, %v998
  %v1000 = vpop.f32.mrb[0].mxu0
  %1001 = vmatprep.mubr.f32.mxu0 0.0
  %1002 = vmatmul.mubr.f32.gmra.mrb[0].mxu0 %v912
  %v1003 = vpop.f32.mrb[0].mxu0
  %v1004 = vadd.f32 0.0, %v1003
  %v1005 = vpop.f32.mrb[0].mxu0
  %1006 = vmatprep.mubr.f32.mxu0 0.0
  %1007 = vmatmul.mubr.f32.gmra.mrb[0].mxu0 %v915
  %v1008 = vpop.f32.mrb[0].mxu0
  %v1009 = vadd.f32 0.0, %v1008
  %v1010 = vpop.f32.mrb[0].mxu0
  %1011 = vmatprep.mubr.f32.mxu0 0.0
  %1012 = vmatmul.mubr.f32.gmra.mrb[0].mxu0 %v918
  %v1013 = vpop.f32.mrb[0].mxu0
  %v1014 = vadd.f32 0.0, %v1013
  %v1015 = vpop.f32.mrb[0].mxu0
  %1016 = vdwg.mxu0
  %v1017 = vmul.f32 %v999, %v903
  %v1018 = vmul.f32 %v1004, %v904
  %v1019 = vmul.f32 %v1009, %v905
  %v1020 = vmul.f32 %v1014, %v906
  %v1021 = vmul.f32 %v1017, 0.015625
  %v1022 = vmul.f32 %v1018, 0.015625
  %v1023 = vmul.f32 %v1019, 0.015625
  %v1024 = vmul.f32 %v1020, 0.015625
  %v1026 = vsel %vm733, %v1021, 0
  %v1029 = vsel %vm733, %v1022, 0
  %v1032 = vsel %vm733, %v1023, 0
  %v1035 = vsel %vm733, %v1024, 0
  %1037 = vmatprep.subr.mxu0 0.0
  %1038 = vmatpush1.msra.mxu0 %v895
  %1039 = vmatprep.subr.mxu0 0.0
  %1040 = vmatpush1.msra.mxu0 %v896
  %1041 = vmatprep.subr.mxu0 0.0
  %1042 = vmatpush1.msra.mxu0 %v897
  %1043 = vmatprep.subr.mxu0 0.0
  %1044 = vmatpush1.msra.mxu0 %v898
  %1045 = vmatprep.subr.mxu0 0.0
  %1046 = vmatpush1.msra.mxu0 0.0
  %1047 = vmatprep.subr.mxu0 0.0
  %1048 = vmatpush1.msra.mxu0 0.0
  %1049 = vmatprep.subr.mxu0 0.0
  %1050 = vmatpush1.msra.mxu0 0.0
  %1051 = vmatprep.subr.mxu0 0.0
  %1052 = vmatpush1.msra.mxu0 0.0
  %1053 = vmatprep.subr.mxu0 0.0
  %1054 = vmatpush1.msra.mxu0 0.0
  %1055 = vmatprep.subr.mxu0 0.0
  %1056 = vmatpush1.msra.mxu0 0.0
  %1057 = vmatprep.subr.mxu0 0.0
  %1058 = vmatpush1.msra.mxu0 0.0
  %1059 = vmatprep.subr.mxu0 0.0
  %1060 = vmatpush1.msra.mxu0 0.0
  %1061 = vmatprep.subr.mxu0 0.0
  %1062 = vmatpush1.msra.mxu0 0.0
  %1063 = vmatprep.subr.mxu0 0.0
  %1064 = vmatpush1.msra.mxu0 0.0
  %1065 = vmatprep.subr.mxu0 0.0
  %1066 = vmatpush1.msra.mxu0 0.0
  %1067 = vmatprep.subr.mxu0 0.0
  %1068 = vmatpush1.msra.mxu0 0.0
  %1069 = vmatprep.subr.mxu0 0.0
  %1070 = vmatpush1.msra.mxu0 0.0
  %1071 = vmatprep.subr.mxu0 0.0
  %1072 = vmatpush1.msra.mxu0 0.0
  %1073 = vmatprep.subr.mxu0 0.0
  %1074 = vmatpush1.msra.mxu0 0.0
  %1075 = vmatprep.subr.mxu0 0.0
  %1076 = vmatpush1.msra.mxu0 0.0
  %1077 = vmatprep.subr.mxu0 0.0
  %1078 = vmatpush1.msra.mxu0 0.0
  %1079 = vmatprep.subr.mxu0 0.0
  %1080 = vmatpush1.msra.mxu0 0.0
  %1081 = vmatprep.subr.mxu0 0.0
  %1082 = vmatpush1.msra.mxu0 0.0
  %1083 = vmatprep.subr.mxu0 0.0
  %1084 = vmatpush1.msra.mxu0 0.0
  %1085 = vmatprep.subr.mxu0 0.0
  %1086 = vmatpush1.msra.mxu0 0.0
  %1087 = vmatprep.subr.mxu0 0.0
  %1088 = vmatpush1.msra.mxu0 0.0
  %1089 = vmatprep.subr.mxu0 0.0
  %1090 = vmatpush1.msra.mxu0 0.0
  %1091 = vmatprep.subr.mxu0 0.0
  %1092 = vmatpush1.msra.mxu0 0.0
  %1093 = vmatprep.subr.mxu0 0.0
  %1094 = vmatpush1.msra.mxu0 0.0
  %1095 = vmatprep.subr.mxu0 0.0
  %1096 = vmatpush1.msra.mxu0 0.0
  %1097 = vmatprep.subr.mxu0 0.0
  %1098 = vmatpush1.msra.mxu0 0.0
  %1099 = vmatprep.subr.mxu0 0.0
  %1100 = vmatpush1.msra.mxu0 0.0
  %1101 = vmatprep.mubr.f32.mxu0 0.0
  %1102 = vmatmul.mubr.f32.gmra.mrb[0].mxu0 %v1026
  %v1103 = vpop.f32.mrb[0].mxu0
  %v1104 = vadd.f32 0.0, %v1103
  %v1105 = vpop.f32.mrb[0].mxu0
  %1106 = vmatprep.mubr.f32.mxu0 0.0
  %1107 = vmatmul.mubr.f32.gmra.mrb[0].mxu0 %v1029
  %v1108 = vpop.f32.mrb[0].mxu0
  %v1109 = vadd.f32 0.0, %v1108
  %v1110 = vpop.f32.mrb[0].mxu0
  %1111 = vmatprep.mubr.f32.mxu0 0.0
  %1112 = vmatmul.mubr.f32.gmra.mrb[0].mxu0 %v1032
  %v1113 = vpop.f32.mrb[0].mxu0
  %v1114 = vadd.f32 0.0, %v1113
  %v1115 = vpop.f32.mrb[0].mxu0
  %1116 = vmatprep.mubr.f32.mxu0 0.0
  %1117 = vmatmul.mubr.f32.gmra.mrb[0].mxu0 %v1035
  %v1118 = vpop.f32.mrb[0].mxu0
  %v1119 = vadd.f32 0.0, %v1118
  %v1120 = vpop.f32.mrb[0].mxu0
  %1121 = vdwg.mxu0
  %v1122 = vsel %vm907, %v899, 0.0
  %1123 = vadd.xlane.f32.xlu0 %v1122
  %v1124 = vpop.xlane.xlu0 %1123
  %v1125 = vsel %vm907, %v900, 0.0
  %1126 = vadd.xlane.f32.xlu0 %v1125
  %v1127 = vpop.xlane.xlu0 %1126
  %v1128 = vsel %vm907, %v901, 0.0
  %1129 = vadd.xlane.f32.xlu0 %v1128
  %v1130 = vpop.xlane.xlu0 %1129
  %v1131 = vsel %vm907, %v902, 0.0
  %1132 = vadd.xlane.f32.xlu0 %v1131
  %v1133 = vpop.xlane.xlu0 %1132
  %v1134 = vrcp.pop 64.0
  %v1135 = vmul.f32 %v1124, %v1134
  %v1136 = vmul.f32 %v1127, %v1134
  %v1137 = vmul.f32 %v1130, %v1134
  %v1138 = vmul.f32 %v1133, %v1134
  %v1139 = vmul.f32 %v895, %v1135
  %v1140 = vmul.f32 %v896, %v1136
  %v1141 = vmul.f32 %v897, %v1137
  %v1142 = vmul.f32 %v898, %v1138
  %v1144 = vsel %vm733, %v903, 0
  %v1147 = vsel %vm733, %v904, 0
  %v1150 = vsel %vm733, %v905, 0
  %v1153 = vsel %vm733, %v906, 0
  %1155 = vmatprep.subr.mxu0 0.0
  %1156 = vmatpush1.msra.mxu0 %v1139
  %1157 = vmatprep.subr.mxu0 0.0
  %1158 = vmatpush1.msra.mxu0 %v1140
  %1159 = vmatprep.subr.mxu0 0.0
  %1160 = vmatpush1.msra.mxu0 %v1141
  %1161 = vmatprep.subr.mxu0 0.0
  %1162 = vmatpush1.msra.mxu0 %v1142
  %1163 = vmatprep.subr.mxu0 0.0
  %1164 = vmatpush1.msra.mxu0 0.0
  %1165 = vmatprep.subr.mxu0 0.0
  %1166 = vmatpush1.msra.mxu0 0.0
  %1167 = vmatprep.subr.mxu0 0.0
  %1168 = vmatpush1.msra.mxu0 0.0
  %1169 = vmatprep.subr.mxu0 0.0
  %1170 = vmatpush1.msra.mxu0 0.0
  %1171 = vmatprep.subr.mxu0 0.0
  %1172 = vmatpush1.msra.mxu0 0.0
  %1173 = vmatprep.subr.mxu0 0.0
  %1174 = vmatpush1.msra.mxu0 0.0
  %1175 = vmatprep.subr.mxu0 0.0
  %1176 = vmatpush1.msra.mxu0 0.0
  %1177 = vmatprep.subr.mxu0 0.0
  %1178 = vmatpush1.msra.mxu0 0.0
  %1179 = vmatprep.subr.mxu0 0.0
  %1180 = vmatpush1.msra.mxu0 0.0
  %1181 = vmatprep.subr.mxu0 0.0
  %1182 = vmatpush1.msra.mxu0 0.0
  %1183 = vmatprep.subr.mxu0 0.0
  %1184 = vmatpush1.msra.mxu0 0.0
  %1185 = vmatprep.subr.mxu0 0.0
  %1186 = vmatpush1.msra.mxu0 0.0
  %1187 = vmatprep.subr.mxu0 0.0
  %1188 = vmatpush1.msra.mxu0 0.0
  %1189 = vmatprep.subr.mxu0 0.0
  %1190 = vmatpush1.msra.mxu0 0.0
  %1191 = vmatprep.subr.mxu0 0.0
  %1192 = vmatpush1.msra.mxu0 0.0
  %1193 = vmatprep.subr.mxu0 0.0
  %1194 = vmatpush1.msra.mxu0 0.0
  %1195 = vmatprep.subr.mxu0 0.0
  %1196 = vmatpush1.msra.mxu0 0.0
  %1197 = vmatprep.subr.mxu0 0.0
  %1198 = vmatpush1.msra.mxu0 0.0
  %1199 = vmatprep.subr.mxu0 0.0
  %1200 = vmatpush1.msra.mxu0 0.0
  %1201 = vmatprep.subr.mxu0 0.0
  %1202 = vmatpush1.msra.mxu0 0.0
  %1203 = vmatprep.subr.mxu0 0.0
  %1204 = vmatpush1.msra.mxu0 0.0
  %1205 = vmatprep.subr.mxu0 0.0
  %1206 = vmatpush1.msra.mxu0 0.0
  %1207 = vmatprep.subr.mxu0 0.0
  %1208 = vmatpush1.msra.mxu0 0.0
  %1209 = vmatprep.subr.mxu0 0.0
  %1210 = vmatpush1.msra.mxu0 0.0
  %1211 = vmatprep.subr.mxu0 0.0
  %1212 = vmatpush1.msra.mxu0 0.0
  %1213 = vmatprep.subr.mxu0 0.0
  %1214 = vmatpush1.msra.mxu0 0.0
  %1215 = vmatprep.subr.mxu0 0.0
  %1216 = vmatpush1.msra.mxu0 0.0
  %1217 = vmatprep.subr.mxu0 0.0
  %1218 = vmatpush1.msra.mxu0 0.0
  %1219 = vmatprep.mubr.f32.mxu0 0.0
  %1220 = vmatmul.mubr.f32.gmra.mrb[0].mxu0 %v1144
  %v1221 = vpop.f32.mrb[0].mxu0
  %v1222 = vadd.f32 1e-06, %v1221
  %v1223 = vpop.f32.mrb[0].mxu0
  %1224 = vmatprep.mubr.f32.mxu0 0.0
  %1225 = vmatmul.mubr.f32.gmra.mrb[0].mxu0 %v1147
  %v1226 = vpop.f32.mrb[0].mxu0
  %v1227 = vadd.f32 1e-06, %v1226
  %v1228 = vpop.f32.mrb[0].mxu0
  %1229 = vmatprep.mubr.f32.mxu0 0.0
  %1230 = vmatmul.mubr.f32.gmra.mrb[0].mxu0 %v1150
  %v1231 = vpop.f32.mrb[0].mxu0
  %v1232 = vadd.f32 1e-06, %v1231
  %v1233 = vpop.f32.mrb[0].mxu0
  %1234 = vmatprep.mubr.f32.mxu0 0.0
  %1235 = vmatmul.mubr.f32.gmra.mrb[0].mxu0 %v1153
  %v1236 = vpop.f32.mrb[0].mxu0
  %v1237 = vadd.f32 1e-06, %v1236
  %v1238 = vpop.f32.mrb[0].mxu0
  %1239 = vdwg.mxu0
  %v1240 = vrcp.pop %v1222
  %v1241 = vrcp.pop %v1227
  %v1242 = vrcp.pop %v1232
  %v1243 = vrcp.pop %v1237
  %v1244 = vmul.f32 %v1104, %v1240
  %v1245 = vmul.f32 %v1109, %v1241
  %v1246 = vmul.f32 %v1114, %v1242
  %v1247 = vmul.f32 %v1119, %v1243
  %vm1248 = vcmask 1048064
  %1249 = vrot.lane.b32.xlu0 %v673, 64
  %v1250 = vpop.permute.xlu0 %1249
  %v1251 = vsel %vm1248, %v1250, %v673
  %1252 = vrot.lane.b32.xlu0 %v674, 64
  %v1253 = vpop.permute.xlu0 %1252
  %v1254 = vsel %vm1248, %v1253, %v674
  %1255 = vrot.lane.b32.xlu0 %v675, 64
  %v1256 = vpop.permute.xlu0 %1255
  %v1257 = vsel %vm1248, %v1256, %v675
  %1258 = vrot.lane.b32.xlu0 %v676, 64
  %v1259 = vpop.permute.xlu0 %1258
  %v1260 = vsel %vm1248, %v1259, %v676
  %1261 = vrot.lane.b32.xlu0 %v1251, 64
  %v1262 = vpop.permute.xlu0 %1261
  %1263 = vrot.lane.b32.xlu0 %v1254, 64
  %v1264 = vpop.permute.xlu0 %1263
  %1265 = vrot.lane.b32.xlu0 %v1257, 64
  %v1266 = vpop.permute.xlu0 %1265
  %1267 = vrot.lane.b32.xlu0 %v1260, 64
  %v1268 = vpop.permute.xlu0 %1267
  %v1269 = vsel %vm1248, %v1262, %v673
  %v1270 = vsel %vm1248, %v1264, %v674
  %v1271 = vsel %vm1248, %v1266, %v675
  %v1272 = vsel %vm1248, %v1268, %v676
  %v1273 = vld [vmem:[%s2 + $0x220] sm:$0xff]
  %v1274 = vld [vmem:[%s2 + $0x488] sm:$0xff]
  %v1275 = vld [vmem:[%s2 + $0x6f0] sm:$0xff]
  %v1276 = vld [vmem:[%s2 + $0x958] sm:$0xff]
  %1281 = vrot.lane.b32.xlu0 %v1273, 55
  %v1282 = vpop.permute.xlu0 %1281
  %1283 = vrot.lane.b32.xlu0 %v1274, 55
  %v1284 = vpop.permute.xlu0 %1283
  %1285 = vrot.lane.b32.xlu0 %v1275, 55
  %v1286 = vpop.permute.xlu0 %1285
  %1287 = vrot.lane.b32.xlu0 %v1276, 55
  %v1288 = vpop.permute.xlu0 %1287
  %v1293 = vmul.f32 %v1269, %v1282
  %v1294 = vmul.f32 %v1270, %v1284
  %v1295 = vmul.f32 %v1271, %v1286
  %v1296 = vmul.f32 %v1272, %v1288
  %v1297 = vadd.f32 %v1293, 0.0
  %v1298 = vadd.f32 %v1294, 0.0
  %v1299 = vadd.f32 %v1295, 0.0
  %v1300 = vadd.f32 %v1296, 0.0
  %v1301 = vld [vmem:[%s2 + $0x228] sm:$0xff]
  %v1302 = vld [vmem:[%s2 + $0x490] sm:$0xff]
  %v1303 = vld [vmem:[%s2 + $0x6f8] sm:$0xff]
  %v1304 = vld [vmem:[%s2 + $0x960] sm:$0xff]
  %1309 = vrot.lane.b32.xlu0 %v1301, 56
  %v1310 = vpop.permute.xlu0 %1309
  %1311 = vrot.lane.b32.xlu0 %v1302, 56
  %v1312 = vpop.permute.xlu0 %1311
  %1313 = vrot.lane.b32.xlu0 %v1303, 56
  %v1314 = vpop.permute.xlu0 %1313
  %1315 = vrot.lane.b32.xlu0 %v1304, 56
  %v1316 = vpop.permute.xlu0 %1315
  %v1321 = vmul.f32 %v1269, %v1310
  %v1322 = vmul.f32 %v1270, %v1312
  %v1323 = vmul.f32 %v1271, %v1314
  %v1324 = vmul.f32 %v1272, %v1316
  %1329 = vrot.lane.b32.xlu0 %v1321, 127
  %v1330 = vpop.permute.xlu0 %1329
  %1331 = vrot.lane.b32.xlu0 %v1322, 127
  %v1332 = vpop.permute.xlu0 %1331
  %1333 = vrot.lane.b32.xlu0 %v1323, 127
  %v1334 = vpop.permute.xlu0 %1333
  %1335 = vrot.lane.b32.xlu0 %v1324, 127
  %v1336 = vpop.permute.xlu0 %1335
  %v1341 = vadd.f32 %v1297, %v1330
  %v1342 = vadd.f32 %v1298, %v1332
  %v1343 = vadd.f32 %v1299, %v1334
  %v1344 = vadd.f32 %v1300, %v1336
  %v1345 = vld [vmem:[%s2 + $0x230] sm:$0xff]
  %v1346 = vld [vmem:[%s2 + $0x498] sm:$0xff]
  %v1347 = vld [vmem:[%s2 + $0x700] sm:$0xff]
  %v1348 = vld [vmem:[%s2 + $0x968] sm:$0xff]
  %1353 = vrot.lane.b32.xlu0 %v1345, 57
  %v1354 = vpop.permute.xlu0 %1353
  %1355 = vrot.lane.b32.xlu0 %v1346, 57
  %v1356 = vpop.permute.xlu0 %1355
  %1357 = vrot.lane.b32.xlu0 %v1347, 57
  %v1358 = vpop.permute.xlu0 %1357
  %1359 = vrot.lane.b32.xlu0 %v1348, 57
  %v1360 = vpop.permute.xlu0 %1359
  %v1365 = vmul.f32 %v1269, %v1354
  %v1366 = vmul.f32 %v1270, %v1356
  %v1367 = vmul.f32 %v1271, %v1358
  %v1368 = vmul.f32 %v1272, %v1360
  %1373 = vrot.lane.b32.xlu0 %v1365, 126
  %v1374 = vpop.permute.xlu0 %1373
  %1375 = vrot.lane.b32.xlu0 %v1366, 126
  %v1376 = vpop.permute.xlu0 %1375
  %1377 = vrot.lane.b32.xlu0 %v1367, 126
  %v1378 = vpop.permute.xlu0 %1377
  %1379 = vrot.lane.b32.xlu0 %v1368, 126
  %v1380 = vpop.permute.xlu0 %1379
  %v1385 = vadd.f32 %v1341, %v1374
  %v1386 = vadd.f32 %v1342, %v1376
  %v1387 = vadd.f32 %v1343, %v1378
  %v1388 = vadd.f32 %v1344, %v1380
  %v1389 = vld [vmem:[%s2 + $0x238] sm:$0xff]
  %v1390 = vld [vmem:[%s2 + $0x4a0] sm:$0xff]
  %v1391 = vld [vmem:[%s2 + $0x708] sm:$0xff]
  %v1392 = vld [vmem:[%s2 + $0x970] sm:$0xff]
  %1397 = vrot.lane.b32.xlu0 %v1389, 63
  %v1398 = vpop.permute.xlu0 %1397
  %1399 = vrot.lane.b32.xlu0 %v1390, 63
  %v1400 = vpop.permute.xlu0 %1399
  %1401 = vrot.lane.b32.xlu0 %v1391, 63
  %v1402 = vpop.permute.xlu0 %1401
  %1403 = vrot.lane.b32.xlu0 %v1392, 63
  %v1404 = vpop.permute.xlu0 %1403
  %v1409 = vmul.f32 %v1269, %v1398
  %v1410 = vmul.f32 %v1270, %v1400
  %v1411 = vmul.f32 %v1271, %v1402
  %v1412 = vmul.f32 %v1272, %v1404
  %1417 = vrot.lane.b32.xlu0 %v1409, 120
  %v1418 = vpop.permute.xlu0 %1417
  %1419 = vrot.lane.b32.xlu0 %v1410, 120
  %v1420 = vpop.permute.xlu0 %1419
  %1421 = vrot.lane.b32.xlu0 %v1411, 120
  %v1422 = vpop.permute.xlu0 %1421
  %1423 = vrot.lane.b32.xlu0 %v1412, 120
  %v1424 = vpop.permute.xlu0 %1423
  %v1429 = vadd.f32 %v1385, %v1418
  %v1430 = vadd.f32 %v1386, %v1420
  %v1431 = vadd.f32 %v1387, %v1422
  %v1432 = vadd.f32 %v1388, %v1424
  %v1433 = vld [vmem:[%s2 + $0x240] sm:$0xff]
  %v1434 = vld [vmem:[%s2 + $0x4a8] sm:$0xff]
  %v1435 = vld [vmem:[%s2 + $0x710] sm:$0xff]
  %v1436 = vld [vmem:[%s2 + $0x978] sm:$0xff]
  %v1437 = vmul.f32 %v673, %v1433
  %v1438 = vmul.f32 %v674, %v1434
  %v1439 = vmul.f32 %v675, %v1435
  %v1440 = vmul.f32 %v676, %v1436
  %1445 = vrot.lane.b32.xlu0 %v1437, 55
  %v1446 = vpop.permute.xlu0 %1445
  %1447 = vrot.lane.b32.xlu0 %v1438, 55
  %v1448 = vpop.permute.xlu0 %1447
  %1449 = vrot.lane.b32.xlu0 %v1439, 55
  %v1450 = vpop.permute.xlu0 %1449
  %1451 = vrot.lane.b32.xlu0 %v1440, 55
  %v1452 = vpop.permute.xlu0 %1451
  %v1457 = vadd.f32 %v1429, %v1446
  %v1458 = vadd.f32 %v1430, %v1448
  %v1459 = vadd.f32 %v1431, %v1450
  %v1460 = vadd.f32 %v1432, %v1452
  %v1461 = vld [vmem:[%s2 + $0x248] sm:$0xff]
  %v1462 = vld [vmem:[%s2 + $0x4b0] sm:$0xff]
  %v1463 = vld [vmem:[%s2 + $0x718] sm:$0xff]
  %v1464 = vld [vmem:[%s2 + $0x980] sm:$0xff]
  %1469 = vrot.lane.b32.xlu0 %v1461, 1
  %v1470 = vpop.permute.xlu0 %1469
  %1471 = vrot.lane.b32.xlu0 %v1462, 1
  %v1472 = vpop.permute.xlu0 %1471
  %1473 = vrot.lane.b32.xlu0 %v1463, 1
  %v1474 = vpop.permute.xlu0 %1473
  %1475 = vrot.lane.b32.xlu0 %v1464, 1
  %v1476 = vpop.permute.xlu0 %1475
  %v1481 = vmul.f32 %v1269, %v1470
  %v1482 = vmul.f32 %v1270, %v1472
  %v1483 = vmul.f32 %v1271, %v1474
  %v1484 = vmul.f32 %v1272, %v1476
  %1489 = vrot.lane.b32.xlu0 %v1481, 54
  %v1490 = vpop.permute.xlu0 %1489
  %1491 = vrot.lane.b32.xlu0 %v1482, 54
  %v1492 = vpop.permute.xlu0 %1491
  %1493 = vrot.lane.b32.xlu0 %v1483, 54
  %v1494 = vpop.permute.xlu0 %1493
  %1495 = vrot.lane.b32.xlu0 %v1484, 54
  %v1496 = vpop.permute.xlu0 %1495
  %v1501 = vadd.f32 %v1457, %v1490
  %v1502 = vadd.f32 %v1458, %v1492
  %v1503 = vadd.f32 %v1459, %v1494
  %v1504 = vadd.f32 %v1460, %v1496
  %v1505 = vld [vmem:[%s2 + $0x250] sm:$0xff]
  %v1506 = vld [vmem:[%s2 + $0x4b8] sm:$0xff]
  %v1507 = vld [vmem:[%s2 + $0x720] sm:$0xff]
  %v1508 = vld [vmem:[%s2 + $0x988] sm:$0xff]
  %1513 = vrot.lane.b32.xlu0 %v1505, 7
  %v1514 = vpop.permute.xlu0 %1513
  %1515 = vrot.lane.b32.xlu0 %v1506, 7
  %v1516 = vpop.permute.xlu0 %1515
  %1517 = vrot.lane.b32.xlu0 %v1507, 7
  %v1518 = vpop.permute.xlu0 %1517
  %1519 = vrot.lane.b32.xlu0 %v1508, 7
  %v1520 = vpop.permute.xlu0 %1519
  %v1525 = vmul.f32 %v1269, %v1514
  %v1526 = vmul.f32 %v1270, %v1516
  %v1527 = vmul.f32 %v1271, %v1518
  %v1528 = vmul.f32 %v1272, %v1520
  %1533 = vrot.lane.b32.xlu0 %v1525, 48
  %v1534 = vpop.permute.xlu0 %1533
  %1535 = vrot.lane.b32.xlu0 %v1526, 48
  %v1536 = vpop.permute.xlu0 %1535
  %1537 = vrot.lane.b32.xlu0 %v1527, 48
  %v1538 = vpop.permute.xlu0 %1537
  %1539 = vrot.lane.b32.xlu0 %v1528, 48
  %v1540 = vpop.permute.xlu0 %1539
  %v1545 = vadd.f32 %v1501, %v1534
  %v1546 = vadd.f32 %v1502, %v1536
  %v1547 = vadd.f32 %v1503, %v1538
  %v1548 = vadd.f32 %v1504, %v1540
  %v1549 = vld [vmem:[%s2 + $0x258] sm:$0xff]
  %v1550 = vld [vmem:[%s2 + $0x4c0] sm:$0xff]
  %v1551 = vld [vmem:[%s2 + $0x728] sm:$0xff]
  %v1552 = vld [vmem:[%s2 + $0x990] sm:$0xff]
  %1557 = vrot.lane.b32.xlu0 %v1549, 8
  %v1558 = vpop.permute.xlu0 %1557
  %1559 = vrot.lane.b32.xlu0 %v1550, 8
  %v1560 = vpop.permute.xlu0 %1559
  %1561 = vrot.lane.b32.xlu0 %v1551, 8
  %v1562 = vpop.permute.xlu0 %1561
  %1563 = vrot.lane.b32.xlu0 %v1552, 8
  %v1564 = vpop.permute.xlu0 %1563
  %v1569 = vmul.f32 %v1269, %v1558
  %v1570 = vmul.f32 %v1270, %v1560
  %v1571 = vmul.f32 %v1271, %v1562
  %v1572 = vmul.f32 %v1272, %v1564
  %1577 = vrot.lane.b32.xlu0 %v1569, 47
  %v1578 = vpop.permute.xlu0 %1577
  %1579 = vrot.lane.b32.xlu0 %v1570, 47
  %v1580 = vpop.permute.xlu0 %1579
  %1581 = vrot.lane.b32.xlu0 %v1571, 47
  %v1582 = vpop.permute.xlu0 %1581
  %1583 = vrot.lane.b32.xlu0 %v1572, 47
  %v1584 = vpop.permute.xlu0 %1583
  %v1589 = vadd.f32 %v1545, %v1578
  %v1590 = vadd.f32 %v1546, %v1580
  %v1591 = vadd.f32 %v1547, %v1582
  %v1592 = vadd.f32 %v1548, %v1584
  %v1593 = vld [vmem:[%s2 + $0x260] sm:$0xff]
  %v1594 = vld [vmem:[%s2 + $0x4c8] sm:$0xff]
  %v1595 = vld [vmem:[%s2 + $0x730] sm:$0xff]
  %v1596 = vld [vmem:[%s2 + $0x998] sm:$0xff]
  %1601 = vrot.lane.b32.xlu0 %v1593, 9
  %v1602 = vpop.permute.xlu0 %1601
  %1603 = vrot.lane.b32.xlu0 %v1594, 9
  %v1604 = vpop.permute.xlu0 %1603
  %1605 = vrot.lane.b32.xlu0 %v1595, 9
  %v1606 = vpop.permute.xlu0 %1605
  %1607 = vrot.lane.b32.xlu0 %v1596, 9
  %v1608 = vpop.permute.xlu0 %1607
  %v1613 = vmul.f32 %v1269, %v1602
  %v1614 = vmul.f32 %v1270, %v1604
  %v1615 = vmul.f32 %v1271, %v1606
  %v1616 = vmul.f32 %v1272, %v1608
  %1621 = vrot.lane.b32.xlu0 %v1613, 46
  %v1622 = vpop.permute.xlu0 %1621
  %1623 = vrot.lane.b32.xlu0 %v1614, 46
  %v1624 = vpop.permute.xlu0 %1623
  %1625 = vrot.lane.b32.xlu0 %v1615, 46
  %v1626 = vpop.permute.xlu0 %1625
  %1627 = vrot.lane.b32.xlu0 %v1616, 46
  %v1628 = vpop.permute.xlu0 %1627
  %v1633 = vadd.f32 %v1589, %v1622
  %v1634 = vadd.f32 %v1590, %v1624
  %v1635 = vadd.f32 %v1591, %v1626
  %v1636 = vadd.f32 %v1592, %v1628
  %1641 = vrot.lane.b32.xlu0 %v1633, 73
  %v1642 = vpop.permute.xlu0 %1641
  %1643 = vrot.lane.b32.xlu0 %v1634, 73
  %v1644 = vpop.permute.xlu0 %1643
  %1645 = vrot.lane.b32.xlu0 %v1635, 73
  %v1646 = vpop.permute.xlu0 %1645
  %1647 = vrot.lane.b32.xlu0 %v1636, 73
  %v1648 = vpop.permute.xlu0 %1647
  %v1653 = vadd.f32 %v1244, %v1642
  %v1654 = vadd.f32 %v1245, %v1644
  %v1655 = vadd.f32 %v1246, %v1646
  %v1656 = vadd.f32 %v1247, %v1648
  %1657 = vset.pattern.permute.xlu0 2
  %1658 = vperm.xlu0 %1657, %v649
  %v1659 = vpop.permute.xlu0 %1658
  %1661 = vset.pattern.permute.xlu0 2
  %1662 = vperm.xlu0 %1661, %v650
  %v1663 = vpop.permute.xlu0 %1662
  %1665 = vset.pattern.permute.xlu0 2
  %1666 = vperm.xlu0 %1665, %v651
  %v1667 = vpop.permute.xlu0 %1666
  %1669 = vset.pattern.permute.xlu0 2
  %1670 = vperm.xlu0 %1669, %v652
  %v1671 = vpop.permute.xlu0 %1670
  %v1673 = vadd.f32 %v1653, %v1659
  %v1674 = vadd.f32 %v1654, %v1663
  %v1675 = vadd.f32 %v1655, %v1667
  %v1676 = vadd.f32 %v1656, %v1671
  %v1677 = vld [vmem:[%s3] sm:$0xff]
  %v1678 = vld [vmem:[%s3 + $0x8] sm:$0xff]
  %v1679 = vld [vmem:[%s3 + $0x10] sm:$0xff]
  %v1680 = vld [vmem:[%s3 + $0x18] sm:$0xff]
  %v1681 = vld [vmem:[%s3 + $0x20] sm:$0xff]
  %v1682 = vld [vmem:[%s3 + $0x28] sm:$0xff]
  %v1683 = vld [vmem:[%s3 + $0x30] sm:$0xff]
  %v1684 = vld [vmem:[%s3 + $0x38] sm:$0xff]
  %v1685 = vld [vmem:[%s3 + $0x40] sm:$0xff]
  %v1686 = vld [vmem:[%s3 + $0x48] sm:$0xff]
  %v1687 = vld [vmem:[%s3 + $0x50] sm:$0xff]
  %v1688 = vld [vmem:[%s3 + $0x58] sm:$0xff]
  %v1689 = vld [vmem:[%s3 + $0x60] sm:$0xff]
  %v1690 = vld [vmem:[%s3 + $0x68] sm:$0xff]
  %v1691 = vld [vmem:[%s3 + $0x70] sm:$0xff]
  %v1692 = vld [vmem:[%s3 + $0x78] sm:$0xff]
  %v1694 = vsel %vm907, %v1673, 0
  %v1697 = vsel %vm907, %v1674, 0
  %v1700 = vsel %vm907, %v1675, 0
  %v1703 = vsel %vm907, %v1676, 0
  %1705 = vmatprep.subr.mxu0 %v1678
  %1706 = vmatpush1.msra.mxu0 %v1677
  %1707 = vmatprep.subr.mxu0 %v1680
  %1708 = vmatpush1.msra.mxu0 %v1679
  %1709 = vmatprep.subr.mxu0 %v1682
  %1710 = vmatpush1.msra.mxu0 %v1681
  %1711 = vmatprep.subr.mxu0 %v1684
  %1712 = vmatpush1.msra.mxu0 %v1683
  %1713 = vmatprep.subr.mxu0 %v1686
  %1714 = vmatpush1.msra.mxu0 %v1685
  %1715 = vmatprep.subr.mxu0 %v1688
  %1716 = vmatpush1.msra.mxu0 %v1687
  %1717 = vmatprep.subr.mxu0 %v1690
  %1718 = vmatpush1.msra.mxu0 %v1689
  %1719 = vmatprep.subr.mxu0 %v1692
  %1720 = vmatpush1.msra.mxu0 %v1691
  %1721 = vmatprep.subr.mxu0 0.0
  %1722 = vmatpush1.msra.mxu0 0.0
  %1723 = vmatprep.subr.mxu0 0.0
  %1724 = vmatpush1.msra.mxu0 0.0
  %1725 = vmatprep.subr.mxu0 0.0
  %1726 = vmatpush1.msra.mxu0 0.0
  %1727 = vmatprep.subr.mxu0 0.0
  %1728 = vmatpush1.msra.mxu0 0.0
  %1729 = vmatprep.subr.mxu0 0.0
  %1730 = vmatpush1.msra.mxu0 0.0
  %1731 = vmatprep.subr.mxu0 0.0
  %1732 = vmatpush1.msra.mxu0 0.0
  %1733 = vmatprep.subr.mxu0 0.0
  %1734 = vmatpush1.msra.mxu0 0.0
  %1735 = vmatprep.subr.mxu0 0.0
  %1736 = vmatpush1.msra.mxu0 0.0
  %1737 = vmatprep.subr.mxu0 0.0
  %1738 = vmatpush1.msra.mxu0 0.0
  %1739 = vmatprep.subr.mxu0 0.0
  %1740 = vmatpush1.msra.mxu0 0.0
  %1741 = vmatprep.subr.mxu0 0.0
  %1742 = vmatpush1.msra.mxu0 0.0
  %1743 = vmatprep.subr.mxu0 0.0
  %1744 = vmatpush1.msra.mxu0 0.0
  %1745 = vmatprep.subr.mxu0 0.0
  %1746 = vmatpush1.msra.mxu0 0.0
  %1747 = vmatprep.subr.mxu0 0.0
  %1748 = vmatpush1.msra.mxu0 0.0
  %1749 = vmatprep.subr.mxu0 0.0
  %1750 = vmatpush1.msra.mxu0 0.0
  %1751 = vmatprep.subr.mxu0 0.0
  %1752 = vmatpush1.msra.mxu0 0.0
  %1753 = vmatprep.subr.mxu0 0.0
  %1754 = vmatpush1.msra.mxu0 0.0
  %1755 = vmatprep.subr.mxu0 0.0
  %1756 = vmatpush1.msra.mxu0 0.0
  %1757 = vmatprep.subr.mxu0 0.0
  %1758 = vmatpush1.msra.mxu0 0.0
  %1759 = vmatprep.subr.mxu0 0.0
  %1760 = vmatpush1.msra.mxu0 0.0
  %1761 = vmatprep.subr.mxu0 0.0
  %1762 = vmatpush1.msra.mxu0 0.0
  %1763 = vmatprep.subr.mxu0 0.0
  %1764 = vmatpush1.msra.mxu0 0.0
  %1765 = vmatprep.subr.mxu0 0.0
  %1766 = vmatpush1.msra.mxu0 0.0
  %1767 = vmatprep.subr.mxu0 0.0
  %1768 = vmatpush1.msra.mxu0 0.0
  %1769 = vmatprep.mubr.f32.mxu0 0.0
  %1770 = vmatmul.mubr.f32.gmra.mrb[0].mxu0 %v1694
  %v1771 = vpop.f32.mrb[0].mxu0
  %v1772 = vadd.f32 0.0, %v1771
  %v1773 = vpop.f32.mrb[0].mxu0
  %v1774 = vadd.f32 0.0, %v1773
  %1775 = vmatprep.mubr.f32.mxu0 0.0
  %1776 = vmatmul.mubr.f32.gmra.mrb[0].mxu0 %v1697
  %v1777 = vpop.f32.mrb[0].mxu0
  %v1778 = vadd.f32 0.0, %v1777
  %v1779 = vpop.f32.mrb[0].mxu0
  %v1780 = vadd.f32 0.0, %v1779
  %1781 = vmatprep.mubr.f32.mxu0 0.0
  %1782 = vmatmul.mubr.f32.gmra.mrb[0].mxu0 %v1700
  %v1783 = vpop.f32.mrb[0].mxu0
  %v1784 = vadd.f32 0.0, %v1783
  %v1785 = vpop.f32.mrb[0].mxu0
  %v1786 = vadd.f32 0.0, %v1785
  %1787 = vmatprep.mubr.f32.mxu0 0.0
  %1788 = vmatmul.mubr.f32.gmra.mrb[0].mxu0 %v1703
  %v1789 = vpop.f32.mrb[0].mxu0
  %v1790 = vadd.f32 0.0, %v1789
  %v1791 = vpop.f32.mrb[0].mxu0
  %v1792 = vadd.f32 0.0, %v1791
  %1793 = vdwg.mxu0
  %v1794 = vadd.f32 %v26, %v1772
  %v1795 = vadd.f32 %v27, %v1774
  %v1796 = vadd.f32 %v28, %v1778
  %v1797 = vadd.f32 %v29, %v1780
  %v1798 = vadd.f32 %v30, %v1784
  %v1799 = vadd.f32 %v31, %v1786
  %v1800 = vadd.f32 %v32, %v1790
  %v1801 = vadd.f32 %v33, %v1792
  %1802 = vrot.lane.b32.xlu0 %v1794, 34
  %v1803 = vpop.permute.xlu0 %1802
  %1804 = vrot.lane.b32.xlu0 %v1796, 34
  %v1805 = vpop.permute.xlu0 %1804
  %1806 = vrot.lane.b32.xlu0 %v1798, 34
  %v1807 = vpop.permute.xlu0 %1806
  %1808 = vrot.lane.b32.xlu0 %v1800, 34
  %v1809 = vpop.permute.xlu0 %1808
  %1810 = vrot.lane.b32.xlu0 %v1795, 34
  %v1811 = vpop.permute.xlu0 %1810
  %1812 = vrot.lane.b32.xlu0 %v1797, 34
  %v1813 = vpop.permute.xlu0 %1812
  %1814 = vrot.lane.b32.xlu0 %v1799, 34
  %v1815 = vpop.permute.xlu0 %1814
  %1816 = vrot.lane.b32.xlu0 %v1801, 34
  %v1817 = vpop.permute.xlu0 %1816
  %vm1818 = vcmp.lt.s32.totalorder %v204, 34
  %v1819 = vsel %vm1818, %v1803, %v1811
  %v1820 = vsel %vm1818, %v1805, %v1813
  %v1821 = vsel %vm1818, %v1807, %v1815
  %v1822 = vsel %vm1818, %v1809, %v1817
  %v1823 = vsel %vm1818, %v1811, %v1803
  %v1824 = vsel %vm1818, %v1813, %v1805
  %v1825 = vsel %vm1818, %v1815, %v1807
  %v1826 = vsel %vm1818, %v1817, %v1809
  %v1827 = vld [vmem:[%s2 + $0x90] sm:$0xff]
  %v1828 = vld [vmem:[%s2 + $0x98] sm:$0xff]
  %v1829 = vld [vmem:[%s2 + $0x2f8] sm:$0xff]
  %v1830 = vld [vmem:[%s2 + $0x300] sm:$0xff]
  %v1831 = vld [vmem:[%s2 + $0x560] sm:$0xff]
  %v1832 = vld [vmem:[%s2 + $0x568] sm:$0xff]
  %v1833 = vld [vmem:[%s2 + $0x7c8] sm:$0xff]
  %v1834 = vld [vmem:[%s2 + $0x7d0] sm:$0xff]
  %v1835 = vmul.f32 %v1823, %v1827
  %v1836 = vmul.f32 %v1819, %v1828
  %v1837 = vmul.f32 %v1824, %v1829
  %v1838 = vmul.f32 %v1820, %v1830
  %v1839 = vmul.f32 %v1825, %v1831
  %v1840 = vmul.f32 %v1821, %v1832
  %v1841 = vmul.f32 %v1826, %v1833
  %v1842 = vmul.f32 %v1822, %v1834
  %v1843 = vadd.f32 %v1835, 0.0
  %v1844 = vadd.f32 %v1836, 0.0
  %v1845 = vadd.f32 %v1837, 0.0
  %v1846 = vadd.f32 %v1838, 0.0
  %v1847 = vadd.f32 %v1839, 0.0
  %v1848 = vadd.f32 %v1840, 0.0
  %v1849 = vadd.f32 %v1841, 0.0
  %v1850 = vadd.f32 %v1842, 0.0
  %1851 = vrot.lane.b32.xlu0 %v1794, 33
  %v1852 = vpop.permute.xlu0 %1851
  %1853 = vrot.lane.b32.xlu0 %v1796, 33
  %v1854 = vpop.permute.xlu0 %1853
  %1855 = vrot.lane.b32.xlu0 %v1798, 33
  %v1856 = vpop.permute.xlu0 %1855
  %1857 = vrot.lane.b32.xlu0 %v1800, 33
  %v1858 = vpop.permute.xlu0 %1857
  %1859 = vrot.lane.b32.xlu0 %v1795, 33
  %v1860 = vpop.permute.xlu0 %1859
  %1861 = vrot.lane.b32.xlu0 %v1797, 33
  %v1862 = vpop.permute.xlu0 %1861
  %1863 = vrot.lane.b32.xlu0 %v1799, 33
  %v1864 = vpop.permute.xlu0 %1863
  %1865 = vrot.lane.b32.xlu0 %v1801, 33
  %v1866 = vpop.permute.xlu0 %1865
  %vm1867 = vcmp.lt.s32.totalorder %v204, 33
  %v1868 = vsel %vm1867, %v1852, %v1860
  %v1869 = vsel %vm1867, %v1854, %v1862
  %v1870 = vsel %vm1867, %v1856, %v1864
  %v1871 = vsel %vm1867, %v1858, %v1866
  %v1872 = vsel %vm1867, %v1860, %v1852
  %v1873 = vsel %vm1867, %v1862, %v1854
  %v1874 = vsel %vm1867, %v1864, %v1856
  %v1875 = vsel %vm1867, %v1866, %v1858
  %v1876 = vld [vmem:[%s2 + $0xa0] sm:$0xff]
  %v1877 = vld [vmem:[%s2 + $0xa8] sm:$0xff]
  %v1878 = vld [vmem:[%s2 + $0x308] sm:$0xff]
  %v1879 = vld [vmem:[%s2 + $0x310] sm:$0xff]
  %v1880 = vld [vmem:[%s2 + $0x570] sm:$0xff]
  %v1881 = vld [vmem:[%s2 + $0x578] sm:$0xff]
  %v1882 = vld [vmem:[%s2 + $0x7d8] sm:$0xff]
  %v1883 = vld [vmem:[%s2 + $0x7e0] sm:$0xff]
  %v1884 = vmul.f32 %v1872, %v1876
  %v1885 = vmul.f32 %v1868, %v1877
  %v1886 = vmul.f32 %v1873, %v1878
  %v1887 = vmul.f32 %v1869, %v1879
  %v1888 = vmul.f32 %v1874, %v1880
  %v1889 = vmul.f32 %v1870, %v1881
  %v1890 = vmul.f32 %v1875, %v1882
  %v1891 = vmul.f32 %v1871, %v1883
  %v1892 = vadd.f32 %v1843, %v1884
  %v1893 = vadd.f32 %v1844, %v1885
  %v1894 = vadd.f32 %v1845, %v1886
  %v1895 = vadd.f32 %v1846, %v1887
  %v1896 = vadd.f32 %v1847, %v1888
  %v1897 = vadd.f32 %v1848, %v1889
  %v1898 = vadd.f32 %v1849, %v1890
  %v1899 = vadd.f32 %v1850, %v1891
  %1900 = vrot.lane.b32.xlu0 %v1794, 32
  %v1901 = vpop.permute.xlu0 %1900
  %1902 = vrot.lane.b32.xlu0 %v1796, 32
  %v1903 = vpop.permute.xlu0 %1902
  %1904 = vrot.lane.b32.xlu0 %v1798, 32
  %v1905 = vpop.permute.xlu0 %1904
  %1906 = vrot.lane.b32.xlu0 %v1800, 32
  %v1907 = vpop.permute.xlu0 %1906
  %1908 = vrot.lane.b32.xlu0 %v1795, 32
  %v1909 = vpop.permute.xlu0 %1908
  %1910 = vrot.lane.b32.xlu0 %v1797, 32
  %v1911 = vpop.permute.xlu0 %1910
  %1912 = vrot.lane.b32.xlu0 %v1799, 32
  %v1913 = vpop.permute.xlu0 %1912
  %1914 = vrot.lane.b32.xlu0 %v1801, 32
  %v1915 = vpop.permute.xlu0 %1914
  %vm1916 = vcmp.lt.s32.totalorder %v204, 32
  %v1917 = vsel %vm1916, %v1901, %v1909
  %v1918 = vsel %vm1916, %v1903, %v1911
  %v1919 = vsel %vm1916, %v1905, %v1913
  %v1920 = vsel %vm1916, %v1907, %v1915
  %v1921 = vsel %vm1916, %v1909, %v1901
  %v1922 = vsel %vm1916, %v1911, %v1903
  %v1923 = vsel %vm1916, %v1913, %v1905
  %v1924 = vsel %vm1916, %v1915, %v1907
  %v1925 = vld [vmem:[%s2 + $0xb0] sm:$0xff]
  %v1926 = vld [vmem:[%s2 + $0xb8] sm:$0xff]
  %v1927 = vld [vmem:[%s2 + $0x318] sm:$0xff]
  %v1928 = vld [vmem:[%s2 + $0x320] sm:$0xff]
  %v1929 = vld [vmem:[%s2 + $0x580] sm:$0xff]
  %v1930 = vld [vmem:[%s2 + $0x588] sm:$0xff]
  %v1931 = vld [vmem:[%s2 + $0x7e8] sm:$0xff]
  %v1932 = vld [vmem:[%s2 + $0x7f0] sm:$0xff]
  %v1933 = vmul.f32 %v1921, %v1925
  %v1934 = vmul.f32 %v1917, %v1926
  %v1935 = vmul.f32 %v1922, %v1927
  %v1936 = vmul.f32 %v1918, %v1928
  %v1937 = vmul.f32 %v1923, %v1929
  %v1938 = vmul.f32 %v1919, %v1930
  %v1939 = vmul.f32 %v1924, %v1931
  %v1940 = vmul.f32 %v1920, %v1932
  %v1941 = vadd.f32 %v1892, %v1933
  %v1942 = vadd.f32 %v1893, %v1934
  %v1943 = vadd.f32 %v1894, %v1935
  %v1944 = vadd.f32 %v1895, %v1936
  %v1945 = vadd.f32 %v1896, %v1937
  %v1946 = vadd.f32 %v1897, %v1938
  %v1947 = vadd.f32 %v1898, %v1939
  %v1948 = vadd.f32 %v1899, %v1940
  %1949 = vrot.lane.b32.xlu0 %v1794, 31
  %v1950 = vpop.permute.xlu0 %1949
  %1951 = vrot.lane.b32.xlu0 %v1796, 31
  %v1952 = vpop.permute.xlu0 %1951
  %1953 = vrot.lane.b32.xlu0 %v1798, 31
  %v1954 = vpop.permute.xlu0 %1953
  %1955 = vrot.lane.b32.xlu0 %v1800, 31
  %v1956 = vpop.permute.xlu0 %1955
  %1957 = vrot.lane.b32.xlu0 %v1795, 31
  %v1958 = vpop.permute.xlu0 %1957
  %1959 = vrot.lane.b32.xlu0 %v1797, 31
  %v1960 = vpop.permute.xlu0 %1959
  %1961 = vrot.lane.b32.xlu0 %v1799, 31
  %v1962 = vpop.permute.xlu0 %1961
  %1963 = vrot.lane.b32.xlu0 %v1801, 31
  %v1964 = vpop.permute.xlu0 %1963
  %vm1965 = vcmp.lt.s32.totalorder %v204, 31
  %v1966 = vsel %vm1965, %v1950, %v1958
  %v1967 = vsel %vm1965, %v1952, %v1960
  %v1968 = vsel %vm1965, %v1954, %v1962
  %v1969 = vsel %vm1965, %v1956, %v1964
  %v1970 = vsel %vm1965, %v1958, %v1950
  %v1971 = vsel %vm1965, %v1960, %v1952
  %v1972 = vsel %vm1965, %v1962, %v1954
  %v1973 = vsel %vm1965, %v1964, %v1956
  %v1974 = vld [vmem:[%s2 + $0xc0] sm:$0xff]
  %v1975 = vld [vmem:[%s2 + $0xc8] sm:$0xff]
  %v1976 = vld [vmem:[%s2 + $0x328] sm:$0xff]
  %v1977 = vld [vmem:[%s2 + $0x330] sm:$0xff]
  %v1978 = vld [vmem:[%s2 + $0x590] sm:$0xff]
  %v1979 = vld [vmem:[%s2 + $0x598] sm:$0xff]
  %v1980 = vld [vmem:[%s2 + $0x7f8] sm:$0xff]
  %v1981 = vld [vmem:[%s2 + $0x800] sm:$0xff]
  %v1982 = vmul.f32 %v1970, %v1974
  %v1983 = vmul.f32 %v1966, %v1975
  %v1984 = vmul.f32 %v1971, %v1976
  %v1985 = vmul.f32 %v1967, %v1977
  %v1986 = vmul.f32 %v1972, %v1978
  %v1987 = vmul.f32 %v1968, %v1979
  %v1988 = vmul.f32 %v1973, %v1980
  %v1989 = vmul.f32 %v1969, %v1981
  %v1990 = vadd.f32 %v1941, %v1982
  %v1991 = vadd.f32 %v1942, %v1983
  %v1992 = vadd.f32 %v1943, %v1984
  %v1993 = vadd.f32 %v1944, %v1985
  %v1994 = vadd.f32 %v1945, %v1986
  %v1995 = vadd.f32 %v1946, %v1987
  %v1996 = vadd.f32 %v1947, %v1988
  %v1997 = vadd.f32 %v1948, %v1989
  %1998 = vrot.lane.b32.xlu0 %v1794, 30
  %v1999 = vpop.permute.xlu0 %1998
  %2000 = vrot.lane.b32.xlu0 %v1796, 30
  %v2001 = vpop.permute.xlu0 %2000
  %2002 = vrot.lane.b32.xlu0 %v1798, 30
  %v2003 = vpop.permute.xlu0 %2002
  %2004 = vrot.lane.b32.xlu0 %v1800, 30
  %v2005 = vpop.permute.xlu0 %2004
  %2006 = vrot.lane.b32.xlu0 %v1795, 30
  %v2007 = vpop.permute.xlu0 %2006
  %2008 = vrot.lane.b32.xlu0 %v1797, 30
  %v2009 = vpop.permute.xlu0 %2008
  %2010 = vrot.lane.b32.xlu0 %v1799, 30
  %v2011 = vpop.permute.xlu0 %2010
  %2012 = vrot.lane.b32.xlu0 %v1801, 30
  %v2013 = vpop.permute.xlu0 %2012
  %vm2014 = vcmp.lt.s32.totalorder %v204, 30
  %v2015 = vsel %vm2014, %v1999, %v2007
  %v2016 = vsel %vm2014, %v2001, %v2009
  %v2017 = vsel %vm2014, %v2003, %v2011
  %v2018 = vsel %vm2014, %v2005, %v2013
  %v2019 = vsel %vm2014, %v2007, %v1999
  %v2020 = vsel %vm2014, %v2009, %v2001
  %v2021 = vsel %vm2014, %v2011, %v2003
  %v2022 = vsel %vm2014, %v2013, %v2005
  %v2023 = vld [vmem:[%s2 + $0xd0] sm:$0xff]
  %v2024 = vld [vmem:[%s2 + $0xd8] sm:$0xff]
  %v2025 = vld [vmem:[%s2 + $0x338] sm:$0xff]
  %v2026 = vld [vmem:[%s2 + $0x340] sm:$0xff]
  %v2027 = vld [vmem:[%s2 + $0x5a0] sm:$0xff]
  %v2028 = vld [vmem:[%s2 + $0x5a8] sm:$0xff]
  %v2029 = vld [vmem:[%s2 + $0x808] sm:$0xff]
  %v2030 = vld [vmem:[%s2 + $0x810] sm:$0xff]
  %v2031 = vmul.f32 %v2019, %v2023
  %v2032 = vmul.f32 %v2015, %v2024
  %v2033 = vmul.f32 %v2020, %v2025
  %v2034 = vmul.f32 %v2016, %v2026
  %v2035 = vmul.f32 %v2021, %v2027
  %v2036 = vmul.f32 %v2017, %v2028
  %v2037 = vmul.f32 %v2022, %v2029
  %v2038 = vmul.f32 %v2018, %v2030
  %v2039 = vadd.f32 %v1990, %v2031
  %v2040 = vadd.f32 %v1991, %v2032
  %v2041 = vadd.f32 %v1992, %v2033
  %v2042 = vadd.f32 %v1993, %v2034
  %v2043 = vadd.f32 %v1994, %v2035
  %v2044 = vadd.f32 %v1995, %v2036
  %v2045 = vadd.f32 %v1996, %v2037
  %v2046 = vadd.f32 %v1997, %v2038
  %2047 = vrot.lane.b32.xlu0 %v1794, 18
  %v2048 = vpop.permute.xlu0 %2047
  %2049 = vrot.lane.b32.xlu0 %v1796, 18
  %v2050 = vpop.permute.xlu0 %2049
  %2051 = vrot.lane.b32.xlu0 %v1798, 18
  %v2052 = vpop.permute.xlu0 %2051
  %2053 = vrot.lane.b32.xlu0 %v1800, 18
  %v2054 = vpop.permute.xlu0 %2053
  %2055 = vrot.lane.b32.xlu0 %v1795, 18
  %v2056 = vpop.permute.xlu0 %2055
  %2057 = vrot.lane.b32.xlu0 %v1797, 18
  %v2058 = vpop.permute.xlu0 %2057
  %2059 = vrot.lane.b32.xlu0 %v1799, 18
  %v2060 = vpop.permute.xlu0 %2059
  %2061 = vrot.lane.b32.xlu0 %v1801, 18
  %v2062 = vpop.permute.xlu0 %2061
  %vm2063 = vcmp.lt.s32.totalorder %v204, 18
  %v2064 = vsel %vm2063, %v2048, %v2056
  %v2065 = vsel %vm2063, %v2050, %v2058
  %v2066 = vsel %vm2063, %v2052, %v2060
  %v2067 = vsel %vm2063, %v2054, %v2062
  %v2068 = vsel %vm2063, %v2056, %v2048
  %v2069 = vsel %vm2063, %v2058, %v2050
  %v2070 = vsel %vm2063, %v2060, %v2052
  %v2071 = vsel %vm2063, %v2062, %v2054
  %v2072 = vld [vmem:[%s2 + $0xe0] sm:$0xff]
  %v2073 = vld [vmem:[%s2 + $0xe8] sm:$0xff]
  %v2074 = vld [vmem:[%s2 + $0x348] sm:$0xff]
  %v2075 = vld [vmem:[%s2 + $0x350] sm:$0xff]
  %v2076 = vld [vmem:[%s2 + $0x5b0] sm:$0xff]
  %v2077 = vld [vmem:[%s2 + $0x5b8] sm:$0xff]
  %v2078 = vld [vmem:[%s2 + $0x818] sm:$0xff]
  %v2079 = vld [vmem:[%s2 + $0x820] sm:$0xff]
  %v2080 = vmul.f32 %v2068, %v2072
  %v2081 = vmul.f32 %v2064, %v2073
  %v2082 = vmul.f32 %v2069, %v2074
  %v2083 = vmul.f32 %v2065, %v2075
  %v2084 = vmul.f32 %v2070, %v2076
  %v2085 = vmul.f32 %v2066, %v2077
  %v2086 = vmul.f32 %v2071, %v2078
  %v2087 = vmul.f32 %v2067, %v2079
  %v2088 = vadd.f32 %v2039, %v2080
  %v2089 = vadd.f32 %v2040, %v2081
  %v2090 = vadd.f32 %v2041, %v2082
  %v2091 = vadd.f32 %v2042, %v2083
  %v2092 = vadd.f32 %v2043, %v2084
  %v2093 = vadd.f32 %v2044, %v2085
  %v2094 = vadd.f32 %v2045, %v2086
  %v2095 = vadd.f32 %v2046, %v2087
  %2096 = vrot.lane.b32.xlu0 %v1794, 17
  %v2097 = vpop.permute.xlu0 %2096
  %2098 = vrot.lane.b32.xlu0 %v1796, 17
  %v2099 = vpop.permute.xlu0 %2098
  %2100 = vrot.lane.b32.xlu0 %v1798, 17
  %v2101 = vpop.permute.xlu0 %2100
  %2102 = vrot.lane.b32.xlu0 %v1800, 17
  %v2103 = vpop.permute.xlu0 %2102
  %2104 = vrot.lane.b32.xlu0 %v1795, 17
  %v2105 = vpop.permute.xlu0 %2104
  %2106 = vrot.lane.b32.xlu0 %v1797, 17
  %v2107 = vpop.permute.xlu0 %2106
  %2108 = vrot.lane.b32.xlu0 %v1799, 17
  %v2109 = vpop.permute.xlu0 %2108
  %2110 = vrot.lane.b32.xlu0 %v1801, 17
  %v2111 = vpop.permute.xlu0 %2110
  %vm2112 = vcmp.lt.s32.totalorder %v204, 17
  %v2113 = vsel %vm2112, %v2097, %v2105
  %v2114 = vsel %vm2112, %v2099, %v2107
  %v2115 = vsel %vm2112, %v2101, %v2109
  %v2116 = vsel %vm2112, %v2103, %v2111
  %v2117 = vsel %vm2112, %v2105, %v2097
  %v2118 = vsel %vm2112, %v2107, %v2099
  %v2119 = vsel %vm2112, %v2109, %v2101
  %v2120 = vsel %vm2112, %v2111, %v2103
  %v2121 = vld [vmem:[%s2 + $0xf0] sm:$0xff]
  %v2122 = vld [vmem:[%s2 + $0xf8] sm:$0xff]
  %v2123 = vld [vmem:[%s2 + $0x358] sm:$0xff]
  %v2124 = vld [vmem:[%s2 + $0x360] sm:$0xff]
  %v2125 = vld [vmem:[%s2 + $0x5c0] sm:$0xff]
  %v2126 = vld [vmem:[%s2 + $0x5c8] sm:$0xff]
  %v2127 = vld [vmem:[%s2 + $0x828] sm:$0xff]
  %v2128 = vld [vmem:[%s2 + $0x830] sm:$0xff]
  %v2129 = vmul.f32 %v2117, %v2121
  %v2130 = vmul.f32 %v2113, %v2122
  %v2131 = vmul.f32 %v2118, %v2123
  %v2132 = vmul.f32 %v2114, %v2124
  %v2133 = vmul.f32 %v2119, %v2125
  %v2134 = vmul.f32 %v2115, %v2126
  %v2135 = vmul.f32 %v2120, %v2127
  %v2136 = vmul.f32 %v2116, %v2128
  %v2137 = vadd.f32 %v2088, %v2129
  %v2138 = vadd.f32 %v2089, %v2130
  %v2139 = vadd.f32 %v2090, %v2131
  %v2140 = vadd.f32 %v2091, %v2132
  %v2141 = vadd.f32 %v2092, %v2133
  %v2142 = vadd.f32 %v2093, %v2134
  %v2143 = vadd.f32 %v2094, %v2135
  %v2144 = vadd.f32 %v2095, %v2136
  %2145 = vrot.lane.b32.xlu0 %v1794, 16
  %v2146 = vpop.permute.xlu0 %2145
  %2147 = vrot.lane.b32.xlu0 %v1796, 16
  %v2148 = vpop.permute.xlu0 %2147
  %2149 = vrot.lane.b32.xlu0 %v1798, 16
  %v2150 = vpop.permute.xlu0 %2149
  %2151 = vrot.lane.b32.xlu0 %v1800, 16
  %v2152 = vpop.permute.xlu0 %2151
  %2153 = vrot.lane.b32.xlu0 %v1795, 16
  %v2154 = vpop.permute.xlu0 %2153
  %2155 = vrot.lane.b32.xlu0 %v1797, 16
  %v2156 = vpop.permute.xlu0 %2155
  %2157 = vrot.lane.b32.xlu0 %v1799, 16
  %v2158 = vpop.permute.xlu0 %2157
  %2159 = vrot.lane.b32.xlu0 %v1801, 16
  %v2160 = vpop.permute.xlu0 %2159
  %vm2161 = vcmp.lt.s32.totalorder %v204, 16
  %v2162 = vsel %vm2161, %v2146, %v2154
  %v2163 = vsel %vm2161, %v2148, %v2156
  %v2164 = vsel %vm2161, %v2150, %v2158
  %v2165 = vsel %vm2161, %v2152, %v2160
  %v2166 = vsel %vm2161, %v2154, %v2146
  %v2167 = vsel %vm2161, %v2156, %v2148
  %v2168 = vsel %vm2161, %v2158, %v2150
  %v2169 = vsel %vm2161, %v2160, %v2152
  %v2170 = vld [vmem:[%s2 + $0x100] sm:$0xff]
  %v2171 = vld [vmem:[%s2 + $0x108] sm:$0xff]
  %v2172 = vld [vmem:[%s2 + $0x368] sm:$0xff]
  %v2173 = vld [vmem:[%s2 + $0x370] sm:$0xff]
  %v2174 = vld [vmem:[%s2 + $0x5d0] sm:$0xff]
  %v2175 = vld [vmem:[%s2 + $0x5d8] sm:$0xff]
  %v2176 = vld [vmem:[%s2 + $0x838] sm:$0xff]
  %v2177 = vld [vmem:[%s2 + $0x840] sm:$0xff]
  %v2178 = vmul.f32 %v2166, %v2170
  %v2179 = vmul.f32 %v2162, %v2171
  %v2180 = vmul.f32 %v2167, %v2172
  %v2181 = vmul.f32 %v2163, %v2173
  %v2182 = vmul.f32 %v2168, %v2174
  %v2183 = vmul.f32 %v2164, %v2175
  %v2184 = vmul.f32 %v2169, %v2176
  %v2185 = vmul.f32 %v2165, %v2177
  %v2186 = vadd.f32 %v2137, %v2178
  %v2187 = vadd.f32 %v2138, %v2179
  %v2188 = vadd.f32 %v2139, %v2180
  %v2189 = vadd.f32 %v2140, %v2181
  %v2190 = vadd.f32 %v2141, %v2182
  %v2191 = vadd.f32 %v2142, %v2183
  %v2192 = vadd.f32 %v2143, %v2184
  %v2193 = vadd.f32 %v2144, %v2185
  %2194 = vrot.lane.b32.xlu0 %v1794, 15
  %v2195 = vpop.permute.xlu0 %2194
  %2196 = vrot.lane.b32.xlu0 %v1796, 15
  %v2197 = vpop.permute.xlu0 %2196
  %2198 = vrot.lane.b32.xlu0 %v1798, 15
  %v2199 = vpop.permute.xlu0 %2198
  %2200 = vrot.lane.b32.xlu0 %v1800, 15
  %v2201 = vpop.permute.xlu0 %2200
  %2202 = vrot.lane.b32.xlu0 %v1795, 15
  %v2203 = vpop.permute.xlu0 %2202
  %2204 = vrot.lane.b32.xlu0 %v1797, 15
  %v2205 = vpop.permute.xlu0 %2204
  %2206 = vrot.lane.b32.xlu0 %v1799, 15
  %v2207 = vpop.permute.xlu0 %2206
  %2208 = vrot.lane.b32.xlu0 %v1801, 15
  %v2209 = vpop.permute.xlu0 %2208
  %vm2210 = vcmp.lt.s32.totalorder %v204, 15
  %v2211 = vsel %vm2210, %v2195, %v2203
  %v2212 = vsel %vm2210, %v2197, %v2205
  %v2213 = vsel %vm2210, %v2199, %v2207
  %v2214 = vsel %vm2210, %v2201, %v2209
  %v2215 = vsel %vm2210, %v2203, %v2195
  %v2216 = vsel %vm2210, %v2205, %v2197
  %v2217 = vsel %vm2210, %v2207, %v2199
  %v2218 = vsel %vm2210, %v2209, %v2201
  %v2219 = vld [vmem:[%s2 + $0x110] sm:$0xff]
  %v2220 = vld [vmem:[%s2 + $0x118] sm:$0xff]
  %v2221 = vld [vmem:[%s2 + $0x378] sm:$0xff]
  %v2222 = vld [vmem:[%s2 + $0x380] sm:$0xff]
  %v2223 = vld [vmem:[%s2 + $0x5e0] sm:$0xff]
  %v2224 = vld [vmem:[%s2 + $0x5e8] sm:$0xff]
  %v2225 = vld [vmem:[%s2 + $0x848] sm:$0xff]
  %v2226 = vld [vmem:[%s2 + $0x850] sm:$0xff]
  %v2227 = vmul.f32 %v2215, %v2219
  %v2228 = vmul.f32 %v2211, %v2220
  %v2229 = vmul.f32 %v2216, %v2221
  %v2230 = vmul.f32 %v2212, %v2222
  %v2231 = vmul.f32 %v2217, %v2223
  %v2232 = vmul.f32 %v2213, %v2224
  %v2233 = vmul.f32 %v2218, %v2225
  %v2234 = vmul.f32 %v2214, %v2226
  %v2235 = vadd.f32 %v2186, %v2227
  %v2236 = vadd.f32 %v2187, %v2228
  %v2237 = vadd.f32 %v2188, %v2229
  %v2238 = vadd.f32 %v2189, %v2230
  %v2239 = vadd.f32 %v2190, %v2231
  %v2240 = vadd.f32 %v2191, %v2232
  %v2241 = vadd.f32 %v2192, %v2233
  %v2242 = vadd.f32 %v2193, %v2234
  %2243 = vrot.lane.b32.xlu0 %v1794, 14
  %v2244 = vpop.permute.xlu0 %2243
  %2245 = vrot.lane.b32.xlu0 %v1796, 14
  %v2246 = vpop.permute.xlu0 %2245
  %2247 = vrot.lane.b32.xlu0 %v1798, 14
  %v2248 = vpop.permute.xlu0 %2247
  %2249 = vrot.lane.b32.xlu0 %v1800, 14
  %v2250 = vpop.permute.xlu0 %2249
  %2251 = vrot.lane.b32.xlu0 %v1795, 14
  %v2252 = vpop.permute.xlu0 %2251
  %2253 = vrot.lane.b32.xlu0 %v1797, 14
  %v2254 = vpop.permute.xlu0 %2253
  %2255 = vrot.lane.b32.xlu0 %v1799, 14
  %v2256 = vpop.permute.xlu0 %2255
  %2257 = vrot.lane.b32.xlu0 %v1801, 14
  %v2258 = vpop.permute.xlu0 %2257
  %vm2259 = vcmp.lt.s32.totalorder %v204, 14
  %v2260 = vsel %vm2259, %v2244, %v2252
  %v2261 = vsel %vm2259, %v2246, %v2254
  %v2262 = vsel %vm2259, %v2248, %v2256
  %v2263 = vsel %vm2259, %v2250, %v2258
  %v2264 = vsel %vm2259, %v2252, %v2244
  %v2265 = vsel %vm2259, %v2254, %v2246
  %v2266 = vsel %vm2259, %v2256, %v2248
  %v2267 = vsel %vm2259, %v2258, %v2250
  %v2268 = vld [vmem:[%s2 + $0x120] sm:$0xff]
  %v2269 = vld [vmem:[%s2 + $0x128] sm:$0xff]
  %v2270 = vld [vmem:[%s2 + $0x388] sm:$0xff]
  %v2271 = vld [vmem:[%s2 + $0x390] sm:$0xff]
  %v2272 = vld [vmem:[%s2 + $0x5f0] sm:$0xff]
  %v2273 = vld [vmem:[%s2 + $0x5f8] sm:$0xff]
  %v2274 = vld [vmem:[%s2 + $0x858] sm:$0xff]
  %v2275 = vld [vmem:[%s2 + $0x860] sm:$0xff]
  %v2276 = vmul.f32 %v2264, %v2268
  %v2277 = vmul.f32 %v2260, %v2269
  %v2278 = vmul.f32 %v2265, %v2270
  %v2279 = vmul.f32 %v2261, %v2271
  %v2280 = vmul.f32 %v2266, %v2272
  %v2281 = vmul.f32 %v2262, %v2273
  %v2282 = vmul.f32 %v2267, %v2274
  %v2283 = vmul.f32 %v2263, %v2275
  %v2284 = vadd.f32 %v2235, %v2276
  %v2285 = vadd.f32 %v2236, %v2277
  %v2286 = vadd.f32 %v2237, %v2278
  %v2287 = vadd.f32 %v2238, %v2279
  %v2288 = vadd.f32 %v2239, %v2280
  %v2289 = vadd.f32 %v2240, %v2281
  %v2290 = vadd.f32 %v2241, %v2282
  %v2291 = vadd.f32 %v2242, %v2283
  %2292 = vrot.lane.b32.xlu0 %v1794, 2
  %v2293 = vpop.permute.xlu0 %2292
  %2294 = vrot.lane.b32.xlu0 %v1796, 2
  %v2295 = vpop.permute.xlu0 %2294
  %2296 = vrot.lane.b32.xlu0 %v1798, 2
  %v2297 = vpop.permute.xlu0 %2296
  %2298 = vrot.lane.b32.xlu0 %v1800, 2
  %v2299 = vpop.permute.xlu0 %2298
  %2300 = vrot.lane.b32.xlu0 %v1795, 2
  %v2301 = vpop.permute.xlu0 %2300
  %2302 = vrot.lane.b32.xlu0 %v1797, 2
  %v2303 = vpop.permute.xlu0 %2302
  %2304 = vrot.lane.b32.xlu0 %v1799, 2
  %v2305 = vpop.permute.xlu0 %2304
  %2306 = vrot.lane.b32.xlu0 %v1801, 2
  %v2307 = vpop.permute.xlu0 %2306
  %vm2308 = vcmp.lt.s32.totalorder %v204, 2
  %v2309 = vsel %vm2308, %v2293, %v2301
  %v2310 = vsel %vm2308, %v2295, %v2303
  %v2311 = vsel %vm2308, %v2297, %v2305
  %v2312 = vsel %vm2308, %v2299, %v2307
  %v2313 = vsel %vm2308, %v2301, %v2293
  %v2314 = vsel %vm2308, %v2303, %v2295
  %v2315 = vsel %vm2308, %v2305, %v2297
  %v2316 = vsel %vm2308, %v2307, %v2299
  %v2317 = vld [vmem:[%s2 + $0x130] sm:$0xff]
  %v2318 = vld [vmem:[%s2 + $0x138] sm:$0xff]
  %v2319 = vld [vmem:[%s2 + $0x398] sm:$0xff]
  %v2320 = vld [vmem:[%s2 + $0x3a0] sm:$0xff]
  %v2321 = vld [vmem:[%s2 + $0x600] sm:$0xff]
  %v2322 = vld [vmem:[%s2 + $0x608] sm:$0xff]
  %v2323 = vld [vmem:[%s2 + $0x868] sm:$0xff]
  %v2324 = vld [vmem:[%s2 + $0x870] sm:$0xff]
  %v2325 = vmul.f32 %v2313, %v2317
  %v2326 = vmul.f32 %v2309, %v2318
  %v2327 = vmul.f32 %v2314, %v2319
  %v2328 = vmul.f32 %v2310, %v2320
  %v2329 = vmul.f32 %v2315, %v2321
  %v2330 = vmul.f32 %v2311, %v2322
  %v2331 = vmul.f32 %v2316, %v2323
  %v2332 = vmul.f32 %v2312, %v2324
  %v2333 = vadd.f32 %v2284, %v2325
  %v2334 = vadd.f32 %v2285, %v2326
  %v2335 = vadd.f32 %v2286, %v2327
  %v2336 = vadd.f32 %v2287, %v2328
  %v2337 = vadd.f32 %v2288, %v2329
  %v2338 = vadd.f32 %v2289, %v2330
  %v2339 = vadd.f32 %v2290, %v2331
  %v2340 = vadd.f32 %v2291, %v2332
  %2341 = vrot.lane.b32.xlu0 %v1794, 1
  %v2342 = vpop.permute.xlu0 %2341
  %2343 = vrot.lane.b32.xlu0 %v1796, 1
  %v2344 = vpop.permute.xlu0 %2343
  %2345 = vrot.lane.b32.xlu0 %v1798, 1
  %v2346 = vpop.permute.xlu0 %2345
  %2347 = vrot.lane.b32.xlu0 %v1800, 1
  %v2348 = vpop.permute.xlu0 %2347
  %2349 = vrot.lane.b32.xlu0 %v1795, 1
  %v2350 = vpop.permute.xlu0 %2349
  %2351 = vrot.lane.b32.xlu0 %v1797, 1
  %v2352 = vpop.permute.xlu0 %2351
  %2353 = vrot.lane.b32.xlu0 %v1799, 1
  %v2354 = vpop.permute.xlu0 %2353
  %2355 = vrot.lane.b32.xlu0 %v1801, 1
  %v2356 = vpop.permute.xlu0 %2355
  %v2357 = vsel %vm352, %v2342, %v2350
  %v2358 = vsel %vm352, %v2344, %v2352
  %v2359 = vsel %vm352, %v2346, %v2354
  %v2360 = vsel %vm352, %v2348, %v2356
  %v2361 = vsel %vm352, %v2350, %v2342
  %v2362 = vsel %vm352, %v2352, %v2344
  %v2363 = vsel %vm352, %v2354, %v2346
  %v2364 = vsel %vm352, %v2356, %v2348
  %v2365 = vld [vmem:[%s2 + $0x140] sm:$0xff]
  %v2366 = vld [vmem:[%s2 + $0x148] sm:$0xff]
  %v2367 = vld [vmem:[%s2 + $0x3a8] sm:$0xff]
  %v2368 = vld [vmem:[%s2 + $0x3b0] sm:$0xff]
  %v2369 = vld [vmem:[%s2 + $0x610] sm:$0xff]
  %v2370 = vld [vmem:[%s2 + $0x618] sm:$0xff]
  %v2371 = vld [vmem:[%s2 + $0x878] sm:$0xff]
  %v2372 = vld [vmem:[%s2 + $0x880] sm:$0xff]
  %v2373 = vmul.f32 %v2361, %v2365
  %v2374 = vmul.f32 %v2357, %v2366
  %v2375 = vmul.f32 %v2362, %v2367
  %v2376 = vmul.f32 %v2358, %v2368
  %v2377 = vmul.f32 %v2363, %v2369
  %v2378 = vmul.f32 %v2359, %v2370
  %v2379 = vmul.f32 %v2364, %v2371
  %v2380 = vmul.f32 %v2360, %v2372
  %v2381 = vadd.f32 %v2333, %v2373
  %v2382 = vadd.f32 %v2334, %v2374
  %v2383 = vadd.f32 %v2335, %v2375
  %v2384 = vadd.f32 %v2336, %v2376
  %v2385 = vadd.f32 %v2337, %v2377
  %v2386 = vadd.f32 %v2338, %v2378
  %v2387 = vadd.f32 %v2339, %v2379
  %v2388 = vadd.f32 %v2340, %v2380
  %v2389 = vld [vmem:[%s2 + $0x150] sm:$0xff]
  %v2390 = vld [vmem:[%s2 + $0x158] sm:$0xff]
  %v2391 = vld [vmem:[%s2 + $0x3b8] sm:$0xff]
  %v2392 = vld [vmem:[%s2 + $0x3c0] sm:$0xff]
  %v2393 = vld [vmem:[%s2 + $0x620] sm:$0xff]
  %v2394 = vld [vmem:[%s2 + $0x628] sm:$0xff]
  %v2395 = vld [vmem:[%s2 + $0x888] sm:$0xff]
  %v2396 = vld [vmem:[%s2 + $0x890] sm:$0xff]
  %v2397 = vmul.f32 %v1794, %v2389
  %v2398 = vmul.f32 %v1795, %v2390
  %v2399 = vmul.f32 %v1796, %v2391
  %v2400 = vmul.f32 %v1797, %v2392
  %v2401 = vmul.f32 %v1798, %v2393
  %v2402 = vmul.f32 %v1799, %v2394
  %v2403 = vmul.f32 %v1800, %v2395
  %v2404 = vmul.f32 %v1801, %v2396
  %v2405 = vadd.f32 %v2381, %v2397
  %v2406 = vadd.f32 %v2382, %v2398
  %v2407 = vadd.f32 %v2383, %v2399
  %v2408 = vadd.f32 %v2384, %v2400
  %v2409 = vadd.f32 %v2385, %v2401
  %v2410 = vadd.f32 %v2386, %v2402
  %v2411 = vadd.f32 %v2387, %v2403
  %v2412 = vadd.f32 %v2388, %v2404
  %2413 = vrot.lane.b32.xlu0 %v1794, 127
  %v2414 = vpop.permute.xlu0 %2413
  %2415 = vrot.lane.b32.xlu0 %v1796, 127
  %v2416 = vpop.permute.xlu0 %2415
  %2417 = vrot.lane.b32.xlu0 %v1798, 127
  %v2418 = vpop.permute.xlu0 %2417
  %2419 = vrot.lane.b32.xlu0 %v1800, 127
  %v2420 = vpop.permute.xlu0 %2419
  %2421 = vrot.lane.b32.xlu0 %v1795, 127
  %v2422 = vpop.permute.xlu0 %2421
  %2423 = vrot.lane.b32.xlu0 %v1797, 127
  %v2424 = vpop.permute.xlu0 %2423
  %2425 = vrot.lane.b32.xlu0 %v1799, 127
  %v2426 = vpop.permute.xlu0 %2425
  %2427 = vrot.lane.b32.xlu0 %v1801, 127
  %v2428 = vpop.permute.xlu0 %2427
  %v2429 = vsel %vm425, %v2414, %v2422
  %v2430 = vsel %vm425, %v2416, %v2424
  %v2431 = vsel %vm425, %v2418, %v2426
  %v2432 = vsel %vm425, %v2420, %v2428
  %v2433 = vsel %vm425, %v2422, %v2414
  %v2434 = vsel %vm425, %v2424, %v2416
  %v2435 = vsel %vm425, %v2426, %v2418
  %v2436 = vsel %vm425, %v2428, %v2420
  %v2437 = vld [vmem:[%s2 + $0x160] sm:$0xff]
  %v2438 = vld [vmem:[%s2 + $0x168] sm:$0xff]
  %v2439 = vld [vmem:[%s2 + $0x3c8] sm:$0xff]
  %v2440 = vld [vmem:[%s2 + $0x3d0] sm:$0xff]
  %v2441 = vld [vmem:[%s2 + $0x630] sm:$0xff]
  %v2442 = vld [vmem:[%s2 + $0x638] sm:$0xff]
  %v2443 = vld [vmem:[%s2 + $0x898] sm:$0xff]
  %v2444 = vld [vmem:[%s2 + $0x8a0] sm:$0xff]
  %v2445 = vmul.f32 %v2429, %v2437
  %v2446 = vmul.f32 %v2433, %v2438
  %v2447 = vmul.f32 %v2430, %v2439
  %v2448 = vmul.f32 %v2434, %v2440
  %v2449 = vmul.f32 %v2431, %v2441
  %v2450 = vmul.f32 %v2435, %v2442
  %v2451 = vmul.f32 %v2432, %v2443
  %v2452 = vmul.f32 %v2436, %v2444
  %v2453 = vadd.f32 %v2405, %v2445
  %v2454 = vadd.f32 %v2406, %v2446
  %v2455 = vadd.f32 %v2407, %v2447
  %v2456 = vadd.f32 %v2408, %v2448
  %v2457 = vadd.f32 %v2409, %v2449
  %v2458 = vadd.f32 %v2410, %v2450
  %v2459 = vadd.f32 %v2411, %v2451
  %v2460 = vadd.f32 %v2412, %v2452
  %2461 = vrot.lane.b32.xlu0 %v1794, 126
  %v2462 = vpop.permute.xlu0 %2461
  %2463 = vrot.lane.b32.xlu0 %v1796, 126
  %v2464 = vpop.permute.xlu0 %2463
  %2465 = vrot.lane.b32.xlu0 %v1798, 126
  %v2466 = vpop.permute.xlu0 %2465
  %2467 = vrot.lane.b32.xlu0 %v1800, 126
  %v2468 = vpop.permute.xlu0 %2467
  %2469 = vrot.lane.b32.xlu0 %v1795, 126
  %v2470 = vpop.permute.xlu0 %2469
  %2471 = vrot.lane.b32.xlu0 %v1797, 126
  %v2472 = vpop.permute.xlu0 %2471
  %2473 = vrot.lane.b32.xlu0 %v1799, 126
  %v2474 = vpop.permute.xlu0 %2473
  %2475 = vrot.lane.b32.xlu0 %v1801, 126
  %v2476 = vpop.permute.xlu0 %2475
  %vm2477 = vcmp.lt.s32.totalorder %v204, 126
  %v2478 = vsel %vm2477, %v2462, %v2470
  %v2479 = vsel %vm2477, %v2464, %v2472
  %v2480 = vsel %vm2477, %v2466, %v2474
  %v2481 = vsel %vm2477, %v2468, %v2476
  %v2482 = vsel %vm2477, %v2470, %v2462
  %v2483 = vsel %vm2477, %v2472, %v2464
  %v2484 = vsel %vm2477, %v2474, %v2466
  %v2485 = vsel %vm2477, %v2476, %v2468
  %v2486 = vld [vmem:[%s2 + $0x170] sm:$0xff]
  %v2487 = vld [vmem:[%s2 + $0x178] sm:$0xff]
  %v2488 = vld [vmem:[%s2 + $0x3d8] sm:$0xff]
  %v2489 = vld [vmem:[%s2 + $0x3e0] sm:$0xff]
  %v2490 = vld [vmem:[%s2 + $0x640] sm:$0xff]
  %v2491 = vld [vmem:[%s2 + $0x648] sm:$0xff]
  %v2492 = vld [vmem:[%s2 + $0x8a8] sm:$0xff]
  %v2493 = vld [vmem:[%s2 + $0x8b0] sm:$0xff]
  %v2494 = vmul.f32 %v2478, %v2486
  %v2495 = vmul.f32 %v2482, %v2487
  %v2496 = vmul.f32 %v2479, %v2488
  %v2497 = vmul.f32 %v2483, %v2489
  %v2498 = vmul.f32 %v2480, %v2490
  %v2499 = vmul.f32 %v2484, %v2491
  %v2500 = vmul.f32 %v2481, %v2492
  %v2501 = vmul.f32 %v2485, %v2493
  %v2502 = vadd.f32 %v2453, %v2494
  %v2503 = vadd.f32 %v2454, %v2495
  %v2504 = vadd.f32 %v2455, %v2496
  %v2505 = vadd.f32 %v2456, %v2497
  %v2506 = vadd.f32 %v2457, %v2498
  %v2507 = vadd.f32 %v2458, %v2499
  %v2508 = vadd.f32 %v2459, %v2500
  %v2509 = vadd.f32 %v2460, %v2501
  %2510 = vrot.lane.b32.xlu0 %v1794, 114
  %v2511 = vpop.permute.xlu0 %2510
  %2512 = vrot.lane.b32.xlu0 %v1796, 114
  %v2513 = vpop.permute.xlu0 %2512
  %2514 = vrot.lane.b32.xlu0 %v1798, 114
  %v2515 = vpop.permute.xlu0 %2514
  %2516 = vrot.lane.b32.xlu0 %v1800, 114
  %v2517 = vpop.permute.xlu0 %2516
  %2518 = vrot.lane.b32.xlu0 %v1795, 114
  %v2519 = vpop.permute.xlu0 %2518
  %2520 = vrot.lane.b32.xlu0 %v1797, 114
  %v2521 = vpop.permute.xlu0 %2520
  %2522 = vrot.lane.b32.xlu0 %v1799, 114
  %v2523 = vpop.permute.xlu0 %2522
  %2524 = vrot.lane.b32.xlu0 %v1801, 114
  %v2525 = vpop.permute.xlu0 %2524
  %vm2526 = vcmp.lt.s32.totalorder %v204, 114
  %v2527 = vsel %vm2526, %v2511, %v2519
  %v2528 = vsel %vm2526, %v2513, %v2521
  %v2529 = vsel %vm2526, %v2515, %v2523
  %v2530 = vsel %vm2526, %v2517, %v2525
  %v2531 = vsel %vm2526, %v2519, %v2511
  %v2532 = vsel %vm2526, %v2521, %v2513
  %v2533 = vsel %vm2526, %v2523, %v2515
  %v2534 = vsel %vm2526, %v2525, %v2517
  %v2535 = vld [vmem:[%s2 + $0x180] sm:$0xff]
  %v2536 = vld [vmem:[%s2 + $0x188] sm:$0xff]
  %v2537 = vld [vmem:[%s2 + $0x3e8] sm:$0xff]
  %v2538 = vld [vmem:[%s2 + $0x3f0] sm:$0xff]
  %v2539 = vld [vmem:[%s2 + $0x650] sm:$0xff]
  %v2540 = vld [vmem:[%s2 + $0x658] sm:$0xff]
  %v2541 = vld [vmem:[%s2 + $0x8b8] sm:$0xff]
  %v2542 = vld [vmem:[%s2 + $0x8c0] sm:$0xff]
  %v2543 = vmul.f32 %v2527, %v2535
  %v2544 = vmul.f32 %v2531, %v2536
  %v2545 = vmul.f32 %v2528, %v2537
  %v2546 = vmul.f32 %v2532, %v2538
  %v2547 = vmul.f32 %v2529, %v2539
  %v2548 = vmul.f32 %v2533, %v2540
  %v2549 = vmul.f32 %v2530, %v2541
  %v2550 = vmul.f32 %v2534, %v2542
  %v2551 = vadd.f32 %v2502, %v2543
  %v2552 = vadd.f32 %v2503, %v2544
  %v2553 = vadd.f32 %v2504, %v2545
  %v2554 = vadd.f32 %v2505, %v2546
  %v2555 = vadd.f32 %v2506, %v2547
  %v2556 = vadd.f32 %v2507, %v2548
  %v2557 = vadd.f32 %v2508, %v2549
  %v2558 = vadd.f32 %v2509, %v2550
  %2559 = vrot.lane.b32.xlu0 %v1794, 113
  %v2560 = vpop.permute.xlu0 %2559
  %2561 = vrot.lane.b32.xlu0 %v1796, 113
  %v2562 = vpop.permute.xlu0 %2561
  %2563 = vrot.lane.b32.xlu0 %v1798, 113
  %v2564 = vpop.permute.xlu0 %2563
  %2565 = vrot.lane.b32.xlu0 %v1800, 113
  %v2566 = vpop.permute.xlu0 %2565
  %2567 = vrot.lane.b32.xlu0 %v1795, 113
  %v2568 = vpop.permute.xlu0 %2567
  %2569 = vrot.lane.b32.xlu0 %v1797, 113
  %v2570 = vpop.permute.xlu0 %2569
  %2571 = vrot.lane.b32.xlu0 %v1799, 113
  %v2572 = vpop.permute.xlu0 %2571
  %2573 = vrot.lane.b32.xlu0 %v1801, 113
  %v2574 = vpop.permute.xlu0 %2573
  %vm2575 = vcmp.lt.s32.totalorder %v204, 113
  %v2576 = vsel %vm2575, %v2560, %v2568
  %v2577 = vsel %vm2575, %v2562, %v2570
  %v2578 = vsel %vm2575, %v2564, %v2572
  %v2579 = vsel %vm2575, %v2566, %v2574
  %v2580 = vsel %vm2575, %v2568, %v2560
  %v2581 = vsel %vm2575, %v2570, %v2562
  %v2582 = vsel %vm2575, %v2572, %v2564
  %v2583 = vsel %vm2575, %v2574, %v2566
  %v2584 = vld [vmem:[%s2 + $0x190] sm:$0xff]
  %v2585 = vld [vmem:[%s2 + $0x198] sm:$0xff]
  %v2586 = vld [vmem:[%s2 + $0x3f8] sm:$0xff]
  %v2587 = vld [vmem:[%s2 + $0x400] sm:$0xff]
  %v2588 = vld [vmem:[%s2 + $0x660] sm:$0xff]
  %v2589 = vld [vmem:[%s2 + $0x668] sm:$0xff]
  %v2590 = vld [vmem:[%s2 + $0x8c8] sm:$0xff]
  %v2591 = vld [vmem:[%s2 + $0x8d0] sm:$0xff]
  %v2592 = vmul.f32 %v2576, %v2584
  %v2593 = vmul.f32 %v2580, %v2585
  %v2594 = vmul.f32 %v2577, %v2586
  %v2595 = vmul.f32 %v2581, %v2587
  %v2596 = vmul.f32 %v2578, %v2588
  %v2597 = vmul.f32 %v2582, %v2589
  %v2598 = vmul.f32 %v2579, %v2590
  %v2599 = vmul.f32 %v2583, %v2591
  %v2600 = vadd.f32 %v2551, %v2592
  %v2601 = vadd.f32 %v2552, %v2593
  %v2602 = vadd.f32 %v2553, %v2594
  %v2603 = vadd.f32 %v2554, %v2595
  %v2604 = vadd.f32 %v2555, %v2596
  %v2605 = vadd.f32 %v2556, %v2597
  %v2606 = vadd.f32 %v2557, %v2598
  %v2607 = vadd.f32 %v2558, %v2599
  %2608 = vrot.lane.b32.xlu0 %v1794, 112
  %v2609 = vpop.permute.xlu0 %2608
  %2610 = vrot.lane.b32.xlu0 %v1796, 112
  %v2611 = vpop.permute.xlu0 %2610
  %2612 = vrot.lane.b32.xlu0 %v1798, 112
  %v2613 = vpop.permute.xlu0 %2612
  %2614 = vrot.lane.b32.xlu0 %v1800, 112
  %v2615 = vpop.permute.xlu0 %2614
  %2616 = vrot.lane.b32.xlu0 %v1795, 112
  %v2617 = vpop.permute.xlu0 %2616
  %2618 = vrot.lane.b32.xlu0 %v1797, 112
  %v2619 = vpop.permute.xlu0 %2618
  %2620 = vrot.lane.b32.xlu0 %v1799, 112
  %v2621 = vpop.permute.xlu0 %2620
  %2622 = vrot.lane.b32.xlu0 %v1801, 112
  %v2623 = vpop.permute.xlu0 %2622
  %vm2624 = vcmp.lt.s32.totalorder %v204, 112
  %v2625 = vsel %vm2624, %v2609, %v2617
  %v2626 = vsel %vm2624, %v2611, %v2619
  %v2627 = vsel %vm2624, %v2613, %v2621
  %v2628 = vsel %vm2624, %v2615, %v2623
  %v2629 = vsel %vm2624, %v2617, %v2609
  %v2630 = vsel %vm2624, %v2619, %v2611
  %v2631 = vsel %vm2624, %v2621, %v2613
  %v2632 = vsel %vm2624, %v2623, %v2615
  %v2633 = vld [vmem:[%s2 + $0x1a0] sm:$0xff]
  %v2634 = vld [vmem:[%s2 + $0x1a8] sm:$0xff]
  %v2635 = vld [vmem:[%s2 + $0x408] sm:$0xff]
  %v2636 = vld [vmem:[%s2 + $0x410] sm:$0xff]
  %v2637 = vld [vmem:[%s2 + $0x670] sm:$0xff]
  %v2638 = vld [vmem:[%s2 + $0x678] sm:$0xff]
  %v2639 = vld [vmem:[%s2 + $0x8d8] sm:$0xff]
  %v2640 = vld [vmem:[%s2 + $0x8e0] sm:$0xff]
  %v2641 = vmul.f32 %v2625, %v2633
  %v2642 = vmul.f32 %v2629, %v2634
  %v2643 = vmul.f32 %v2626, %v2635
  %v2644 = vmul.f32 %v2630, %v2636
  %v2645 = vmul.f32 %v2627, %v2637
  %v2646 = vmul.f32 %v2631, %v2638
  %v2647 = vmul.f32 %v2628, %v2639
  %v2648 = vmul.f32 %v2632, %v2640
  %v2649 = vadd.f32 %v2600, %v2641
  %v2650 = vadd.f32 %v2601, %v2642
  %v2651 = vadd.f32 %v2602, %v2643
  %v2652 = vadd.f32 %v2603, %v2644
  %v2653 = vadd.f32 %v2604, %v2645
  %v2654 = vadd.f32 %v2605, %v2646
  %v2655 = vadd.f32 %v2606, %v2647
  %v2656 = vadd.f32 %v2607, %v2648
  %2657 = vrot.lane.b32.xlu0 %v1794, 111
  %v2658 = vpop.permute.xlu0 %2657
  %2659 = vrot.lane.b32.xlu0 %v1796, 111
  %v2660 = vpop.permute.xlu0 %2659
  %2661 = vrot.lane.b32.xlu0 %v1798, 111
  %v2662 = vpop.permute.xlu0 %2661
  %2663 = vrot.lane.b32.xlu0 %v1800, 111
  %v2664 = vpop.permute.xlu0 %2663
  %2665 = vrot.lane.b32.xlu0 %v1795, 111
  %v2666 = vpop.permute.xlu0 %2665
  %2667 = vrot.lane.b32.xlu0 %v1797, 111
  %v2668 = vpop.permute.xlu0 %2667
  %2669 = vrot.lane.b32.xlu0 %v1799, 111
  %v2670 = vpop.permute.xlu0 %2669
  %2671 = vrot.lane.b32.xlu0 %v1801, 111
  %v2672 = vpop.permute.xlu0 %2671
  %vm2673 = vcmp.lt.s32.totalorder %v204, 111
  %v2674 = vsel %vm2673, %v2658, %v2666
  %v2675 = vsel %vm2673, %v2660, %v2668
  %v2676 = vsel %vm2673, %v2662, %v2670
  %v2677 = vsel %vm2673, %v2664, %v2672
  %v2678 = vsel %vm2673, %v2666, %v2658
  %v2679 = vsel %vm2673, %v2668, %v2660
  %v2680 = vsel %vm2673, %v2670, %v2662
  %v2681 = vsel %vm2673, %v2672, %v2664
  %v2682 = vld [vmem:[%s2 + $0x1b0] sm:$0xff]
  %v2683 = vld [vmem:[%s2 + $0x1b8] sm:$0xff]
  %v2684 = vld [vmem:[%s2 + $0x418] sm:$0xff]
  %v2685 = vld [vmem:[%s2 + $0x420] sm:$0xff]
  %v2686 = vld [vmem:[%s2 + $0x680] sm:$0xff]
  %v2687 = vld [vmem:[%s2 + $0x688] sm:$0xff]
  %v2688 = vld [vmem:[%s2 + $0x8e8] sm:$0xff]
  %v2689 = vld [vmem:[%s2 + $0x8f0] sm:$0xff]
  %v2690 = vmul.f32 %v2674, %v2682
  %v2691 = vmul.f32 %v2678, %v2683
  %v2692 = vmul.f32 %v2675, %v2684
  %v2693 = vmul.f32 %v2679, %v2685
  %v2694 = vmul.f32 %v2676, %v2686
  %v2695 = vmul.f32 %v2680, %v2687
  %v2696 = vmul.f32 %v2677, %v2688
  %v2697 = vmul.f32 %v2681, %v2689
  %v2698 = vadd.f32 %v2649, %v2690
  %v2699 = vadd.f32 %v2650, %v2691
  %v2700 = vadd.f32 %v2651, %v2692
  %v2701 = vadd.f32 %v2652, %v2693
  %v2702 = vadd.f32 %v2653, %v2694
  %v2703 = vadd.f32 %v2654, %v2695
  %v2704 = vadd.f32 %v2655, %v2696
  %v2705 = vadd.f32 %v2656, %v2697
  %2706 = vrot.lane.b32.xlu0 %v1794, 110
  %v2707 = vpop.permute.xlu0 %2706
  %2708 = vrot.lane.b32.xlu0 %v1796, 110
  %v2709 = vpop.permute.xlu0 %2708
  %2710 = vrot.lane.b32.xlu0 %v1798, 110
  %v2711 = vpop.permute.xlu0 %2710
  %2712 = vrot.lane.b32.xlu0 %v1800, 110
  %v2713 = vpop.permute.xlu0 %2712
  %2714 = vrot.lane.b32.xlu0 %v1795, 110
  %v2715 = vpop.permute.xlu0 %2714
  %2716 = vrot.lane.b32.xlu0 %v1797, 110
  %v2717 = vpop.permute.xlu0 %2716
  %2718 = vrot.lane.b32.xlu0 %v1799, 110
  %v2719 = vpop.permute.xlu0 %2718
  %2720 = vrot.lane.b32.xlu0 %v1801, 110
  %v2721 = vpop.permute.xlu0 %2720
  %vm2722 = vcmp.lt.s32.totalorder %v204, 110
  %v2723 = vsel %vm2722, %v2707, %v2715
  %v2724 = vsel %vm2722, %v2709, %v2717
  %v2725 = vsel %vm2722, %v2711, %v2719
  %v2726 = vsel %vm2722, %v2713, %v2721
  %v2727 = vsel %vm2722, %v2715, %v2707
  %v2728 = vsel %vm2722, %v2717, %v2709
  %v2729 = vsel %vm2722, %v2719, %v2711
  %v2730 = vsel %vm2722, %v2721, %v2713
  %v2731 = vld [vmem:[%s2 + $0x1c0] sm:$0xff]
  %v2732 = vld [vmem:[%s2 + $0x1c8] sm:$0xff]
  %v2733 = vld [vmem:[%s2 + $0x428] sm:$0xff]
  %v2734 = vld [vmem:[%s2 + $0x430] sm:$0xff]
  %v2735 = vld [vmem:[%s2 + $0x690] sm:$0xff]
  %v2736 = vld [vmem:[%s2 + $0x698] sm:$0xff]
  %v2737 = vld [vmem:[%s2 + $0x8f8] sm:$0xff]
  %v2738 = vld [vmem:[%s2 + $0x900] sm:$0xff]
  %v2739 = vmul.f32 %v2723, %v2731
  %v2740 = vmul.f32 %v2727, %v2732
  %v2741 = vmul.f32 %v2724, %v2733
  %v2742 = vmul.f32 %v2728, %v2734
  %v2743 = vmul.f32 %v2725, %v2735
  %v2744 = vmul.f32 %v2729, %v2736
  %v2745 = vmul.f32 %v2726, %v2737
  %v2746 = vmul.f32 %v2730, %v2738
  %v2747 = vadd.f32 %v2698, %v2739
  %v2748 = vadd.f32 %v2699, %v2740
  %v2749 = vadd.f32 %v2700, %v2741
  %v2750 = vadd.f32 %v2701, %v2742
  %v2751 = vadd.f32 %v2702, %v2743
  %v2752 = vadd.f32 %v2703, %v2744
  %v2753 = vadd.f32 %v2704, %v2745
  %v2754 = vadd.f32 %v2705, %v2746
  %2755 = vrot.lane.b32.xlu0 %v1794, 98
  %v2756 = vpop.permute.xlu0 %2755
  %2757 = vrot.lane.b32.xlu0 %v1796, 98
  %v2758 = vpop.permute.xlu0 %2757
  %2759 = vrot.lane.b32.xlu0 %v1798, 98
  %v2760 = vpop.permute.xlu0 %2759
  %2761 = vrot.lane.b32.xlu0 %v1800, 98
  %v2762 = vpop.permute.xlu0 %2761
  %2763 = vrot.lane.b32.xlu0 %v1795, 98
  %v2764 = vpop.permute.xlu0 %2763
  %2765 = vrot.lane.b32.xlu0 %v1797, 98
  %v2766 = vpop.permute.xlu0 %2765
  %2767 = vrot.lane.b32.xlu0 %v1799, 98
  %v2768 = vpop.permute.xlu0 %2767
  %2769 = vrot.lane.b32.xlu0 %v1801, 98
  %v2770 = vpop.permute.xlu0 %2769
  %vm2771 = vcmp.lt.s32.totalorder %v204, 98
  %v2772 = vsel %vm2771, %v2756, %v2764
  %v2773 = vsel %vm2771, %v2758, %v2766
  %v2774 = vsel %vm2771, %v2760, %v2768
  %v2775 = vsel %vm2771, %v2762, %v2770
  %v2776 = vsel %vm2771, %v2764, %v2756
  %v2777 = vsel %vm2771, %v2766, %v2758
  %v2778 = vsel %vm2771, %v2768, %v2760
  %v2779 = vsel %vm2771, %v2770, %v2762
  %v2780 = vld [vmem:[%s2 + $0x1d0] sm:$0xff]
  %v2781 = vld [vmem:[%s2 + $0x1d8] sm:$0xff]
  %v2782 = vld [vmem:[%s2 + $0x438] sm:$0xff]
  %v2783 = vld [vmem:[%s2 + $0x440] sm:$0xff]
  %v2784 = vld [vmem:[%s2 + $0x6a0] sm:$0xff]
  %v2785 = vld [vmem:[%s2 + $0x6a8] sm:$0xff]
  %v2786 = vld [vmem:[%s2 + $0x908] sm:$0xff]
  %v2787 = vld [vmem:[%s2 + $0x910] sm:$0xff]
  %v2788 = vmul.f32 %v2772, %v2780
  %v2789 = vmul.f32 %v2776, %v2781
  %v2790 = vmul.f32 %v2773, %v2782
  %v2791 = vmul.f32 %v2777, %v2783
  %v2792 = vmul.f32 %v2774, %v2784
  %v2793 = vmul.f32 %v2778, %v2785
  %v2794 = vmul.f32 %v2775, %v2786
  %v2795 = vmul.f32 %v2779, %v2787
  %v2796 = vadd.f32 %v2747, %v2788
  %v2797 = vadd.f32 %v2748, %v2789
  %v2798 = vadd.f32 %v2749, %v2790
  %v2799 = vadd.f32 %v2750, %v2791
  %v2800 = vadd.f32 %v2751, %v2792
  %v2801 = vadd.f32 %v2752, %v2793
  %v2802 = vadd.f32 %v2753, %v2794
  %v2803 = vadd.f32 %v2754, %v2795
  %2804 = vrot.lane.b32.xlu0 %v1794, 97
  %v2805 = vpop.permute.xlu0 %2804
  %2806 = vrot.lane.b32.xlu0 %v1796, 97
  %v2807 = vpop.permute.xlu0 %2806
  %2808 = vrot.lane.b32.xlu0 %v1798, 97
  %v2809 = vpop.permute.xlu0 %2808
  %2810 = vrot.lane.b32.xlu0 %v1800, 97
  %v2811 = vpop.permute.xlu0 %2810
  %2812 = vrot.lane.b32.xlu0 %v1795, 97
  %v2813 = vpop.permute.xlu0 %2812
  %2814 = vrot.lane.b32.xlu0 %v1797, 97
  %v2815 = vpop.permute.xlu0 %2814
  %2816 = vrot.lane.b32.xlu0 %v1799, 97
  %v2817 = vpop.permute.xlu0 %2816
  %2818 = vrot.lane.b32.xlu0 %v1801, 97
  %v2819 = vpop.permute.xlu0 %2818
  %vm2820 = vcmp.lt.s32.totalorder %v204, 97
  %v2821 = vsel %vm2820, %v2805, %v2813
  %v2822 = vsel %vm2820, %v2807, %v2815
  %v2823 = vsel %vm2820, %v2809, %v2817
  %v2824 = vsel %vm2820, %v2811, %v2819
  %v2825 = vsel %vm2820, %v2813, %v2805
  %v2826 = vsel %vm2820, %v2815, %v2807
  %v2827 = vsel %vm2820, %v2817, %v2809
  %v2828 = vsel %vm2820, %v2819, %v2811
  %v2829 = vld [vmem:[%s2 + $0x1e0] sm:$0xff]
  %v2830 = vld [vmem:[%s2 + $0x1e8] sm:$0xff]
  %v2831 = vld [vmem:[%s2 + $0x448] sm:$0xff]
  %v2832 = vld [vmem:[%s2 + $0x450] sm:$0xff]
  %v2833 = vld [vmem:[%s2 + $0x6b0] sm:$0xff]
  %v2834 = vld [vmem:[%s2 + $0x6b8] sm:$0xff]
  %v2835 = vld [vmem:[%s2 + $0x918] sm:$0xff]
  %v2836 = vld [vmem:[%s2 + $0x920] sm:$0xff]
  %v2837 = vmul.f32 %v2821, %v2829
  %v2838 = vmul.f32 %v2825, %v2830
  %v2839 = vmul.f32 %v2822, %v2831
  %v2840 = vmul.f32 %v2826, %v2832
  %v2841 = vmul.f32 %v2823, %v2833
  %v2842 = vmul.f32 %v2827, %v2834
  %v2843 = vmul.f32 %v2824, %v2835
  %v2844 = vmul.f32 %v2828, %v2836
  %v2845 = vadd.f32 %v2796, %v2837
  %v2846 = vadd.f32 %v2797, %v2838
  %v2847 = vadd.f32 %v2798, %v2839
  %v2848 = vadd.f32 %v2799, %v2840
  %v2849 = vadd.f32 %v2800, %v2841
  %v2850 = vadd.f32 %v2801, %v2842
  %v2851 = vadd.f32 %v2802, %v2843
  %v2852 = vadd.f32 %v2803, %v2844
  %2853 = vrot.lane.b32.xlu0 %v1794, 96
  %v2854 = vpop.permute.xlu0 %2853
  %2855 = vrot.lane.b32.xlu0 %v1796, 96
  %v2856 = vpop.permute.xlu0 %2855
  %2857 = vrot.lane.b32.xlu0 %v1798, 96
  %v2858 = vpop.permute.xlu0 %2857
  %2859 = vrot.lane.b32.xlu0 %v1800, 96
  %v2860 = vpop.permute.xlu0 %2859
  %2861 = vrot.lane.b32.xlu0 %v1795, 96
  %v2862 = vpop.permute.xlu0 %2861
  %2863 = vrot.lane.b32.xlu0 %v1797, 96
  %v2864 = vpop.permute.xlu0 %2863
  %2865 = vrot.lane.b32.xlu0 %v1799, 96
  %v2866 = vpop.permute.xlu0 %2865
  %2867 = vrot.lane.b32.xlu0 %v1801, 96
  %v2868 = vpop.permute.xlu0 %2867
  %vm2869 = vcmp.lt.s32.totalorder %v204, 96
  %v2870 = vsel %vm2869, %v2854, %v2862
  %v2871 = vsel %vm2869, %v2856, %v2864
  %v2872 = vsel %vm2869, %v2858, %v2866
  %v2873 = vsel %vm2869, %v2860, %v2868
  %v2874 = vsel %vm2869, %v2862, %v2854
  %v2875 = vsel %vm2869, %v2864, %v2856
  %v2876 = vsel %vm2869, %v2866, %v2858
  %v2877 = vsel %vm2869, %v2868, %v2860
  %v2878 = vld [vmem:[%s2 + $0x1f0] sm:$0xff]
  %v2879 = vld [vmem:[%s2 + $0x1f8] sm:$0xff]
  %v2880 = vld [vmem:[%s2 + $0x458] sm:$0xff]
  %v2881 = vld [vmem:[%s2 + $0x460] sm:$0xff]
  %v2882 = vld [vmem:[%s2 + $0x6c0] sm:$0xff]
  %v2883 = vld [vmem:[%s2 + $0x6c8] sm:$0xff]
  %v2884 = vld [vmem:[%s2 + $0x928] sm:$0xff]
  %v2885 = vld [vmem:[%s2 + $0x930] sm:$0xff]
  %v2886 = vmul.f32 %v2870, %v2878
  %v2887 = vmul.f32 %v2874, %v2879
  %v2888 = vmul.f32 %v2871, %v2880
  %v2889 = vmul.f32 %v2875, %v2881
  %v2890 = vmul.f32 %v2872, %v2882
  %v2891 = vmul.f32 %v2876, %v2883
  %v2892 = vmul.f32 %v2873, %v2884
  %v2893 = vmul.f32 %v2877, %v2885
  %v2894 = vadd.f32 %v2845, %v2886
  %v2895 = vadd.f32 %v2846, %v2887
  %v2896 = vadd.f32 %v2847, %v2888
  %v2897 = vadd.f32 %v2848, %v2889
  %v2898 = vadd.f32 %v2849, %v2890
  %v2899 = vadd.f32 %v2850, %v2891
  %v2900 = vadd.f32 %v2851, %v2892
  %v2901 = vadd.f32 %v2852, %v2893
  %2902 = vrot.lane.b32.xlu0 %v1794, 95
  %v2903 = vpop.permute.xlu0 %2902
  %2904 = vrot.lane.b32.xlu0 %v1796, 95
  %v2905 = vpop.permute.xlu0 %2904
  %2906 = vrot.lane.b32.xlu0 %v1798, 95
  %v2907 = vpop.permute.xlu0 %2906
  %2908 = vrot.lane.b32.xlu0 %v1800, 95
  %v2909 = vpop.permute.xlu0 %2908
  %2910 = vrot.lane.b32.xlu0 %v1795, 95
  %v2911 = vpop.permute.xlu0 %2910
  %2912 = vrot.lane.b32.xlu0 %v1797, 95
  %v2913 = vpop.permute.xlu0 %2912
  %2914 = vrot.lane.b32.xlu0 %v1799, 95
  %v2915 = vpop.permute.xlu0 %2914
  %2916 = vrot.lane.b32.xlu0 %v1801, 95
  %v2917 = vpop.permute.xlu0 %2916
  %vm2918 = vcmp.lt.s32.totalorder %v204, 95
  %v2919 = vsel %vm2918, %v2903, %v2911
  %v2920 = vsel %vm2918, %v2905, %v2913
  %v2921 = vsel %vm2918, %v2907, %v2915
  %v2922 = vsel %vm2918, %v2909, %v2917
  %v2923 = vsel %vm2918, %v2911, %v2903
  %v2924 = vsel %vm2918, %v2913, %v2905
  %v2925 = vsel %vm2918, %v2915, %v2907
  %v2926 = vsel %vm2918, %v2917, %v2909
  %v2927 = vld [vmem:[%s2 + $0x200] sm:$0xff]
  %v2928 = vld [vmem:[%s2 + $0x208] sm:$0xff]
  %v2929 = vld [vmem:[%s2 + $0x468] sm:$0xff]
  %v2930 = vld [vmem:[%s2 + $0x470] sm:$0xff]
  %v2931 = vld [vmem:[%s2 + $0x6d0] sm:$0xff]
  %v2932 = vld [vmem:[%s2 + $0x6d8] sm:$0xff]
  %v2933 = vld [vmem:[%s2 + $0x938] sm:$0xff]
  %v2934 = vld [vmem:[%s2 + $0x940] sm:$0xff]
  %v2935 = vmul.f32 %v2919, %v2927
  %v2936 = vmul.f32 %v2923, %v2928
  %v2937 = vmul.f32 %v2920, %v2929
  %v2938 = vmul.f32 %v2924, %v2930
  %v2939 = vmul.f32 %v2921, %v2931
  %v2940 = vmul.f32 %v2925, %v2932
  %v2941 = vmul.f32 %v2922, %v2933
  %v2942 = vmul.f32 %v2926, %v2934
  %v2943 = vadd.f32 %v2894, %v2935
  %v2944 = vadd.f32 %v2895, %v2936
  %v2945 = vadd.f32 %v2896, %v2937
  %v2946 = vadd.f32 %v2897, %v2938
  %v2947 = vadd.f32 %v2898, %v2939
  %v2948 = vadd.f32 %v2899, %v2940
  %v2949 = vadd.f32 %v2900, %v2941
  %v2950 = vadd.f32 %v2901, %v2942
  %2951 = vrot.lane.b32.xlu0 %v1794, 94
  %v2952 = vpop.permute.xlu0 %2951
  %2953 = vrot.lane.b32.xlu0 %v1796, 94
  %v2954 = vpop.permute.xlu0 %2953
  %2955 = vrot.lane.b32.xlu0 %v1798, 94
  %v2956 = vpop.permute.xlu0 %2955
  %2957 = vrot.lane.b32.xlu0 %v1800, 94
  %v2958 = vpop.permute.xlu0 %2957
  %2959 = vrot.lane.b32.xlu0 %v1795, 94
  %v2960 = vpop.permute.xlu0 %2959
  %2961 = vrot.lane.b32.xlu0 %v1797, 94
  %v2962 = vpop.permute.xlu0 %2961
  %2963 = vrot.lane.b32.xlu0 %v1799, 94
  %v2964 = vpop.permute.xlu0 %2963
  %2965 = vrot.lane.b32.xlu0 %v1801, 94
  %v2966 = vpop.permute.xlu0 %2965
  %vm2967 = vcmp.lt.s32.totalorder %v204, 94
  %v2968 = vsel %vm2967, %v2952, %v2960
  %v2969 = vsel %vm2967, %v2954, %v2962
  %v2970 = vsel %vm2967, %v2956, %v2964
  %v2971 = vsel %vm2967, %v2958, %v2966
  %v2972 = vsel %vm2967, %v2960, %v2952
  %v2973 = vsel %vm2967, %v2962, %v2954
  %v2974 = vsel %vm2967, %v2964, %v2956
  %v2975 = vsel %vm2967, %v2966, %v2958
  %v2976 = vld [vmem:[%s2 + $0x210] sm:$0xff]
  %v2977 = vld [vmem:[%s2 + $0x218] sm:$0xff]
  %v2978 = vld [vmem:[%s2 + $0x478] sm:$0xff]
  %v2979 = vld [vmem:[%s2 + $0x480] sm:$0xff]
  %v2980 = vld [vmem:[%s2 + $0x6e0] sm:$0xff]
  %v2981 = vld [vmem:[%s2 + $0x6e8] sm:$0xff]
  %v2982 = vld [vmem:[%s2 + $0x948] sm:$0xff]
  %v2983 = vld [vmem:[%s2 + $0x950] sm:$0xff]
  %v2984 = vmul.f32 %v2968, %v2976
  %v2985 = vmul.f32 %v2972, %v2977
  %v2986 = vmul.f32 %v2969, %v2978
  %v2987 = vmul.f32 %v2973, %v2979
  %v2988 = vmul.f32 %v2970, %v2980
  %v2989 = vmul.f32 %v2974, %v2981
  %v2990 = vmul.f32 %v2971, %v2982
  %v2991 = vmul.f32 %v2975, %v2983
  %v2992 = vadd.f32 %v2943, %v2984
  %v2993 = vadd.f32 %v2944, %v2985
  %v2994 = vadd.f32 %v2945, %v2986
  %v2995 = vadd.f32 %v2946, %v2987
  %v2996 = vadd.f32 %v2947, %v2988
  %v2997 = vadd.f32 %v2948, %v2989
  %v2998 = vadd.f32 %v2949, %v2990
  %v2999 = vadd.f32 %v2950, %v2991
  %3000 = vset.pattern.permute.xlu0 3
  %3001 = vperm.xlu0 %3000, %v649
  %v3002 = vpop.permute.xlu0 %3001
  %3004 = vset.pattern.permute.xlu0 3
  %3005 = vperm.xlu0 %3004, %v650
  %v3006 = vpop.permute.xlu0 %3005
  %3008 = vset.pattern.permute.xlu0 3
  %3009 = vperm.xlu0 %3008, %v651
  %v3010 = vpop.permute.xlu0 %3009
  %3012 = vset.pattern.permute.xlu0 3
  %3013 = vperm.xlu0 %3012, %v652
  %v3014 = vpop.permute.xlu0 %3013
  %v3016 = vadd.f32 %v2992, %v3002
  %v3017 = vadd.f32 %v2993, %v3002
  %v3018 = vadd.f32 %v2994, %v3006
  %v3019 = vadd.f32 %v2995, %v3006
  %v3020 = vadd.f32 %v2996, %v3010
  %v3021 = vadd.f32 %v2997, %v3010
  %v3022 = vadd.f32 %v2998, %v3014
  %v3023 = vadd.f32 %v2999, %v3014
  %3024 = vst [vmem:[%s7] sm:$0xff] %v3016
  %3025 = vst [vmem:[%s7 + $0x8] sm:$0xff] %v3017
  %3026 = vst [vmem:[%s7 + $0x10] sm:$0xff] %v3018
  %3027 = vst [vmem:[%s7 + $0x18] sm:$0xff] %v3019
  %3028 = vst [vmem:[%s7 + $0x20] sm:$0xff] %v3020
  %3029 = vst [vmem:[%s7 + $0x28] sm:$0xff] %v3021
  %3030 = vst [vmem:[%s7 + $0x30] sm:$0xff] %v3022
  %3031 = vst [vmem:[%s7 + $0x38] sm:$0xff] %v3023
  // Predicated region
  $region30: #{recattn2d_forward.1} parent=0 // pred_check
    _
  $region31: #{recattn2d_forward.1} parent=0 // pred_check_branch
    %3033 = sbr.rel (0) target = $region33
  $region32: #{recattn2d_forward.1} parent=0 // pred_region
    _
  $region33: #{recattn2d_forward.1} parent=0 // pred_fallthru
    _
  // Predicated region
  $region34: #{recattn2d_forward.1} parent=0 // pred_check
    _
  $region35: #{recattn2d_forward.1} parent=0 // pred_check_branch
    %3035 = sbr.rel (0) target = $region37
  $region36: #{recattn2d_forward.1} parent=0 // pred_region
    _
  $region37: #{recattn2d_forward.1} parent=0 // pred_fallthru
    _

</llo_original>
